<compile_context>
chip_gen: v6e
topology: v6e:2x2x1
jax: 0.10.0
libtpu: 0.0.40
codegen_flags: <defaults>
</compile_context>

<pallas_src>
import functools
import math

import jax
import jax.numpy as jnp
from jax.experimental import pallas as pl
from jax.experimental.pallas import tpu as pltpu


def _round_up(x: int, m: int) -> int:
    return ((x + m - 1) // m) * m


def _vmem_limit_bytes() -> int:
    """Per-generation VMEM budget: ~48 MiB on v7x (64 MiB/TC), ~96 MiB on v5e/v6e."""
    cap = 64 * 1024 * 1024
    try:
        cap = int(getattr(pltpu.get_tpu_info(), "vmem_capacity_bytes", cap))
    except Exception:
        pass  # fall back to the v7x-safe capacity
    return min(cap * 3 // 4, 100 * 1024 * 1024)


def _pick_tb(B, H, W, Cin, Cout, K, x_bytes, out_bytes, budget) -> int:
    """Largest divisor of B (<=8) whose per-step VMEM footprint fits the budget."""
    P = K // 2
    Hp, Wp = H + 2 * P, _round_up(W + 2 * P, 8)

    def footprint(tb):
        x_tile = tb * H * W * Cin * x_bytes
        o_tile = tb * H * W * Cout * out_bytes
        ypad = tb * Hp * Wp * Cout * 4                       # padded f32 intermediate
        live = 3 * tb * H * W * max(Cin, Cout) * 4           # xm / ypw / acc temporaries
        return 2 * (x_tile + o_tile) + ypad + live           # streams are double-buffered

    tb = 1
    for cand in range(1, min(B, 8) + 1):
        if B % cand == 0 and footprint(cand) <= budget:
            tb = cand
    return tb


def _styled_conv2d_kernel(mstyle_ref, x_ref, wpw_ref, wdw_ref, bias_ref, out_ref,
                          ypad_ref, *, H, W, K):
    """Fused StyledConv2d forward for one batch tile.

    mstyle_ref : (TB, 1, Cin)      precomputed (style @ Wmod + b) * scale
    x_ref      : (TB, H, W, Cin)   input tile, NHWC, unpadded (f32 or bf16)
    wpw_ref    : (Cin, Cout)       normalized 1x1-conv weight, bf16 (MXU operand)
    wdw_ref    : (K*K, Cout)       normalized depthwise taps, f32 (tap-major)
    bias_ref   : (1, Cout)         output bias
    out_ref    : (TB, H, W, Cout)
    ypad_ref   : (TB, Hp, Wp, Cout) f32 VMEM scratch with a zero halo (SAME padding)
    """
    TB, _, _, Cin = x_ref.shape
    Cout = out_ref.shape[3]
    P = K // 2
    Hp, Wp = ypad_ref.shape[1], ypad_ref.shape[2]

    # --- style modulation (mstyle precomputed once per call in the wrapper) -------------
    x = x_ref[...].astype(jnp.float32)
    mstyle = mstyle_ref[...].reshape(TB, Cin)
    xm = x * mstyle[:, None, None, :]                                   # (TB,H,W,Cin)

    # --- weight-norm 1x1 conv: one MXU matmul over all pixels (bf16 in, f32 acc) --------
    ypw = jnp.dot(xm.astype(jnp.bfloat16).reshape(TB * H * W, Cin),
                  wpw_ref[...],
                  preferred_element_type=jnp.float32).reshape(TB, H, W, Cout)

    # --- SAME padding in VMEM: zero the halo border, write the interior -----------------
    if P > 0:
        zrow = jnp.zeros((TB, P, Wp, Cout), jnp.float32)
        ypad_ref[:, 0:P, :, :] = zrow
        ypad_ref[:, Hp - P:Hp, :, :] = zrow
        ypad_ref[:, :, 0:P, :] = jnp.zeros((TB, Hp, P, Cout), jnp.float32)
        ypad_ref[:, :, W + P:Wp, :] = jnp.zeros((TB, Hp, Wp - (W + P), Cout), jnp.float32)
    ypad_ref[:, P:P + H, P:P + W, :] = ypw
    yp = ypad_ref[...]                                                  # (TB,Hp,Wp,Cout)

    # --- weight-norm depthwise KxK conv ---------------------------------------------------
    # Hoist the dx (sublane-axis) shifts: K shifted views reused across dy; dy offsets are
    # address-only slices along a leading dim.
    w_dw = wdw_ref[...]                                                 # (K*K, Cout)
    cols = [yp[:, :, dx:dx + W, :] for dx in range(K)]                  # K x (TB,Hp,W,Cout)
    acc = None
    for dy in range(K):
        for dx in range(K):
            t = dy * K + dx
            tap = w_dw[t:t + 1, :][None, None, :, :]                    # (1,1,1,Cout)
            term = cols[dx][:, dy:dy + H, :, :] * tap
            acc = term if acc is None else acc + term

    # --- bias + ScaledLeakyReLU(0.2) * sqrt(2) -------------------------------------------
    z = acc + bias_ref[...][None, None, :, :]
    out_ref[...] = (jnp.maximum(z, 0.2 * z) * math.sqrt(2.0)).astype(out_ref.dtype)


@functools.partial(jax.jit, static_argnames=("kernel_size", "out_dtype"))
def styled_conv2d_forward_nhwc(x, style, params, *, kernel_size, out_dtype=None):
    """x: (B, H, W, Cin) NHWC, style: (B, S). Returns (B, H, W, Cout) NHWC."""
    K = kernel_size
    assert K % 2 == 1, "odd kernel_size expected (PyTorch uses padding=K//2)"
    P = K // 2
    B, H, W, Cin = x.shape
    assert W % 8 == 0, "W must be a multiple of 8 (layout-trivial flatten for the 1x1 matmul)"
    # TODO(synk): support arbitrary W via in-kernel width alignment of the x tile.
    Cout = params["vpw"].shape[1]
    out_dtype = x.dtype if out_dtype is None else out_dtype

    # ---- tiny per-call precompute (hoisted out of the per-grid-step body) --------------
    scale = 1.0 / math.sqrt(Cin * K * K)
    mstyle = ((style.astype(jnp.float32) @ params["wmod"].astype(jnp.float32)
               + params["bmod"]) * scale).reshape(B, 1, Cin)            # (B,1,Cin) f32
    vpw = params["vpw"].astype(jnp.float32)
    w_pw = (vpw * (params["gpw"]
                   * jax.lax.rsqrt(jnp.sum(vpw * vpw, axis=0, keepdims=True)))
            ).astype(jnp.bfloat16)                                      # bf16 MXU operand
    vdw = params["vdw"].astype(jnp.float32)
    w_dw = vdw * (params["gdw"]
                  * jax.lax.rsqrt(jnp.sum(vdw * vdw, axis=0, keepdims=True)))   # f32 taps
    bias = params["bias"].astype(jnp.float32)                           # (1, Cout)

    # ---- per-generation VMEM budget & batch-tile choice --------------------------------
    Hp, Wp = H + 2 * P, _round_up(W + 2 * P, 8)
    vmem_limit = _vmem_limit_bytes()
    out_itemsize = jax.ShapeDtypeStruct((), out_dtype).dtype.itemsize
    TB = _pick_tb(B, H, W, Cin, Cout, K, x.dtype.itemsize, out_itemsize,
                  budget=int(vmem_limit * 0.4))
    assert B % TB == 0  # TB is a divisor of B by construction: no dropped batch rows

    kernel = functools.partial(_styled_conv2d_kernel, H=H, W=W, K=K)

    return pl.pallas_call(
        kernel,
        out_shape=jax.ShapeDtypeStruct((B, H, W, Cout), out_dtype),
        grid=(B // TB,),
        in_specs=[
            pl.BlockSpec((TB, 1, Cin), lambda i: (i, 0, 0)),            # mstyle tile
            pl.BlockSpec((TB, H, W, Cin), lambda i: (i, 0, 0, 0)),      # x tile (streamed)
            pl.BlockSpec((Cin, Cout), lambda i: (0, 0)),                # w_pw (resident)
            pl.BlockSpec((K * K, Cout), lambda i: (0, 0)),              # w_dw (resident)
            pl.BlockSpec((1, Cout), lambda i: (0, 0)),                  # bias (resident)
        ],
        out_specs=pl.BlockSpec((TB, H, W, Cout), lambda i: (i, 0, 0, 0)),
        scratch_shapes=[pltpu.VMEM((TB, Hp, Wp, Cout), jnp.float32)],   # zero-halo pad
        compiler_params=pltpu.CompilerParams(
            dimension_semantics=("parallel",),       # batch tiles shard across TCs (v7x)
            vmem_limit_bytes=vmem_limit,             # ~48 MiB on v7x, ~96 MiB on v5e/v6e
        ),
    )(mstyle, x, w_pw, w_dw, bias)


def styled_conv2d_forward(x_nchw, style, params, *, kernel_size, out_dtype=None):
    """Drop-in NCHW adapter (adds two transpose passes; prefer the NHWC entry point)."""
    x_nhwc = jnp.transpose(x_nchw, (0, 2, 3, 1))
    out = styled_conv2d_forward_nhwc(x_nhwc, style, params,
                                     kernel_size=kernel_size, out_dtype=out_dtype)
    return jnp.transpose(out, (0, 3, 1, 2))


def init_params(key, channels_in, channels_out, style_dim, kernel_size):
    """Parameters in kernel-friendly layout (linear/conv weights stored as (in, out))."""
    K = kernel_size
    k0, k1, k2, k3, k4 = jax.random.split(key, 5)
    wmod = jax.random.normal(k0, (style_dim, channels_in), jnp.float32) * (
        math.sqrt(2.0) / math.sqrt(style_dim))                # ~kaiming_normal, fan_in
    bmod = 0.1 * jax.random.normal(k1, (1, channels_in), jnp.float32)
    vpw = jax.random.normal(k2, (channels_in, channels_out), jnp.float32) * (
        math.sqrt(2.0) / math.sqrt(channels_in))
    vdw = jax.random.normal(k3, (K * K, channels_out), jnp.float32) * (
        math.sqrt(2.0) / math.sqrt(K * K))
    # weight_norm init: g = ||v|| per output channel (so the effective weight == v).
    gpw = jnp.sqrt(jnp.sum(vpw * vpw, axis=0, keepdims=True))
    gdw = jnp.sqrt(jnp.sum(vdw * vdw, axis=0, keepdims=True))
    # PyTorch inits this bias to zeros; small random values exercise the add path.
    bias = 0.1 * jax.random.normal(k4, (1, channels_out), jnp.float32)
    return {"wmod": wmod, "bmod": bmod, "vpw": vpw, "gpw": gpw,
            "vdw": vdw, "gdw": gdw, "bias": bias}


def _reference_forward(x, style, p, *, kernel_size):
    """Independent pure-JAX reference (NCHW, lax.conv, HIGHEST precision)."""
    K = kernel_size
    Cin, Cout = p["vpw"].shape
    scale = 1.0 / math.sqrt(Cin * K * K)
    hi = jax.lax.Precision.HIGHEST

    mstyle = (jnp.dot(style, p["wmod"], precision=hi) + p["bmod"]) * scale   # (B, Cin)
    xm = x * mstyle[:, :, None, None]

    w_pw = p["vpw"] * (p["gpw"] / jnp.sqrt(jnp.sum(p["vpw"] ** 2, axis=0, keepdims=True)))
    w_pw_oihw = w_pw.T.reshape(Cout, Cin, 1, 1)
    y = jax.lax.conv_general_dilated(
        xm, w_pw_oihw, window_strides=(1, 1), padding="VALID",
        dimension_numbers=("NCHW", "OIHW", "NCHW"), precision=hi)

    w_dw = p["vdw"] * (p["gdw"] / jnp.sqrt(jnp.sum(p["vdw"] ** 2, axis=0, keepdims=True)))
    w_dw_oihw = jnp.transpose(w_dw, (1, 0)).reshape(Cout, 1, K, K)
    y = jax.lax.conv_general_dilated(
        y, w_dw_oihw, window_strides=(1, 1), padding="SAME",
        dimension_numbers=("NCHW", "OIHW", "NCHW"),
        feature_group_count=Cout, precision=hi)

    z = y + p["bias"].reshape(1, Cout, 1, 1)
    return jnp.maximum(z, 0.2 * z) * math.sqrt(2.0)


if __name__ == "__main__":
    B, CIN, COUT, STYLE_DIM, K = 2, 4, 8, 16, 3
    H = W = 16

    key = jax.random.PRNGKey(0)
    kx, ks, kp = jax.random.split(key, 3)
    x_nhwc = jax.random.normal(kx, (B, H, W, CIN), jnp.float32)
    style = jax.random.normal(ks, (B, STYLE_DIM), jnp.float32)
    params = init_params(kp, CIN, COUT, STYLE_DIM, K)

    # Reference (NCHW, full f32 precision).
    x_nchw = jnp.transpose(x_nhwc, (0, 3, 1, 2))
    ref_nhwc = jnp.transpose(
        _reference_forward(x_nchw, style, params, kernel_size=K), (0, 2, 3, 1))

    # f32 activation streams (bf16 MXU operands inside the kernel).
    out = styled_conv2d_forward_nhwc(x_nhwc, style, params, kernel_size=K)
    out = jax.block_until_ready(out)
    assert out.shape == (B, H, W, COUT)
    max_err = float(jnp.max(jnp.abs(out - ref_nhwc)))
    assert max_err < 2e-2, f"mismatch vs reference (max abs err = {max_err})"

    # bf16 activation streams across HBM (halves x/out traffic); looser tolerance.
    out_bf16 = styled_conv2d_forward_nhwc(
        x_nhwc.astype(jnp.bfloat16), style, params, kernel_size=K)
    out_bf16 = jax.block_until_ready(out_bf16)
    err_bf16 = float(jnp.max(jnp.abs(out_bf16.astype(jnp.float32) - ref_nhwc)))
    assert err_bf16 < 1e-1, f"bf16 path mismatch (max abs err = {err_bf16})"

    print("KERNEL_OK")
</pallas_src>

<mosaic_0001>
module attributes {stable_mosaic.version = 11 : i64} {
  func.func @_styled_conv2d_kernel(%arg0: i32, %arg1: memref<2x1x4xf32, #tpu.memory_space<vmem>>, %arg2: memref<2x16x16x4xf32, #tpu.memory_space<vmem>>, %arg3: memref<4x8xbf16, #tpu.memory_space<vmem>>, %arg4: memref<9x8xf32, #tpu.memory_space<vmem>>, %arg5: memref<1x8xf32, #tpu.memory_space<vmem>>, %arg6: memref<2x16x16x8xf32, #tpu.memory_space<vmem>>, %arg7: memref<2x18x24x8xf32, #tpu.memory_space<vmem>>) attributes {dimension_semantics = [#tpu.dimension_semantics<parallel>], iteration_bounds = array<i64: 1>, scalar_prefetch = 0 : i64, scratch_operands = 1 : i64, tpu.core_type = #tpu.core_type<tc>, window_params = [{transform_indices = @transform_0, window_bounds = array<i64: 2, 1, 4>}, {transform_indices = @transform_1, window_bounds = array<i64: 2, 16, 16, 4>}, {pipeline_mode = #tpu.pipeline_mode<synchronous>, transform_indices = @transform_2, window_bounds = array<i64: 4, 8>}, {pipeline_mode = #tpu.pipeline_mode<synchronous>, transform_indices = @transform_3, window_bounds = array<i64: 9, 8>}, {pipeline_mode = #tpu.pipeline_mode<synchronous>, transform_indices = @transform_4, window_bounds = array<i64: 1, 8>}, {transform_indices = @transform_5, window_bounds = array<i64: 2, 16, 16, 8>}]} {
    %c0 = arith.constant 0 : index
    %c0_0 = arith.constant 0 : index
    %c0_1 = arith.constant 0 : index
    %c0_2 = arith.constant 0 : index
    %0 = vector.load %arg2[%c0, %c0_0, %c0_1, %c0_2] : memref<2x16x16x4xf32, #tpu.memory_space<vmem>>, vector<2x16x16x4xf32>
    %c0_3 = arith.constant 0 : index
    %c0_4 = arith.constant 0 : index
    %c0_5 = arith.constant 0 : index
    %1 = vector.load %arg1[%c0_3, %c0_4, %c0_5] : memref<2x1x4xf32, #tpu.memory_space<vmem>>, vector<2x1x4xf32>
    %2 = vector.shape_cast %1 : vector<2x1x4xf32> to vector<2x4xf32>
    %3 = vector.shape_cast %2 : vector<2x4xf32> to vector<2x1x1x4xf32>
    %4 = vector.broadcast %3 : vector<2x1x1x4xf32> to vector<2x16x16x4xf32>
    %5 = arith.mulf %0, %4 : vector<2x16x16x4xf32>
    %6 = arith.truncf %5 : vector<2x16x16x4xf32> to vector<2x16x16x4xbf16>
    %7 = vector.shape_cast %6 : vector<2x16x16x4xbf16> to vector<512x4xbf16>
    %c0_6 = arith.constant 0 : index
    %c0_7 = arith.constant 0 : index
    %8 = vector.load %arg3[%c0_6, %c0_7] : memref<4x8xbf16, #tpu.memory_space<vmem>>, vector<4x8xbf16>
    %cst = arith.constant dense<0.000000e+00> : vector<512x8xf32>
    %9 = tpu.matmul %7, %8, %cst {dimension_numbers = #tpu.dot_dimension_numbers<[1], [0], [0], [1], [0, 0, 1, 1], [], []>} : vector<512x4xbf16>, vector<4x8xbf16>, vector<512x8xf32> -> vector<512x8xf32>
    %10 = vector.shape_cast %9 : vector<512x8xf32> to vector<2x16x16x8xf32>
    %cst_8 = arith.constant 0.000000e+00 : f32
    %11 = vector.broadcast %cst_8 : f32 to vector<2x1x24x8xf32>
    %c0_9 = arith.constant 0 : index
    %c0_10 = arith.constant 0 : index
    %c0_11 = arith.constant 0 : index
    %c0_12 = arith.constant 0 : index
    %12 = vector.load %arg7[%c0_9, %c0_10, %c0_11, %c0_12] : memref<2x18x24x8xf32, #tpu.memory_space<vmem>>, vector<2x1x24x8xf32>
    tpu.vector_store %arg7[%c0_9, %c0_10, %c0_11, %c0_12], %11 {strides = array<i32>} : memref<2x18x24x8xf32, #tpu.memory_space<vmem>>, vector<2x1x24x8xf32>,
    %c0_13 = arith.constant 0 : index
    %c17 = arith.constant 17 : index
    %c0_14 = arith.constant 0 : index
    %c0_15 = arith.constant 0 : index
    %13 = vector.load %arg7[%c0_13, %c17, %c0_14, %c0_15] : memref<2x18x24x8xf32, #tpu.memory_space<vmem>>, vector<2x1x24x8xf32>
    tpu.vector_store %arg7[%c0_13, %c17, %c0_14, %c0_15], %11 {strides = array<i32>} : memref<2x18x24x8xf32, #tpu.memory_space<vmem>>, vector<2x1x24x8xf32>,
    %cst_16 = arith.constant 0.000000e+00 : f32
    %14 = vector.broadcast %cst_16 : f32 to vector<2x18x1x8xf32>
    %c0_17 = arith.constant 0 : index
    %c0_18 = arith.constant 0 : index
    %c0_19 = arith.constant 0 : index
    %c0_20 = arith.constant 0 : index
    %15 = vector.load %arg7[%c0_17, %c0_18, %c0_19, %c0_20] : memref<2x18x24x8xf32, #tpu.memory_space<vmem>>, vector<2x18x1x8xf32>
    tpu.vector_store %arg7[%c0_17, %c0_18, %c0_19, %c0_20], %14 {strides = array<i32>} : memref<2x18x24x8xf32, #tpu.memory_space<vmem>>, vector<2x18x1x8xf32>,
    %cst_21 = arith.constant 0.000000e+00 : f32
    %16 = vector.broadcast %cst_21 : f32 to vector<2x18x7x8xf32>
    %c0_22 = arith.constant 0 : index
    %c0_23 = arith.constant 0 : index
    %c17_24 = arith.constant 17 : index
    %c0_25 = arith.constant 0 : index
    %17 = vector.load %arg7[%c0_22, %c0_23, %c17_24, %c0_25] : memref<2x18x24x8xf32, #tpu.memory_space<vmem>>, vector<2x18x7x8xf32>
    tpu.vector_store %arg7[%c0_22, %c0_23, %c17_24, %c0_25], %16 {strides = array<i32>} : memref<2x18x24x8xf32, #tpu.memory_space<vmem>>, vector<2x18x7x8xf32>,
    %c0_26 = arith.constant 0 : index
    %c1 = arith.constant 1 : index
    %c1_27 = arith.constant 1 : index
    %c0_28 = arith.constant 0 : index
    %18 = vector.load %arg7[%c0_26, %c1, %c1_27, %c0_28] : memref<2x18x24x8xf32, #tpu.memory_space<vmem>>, vector<2x16x16x8xf32>
    tpu.vector_store %arg7[%c0_26, %c1, %c1_27, %c0_28], %10 {strides = array<i32>} : memref<2x18x24x8xf32, #tpu.memory_space<vmem>>, vector<2x16x16x8xf32>,
    %c0_29 = arith.constant 0 : index
    %c0_30 = arith.constant 0 : index
    %c0_31 = arith.constant 0 : index
    %c0_32 = arith.constant 0 : index
    %19 = vector.load %arg7[%c0_29, %c0_30, %c0_31, %c0_32] : memref<2x18x24x8xf32, #tpu.memory_space<vmem>>, vector<2x18x24x8xf32>
    %c0_33 = arith.constant 0 : index
    %c0_34 = arith.constant 0 : index
    %20 = vector.load %arg4[%c0_33, %c0_34] : memref<9x8xf32, #tpu.memory_space<vmem>>, vector<9x8xf32>
    %21 = vector.extract_strided_slice %19 {offsets = [0, 0, 0, 0], sizes = [2, 18, 16, 8], strides = [1, 1, 1, 1]} : vector<2x18x24x8xf32> to vector<2x18x16x8xf32>
    %22 = vector.extract_strided_slice %19 {offsets = [0, 0, 1, 0], sizes = [2, 18, 16, 8], strides = [1, 1, 1, 1]} : vector<2x18x24x8xf32> to vector<2x18x16x8xf32>
    %23 = vector.extract_strided_slice %19 {offsets = [0, 0, 2, 0], sizes = [2, 18, 16, 8], strides = [1, 1, 1, 1]} : vector<2x18x24x8xf32> to vector<2x18x16x8xf32>
    %24 = vector.extract_strided_slice %20 {offsets = [0, 0], sizes = [1, 8], strides = [1, 1]} : vector<9x8xf32> to vector<1x8xf32>
    %25 = vector.shape_cast %24 : vector<1x8xf32> to vector<1x1x1x8xf32>
    %26 = vector.extract_strided_slice %21 {offsets = [0, 0, 0, 0], sizes = [2, 16, 16, 8], strides = [1, 1, 1, 1]} : vector<2x18x16x8xf32> to vector<2x16x16x8xf32>
    %27 = vector.broadcast %25 : vector<1x1x1x8xf32> to vector<2x16x16x8xf32>
    %28 = arith.mulf %26, %27 : vector<2x16x16x8xf32>
    %29 = vector.extract_strided_slice %20 {offsets = [1, 0], sizes = [1, 8], strides = [1, 1]} : vector<9x8xf32> to vector<1x8xf32>
    %30 = vector.shape_cast %29 : vector<1x8xf32> to vector<1x1x1x8xf32>
    %31 = vector.extract_strided_slice %22 {offsets = [0, 0, 0, 0], sizes = [2, 16, 16, 8], strides = [1, 1, 1, 1]} : vector<2x18x16x8xf32> to vector<2x16x16x8xf32>
    %32 = vector.broadcast %30 : vector<1x1x1x8xf32> to vector<2x16x16x8xf32>
    %33 = arith.mulf %31, %32 : vector<2x16x16x8xf32>
    %34 = arith.addf %28, %33 : vector<2x16x16x8xf32>
    %35 = vector.extract_strided_slice %20 {offsets = [2, 0], sizes = [1, 8], strides = [1, 1]} : vector<9x8xf32> to vector<1x8xf32>
    %36 = vector.shape_cast %35 : vector<1x8xf32> to vector<1x1x1x8xf32>
    %37 = vector.extract_strided_slice %23 {offsets = [0, 0, 0, 0], sizes = [2, 16, 16, 8], strides = [1, 1, 1, 1]} : vector<2x18x16x8xf32> to vector<2x16x16x8xf32>
    %38 = vector.broadcast %36 : vector<1x1x1x8xf32> to vector<2x16x16x8xf32>
    %39 = arith.mulf %37, %38 : vector<2x16x16x8xf32>
    %40 = arith.addf %34, %39 : vector<2x16x16x8xf32>
    %41 = vector.extract_strided_slice %20 {offsets = [3, 0], sizes = [1, 8], strides = [1, 1]} : vector<9x8xf32> to vector<1x8xf32>
    %42 = vector.shape_cast %41 : vector<1x8xf32> to vector<1x1x1x8xf32>
    %43 = vector.extract_strided_slice %21 {offsets = [0, 1, 0, 0], sizes = [2, 16, 16, 8], strides = [1, 1, 1, 1]} : vector<2x18x16x8xf32> to vector<2x16x16x8xf32>
    %44 = vector.broadcast %42 : vector<1x1x1x8xf32> to vector<2x16x16x8xf32>
    %45 = arith.mulf %43, %44 : vector<2x16x16x8xf32>
    %46 = arith.addf %40, %45 : vector<2x16x16x8xf32>
    %47 = vector.extract_strided_slice %20 {offsets = [4, 0], sizes = [1, 8], strides = [1, 1]} : vector<9x8xf32> to vector<1x8xf32>
    %48 = vector.shape_cast %47 : vector<1x8xf32> to vector<1x1x1x8xf32>
    %49 = vector.extract_strided_slice %22 {offsets = [0, 1, 0, 0], sizes = [2, 16, 16, 8], strides = [1, 1, 1, 1]} : vector<2x18x16x8xf32> to vector<2x16x16x8xf32>
    %50 = vector.broadcast %48 : vector<1x1x1x8xf32> to vector<2x16x16x8xf32>
    %51 = arith.mulf %49, %50 : vector<2x16x16x8xf32>
    %52 = arith.addf %46, %51 : vector<2x16x16x8xf32>
    %53 = vector.extract_strided_slice %20 {offsets = [5, 0], sizes = [1, 8], strides = [1, 1]} : vector<9x8xf32> to vector<1x8xf32>
    %54 = vector.shape_cast %53 : vector<1x8xf32> to vector<1x1x1x8xf32>
    %55 = vector.extract_strided_slice %23 {offsets = [0, 1, 0, 0], sizes = [2, 16, 16, 8], strides = [1, 1, 1, 1]} : vector<2x18x16x8xf32> to vector<2x16x16x8xf32>
    %56 = vector.broadcast %54 : vector<1x1x1x8xf32> to vector<2x16x16x8xf32>
    %57 = arith.mulf %55, %56 : vector<2x16x16x8xf32>
    %58 = arith.addf %52, %57 : vector<2x16x16x8xf32>
    %59 = vector.extract_strided_slice %20 {offsets = [6, 0], sizes = [1, 8], strides = [1, 1]} : vector<9x8xf32> to vector<1x8xf32>
    %60 = vector.shape_cast %59 : vector<1x8xf32> to vector<1x1x1x8xf32>
    %61 = vector.extract_strided_slice %21 {offsets = [0, 2, 0, 0], sizes = [2, 16, 16, 8], strides = [1, 1, 1, 1]} : vector<2x18x16x8xf32> to vector<2x16x16x8xf32>
    %62 = vector.broadcast %60 : vector<1x1x1x8xf32> to vector<2x16x16x8xf32>
    %63 = arith.mulf %61, %62 : vector<2x16x16x8xf32>
    %64 = arith.addf %58, %63 : vector<2x16x16x8xf32>
    %65 = vector.extract_strided_slice %20 {offsets = [7, 0], sizes = [1, 8], strides = [1, 1]} : vector<9x8xf32> to vector<1x8xf32>
    %66 = vector.shape_cast %65 : vector<1x8xf32> to vector<1x1x1x8xf32>
    %67 = vector.extract_strided_slice %22 {offsets = [0, 2, 0, 0], sizes = [2, 16, 16, 8], strides = [1, 1, 1, 1]} : vector<2x18x16x8xf32> to vector<2x16x16x8xf32>
    %68 = vector.broadcast %66 : vector<1x1x1x8xf32> to vector<2x16x16x8xf32>
    %69 = arith.mulf %67, %68 : vector<2x16x16x8xf32>
    %70 = arith.addf %64, %69 : vector<2x16x16x8xf32>
    %71 = vector.extract_strided_slice %20 {offsets = [8, 0], sizes = [1, 8], strides = [1, 1]} : vector<9x8xf32> to vector<1x8xf32>
    %72 = vector.shape_cast %71 : vector<1x8xf32> to vector<1x1x1x8xf32>
    %73 = vector.extract_strided_slice %23 {offsets = [0, 2, 0, 0], sizes = [2, 16, 16, 8], strides = [1, 1, 1, 1]} : vector<2x18x16x8xf32> to vector<2x16x16x8xf32>
    %74 = vector.broadcast %72 : vector<1x1x1x8xf32> to vector<2x16x16x8xf32>
    %75 = arith.mulf %73, %74 : vector<2x16x16x8xf32>
    %76 = arith.addf %70, %75 : vector<2x16x16x8xf32>
    %c0_35 = arith.constant 0 : index
    %c0_36 = arith.constant 0 : index
    %77 = vector.load %arg5[%c0_35, %c0_36] : memref<1x8xf32, #tpu.memory_space<vmem>>, vector<1x8xf32>
    %78 = vector.shape_cast %77 : vector<1x8xf32> to vector<1x1x1x8xf32>
    %79 = vector.broadcast %78 : vector<1x1x1x8xf32> to vector<2x16x16x8xf32>
    %80 = arith.addf %76, %79 : vector<2x16x16x8xf32>
    %cst_37 = arith.constant 2.000000e-01 : f32
    %81 = vector.broadcast %cst_37 : f32 to vector<2x16x16x8xf32>
    %82 = arith.mulf %81, %80 : vector<2x16x16x8xf32>
    %83 = arith.maximumf %80, %82 : vector<2x16x16x8xf32>
    %cst_38 = arith.constant 1.41421354 : f32
    %84 = vector.broadcast %cst_38 : f32 to vector<2x16x16x8xf32>
    %85 = arith.mulf %83, %84 : vector<2x16x16x8xf32>
    %c0_39 = arith.constant 0 : index
    %c0_40 = arith.constant 0 : index
    %c0_41 = arith.constant 0 : index
    %c0_42 = arith.constant 0 : index
    %86 = vector.load %arg6[%c0_39, %c0_40, %c0_41, %c0_42] : memref<2x16x16x8xf32, #tpu.memory_space<vmem>>, vector<2x16x16x8xf32>
    tpu.vector_store %arg6[%c0_39, %c0_40, %c0_41, %c0_42], %85 {strides = array<i32>} : memref<2x16x16x8xf32, #tpu.memory_space<vmem>>, vector<2x16x16x8xf32>,
    return
  }
  func.func @transform_0(%arg0: i32) -> (i32, i32, i32) {
    %c0_i32 = arith.constant 0 : i32
    %c0_i32_0 = arith.constant 0 : i32
    %c0_i32_1 = arith.constant 0 : i32
    return %arg0, %c0_i32, %c0_i32_0 : i32, i32, i32
  }
  func.func @transform_1(%arg0: i32) -> (i32, i32, i32, i32) {
    %c0_i32 = arith.constant 0 : i32
    %c0_i32_0 = arith.constant 0 : i32
    %c0_i32_1 = arith.constant 0 : i32
    %c0_i32_2 = arith.constant 0 : i32
    return %arg0, %c0_i32, %c0_i32_0, %c0_i32_1 : i32, i32, i32, i32
  }
  func.func @transform_2(%arg0: i32) -> (i32, i32) {
    %c0_i32 = arith.constant 0 : i32
    %c0_i32_0 = arith.constant 0 : i32
    %c0_i32_1 = arith.constant 0 : i32
    return %c0_i32, %c0_i32_0 : i32, i32
  }
  func.func @transform_3(%arg0: i32) -> (i32, i32) {
    %c0_i32 = arith.constant 0 : i32
    %c0_i32_0 = arith.constant 0 : i32
    %c0_i32_1 = arith.constant 0 : i32
    return %c0_i32, %c0_i32_0 : i32, i32
  }
  func.func @transform_4(%arg0: i32) -> (i32, i32) {
    %c0_i32 = arith.constant 0 : i32
    %c0_i32_0 = arith.constant 0 : i32
    %c0_i32_1 = arith.constant 0 : i32
    return %c0_i32, %c0_i32_0 : i32, i32
  }
  func.func @transform_5(%arg0: i32) -> (i32, i32, i32, i32) {
    %c0_i32 = arith.constant 0 : i32
    %c0_i32_0 = arith.constant 0 : i32
    %c0_i32_1 = arith.constant 0 : i32
    %c0_i32_2 = arith.constant 0 : i32
    return %arg0, %c0_i32, %c0_i32_0, %c0_i32_1 : i32, i32, i32, i32
  }
}

</mosaic_0001>

<llo_original>
// kernel: styled_conv2d_forward_nhwc.1
$region0: #{styled_conv2d_forward_nhwc.1}
  #allocation0 [shape = 'u32[]', space=smem, size = 0x4, offset = 0x4, fixed_abs, tag = 'smem constant byte address 0x4 - core index']
  #allocation1 [shape = 'u32[144,128]{1,0:T(1,128)}', space=vmem, size = 0x12000, scoped, tag = 'internal scratch']
  #allocation2 [shape = 'f32[2,18,24,8]{3,2,1,0:T(8,128)}', space=vmem, size = 0x6c000, scoped, tag = 'scratch operand']
  %s0 = inlined_call_operand.vmem [shape: f32[2,1,4], index: 0, kind: input, shape index: {}]
  %s1 = inlined_call_operand.vmem [shape: f32[2,16,16,4], index: 1, kind: input, shape index: {}]
  %s2 = inlined_call_operand.vmem [shape: bf16[4,8], index: 2, kind: input, shape index: {}]
  %s3 = inlined_call_operand.vmem [shape: f32[9,8], index: 3, kind: input, shape index: {}]
  %s4 = inlined_call_operand.vmem [shape: f32[1,8], index: 4, kind: input, shape index: {}]
  %s5 = inlined_call_operand.vmem [shape: f32[2,16,16,8], index: 5, kind: output, shape index: {}]
  %s6 = sld [smem:[#allocation0]]
  $region30: #{styled_conv2d_forward_nhwc.1} parent=0
    _
  %s8 = ssub.s32 1, %s6
  %s9 = scalar_select 0, %s8, %s6
  // Predicated region
  $region2: #{styled_conv2d_forward_nhwc.1} parent=0 // pred_check
    _
  $region3: #{styled_conv2d_forward_nhwc.1} parent=0 // pred_check_branch
    %11 = sbr.rel (0) target = $region5
  $region4: #{styled_conv2d_forward_nhwc.1} parent=0 // pred_region
    _
  $region5: #{styled_conv2d_forward_nhwc.1} parent=0 // pred_fallthru
    _
  // Predicated region
  $region6: #{styled_conv2d_forward_nhwc.1} parent=0 // pred_check
    _
  $region7: #{styled_conv2d_forward_nhwc.1} parent=0 // pred_check_branch
    %13 = sbr.rel (0) target = $region9
  $region8: #{styled_conv2d_forward_nhwc.1} parent=0 // pred_region
    _
  $region9: #{styled_conv2d_forward_nhwc.1} parent=0 // pred_fallthru
    _
  // Predicated region
  $region10: #{styled_conv2d_forward_nhwc.1} parent=0 // pred_check
    _
  $region11: #{styled_conv2d_forward_nhwc.1} parent=0 // pred_check_branch
    %15 = sbr.rel (0) target = $region13
  $region12: #{styled_conv2d_forward_nhwc.1} parent=0 // pred_region
    _
  $region13: #{styled_conv2d_forward_nhwc.1} parent=0 // pred_fallthru
    _
  // Predicated region
  $region14: #{styled_conv2d_forward_nhwc.1} parent=0 // pred_check
    _
  $region15: #{styled_conv2d_forward_nhwc.1} parent=0 // pred_check_branch
    %17 = sbr.rel (0) target = $region17
  $region16: #{styled_conv2d_forward_nhwc.1} parent=0 // pred_region
    _
  $region17: #{styled_conv2d_forward_nhwc.1} parent=0 // pred_fallthru
    _
  // Predicated region
  $region18: #{styled_conv2d_forward_nhwc.1} parent=0 // pred_check
    _
  $region19: #{styled_conv2d_forward_nhwc.1} parent=0 // pred_check_branch
    %19 = sbr.rel (0) target = $region21
  $region20: #{styled_conv2d_forward_nhwc.1} parent=0 // pred_region
    _
  $region21: #{styled_conv2d_forward_nhwc.1} parent=0 // pred_fallthru
    _
  %v21 = vld [vmem:[%s1] sm:$0xff]
  %v22 = vld [vmem:[%s1 + $0x8] sm:$0xff]
  %v23 = vld [vmem:[%s1 + $0x10] sm:$0xff]
  %v24 = vld [vmem:[%s1 + $0x18] sm:$0xff]
  %v25 = vld [vmem:[%s1 + $0x20] sm:$0xff]
  %v26 = vld [vmem:[%s1 + $0x28] sm:$0xff]
  %v27 = vld [vmem:[%s1 + $0x30] sm:$0xff]
  %v28 = vld [vmem:[%s1 + $0x38] sm:$0xff]
  %v29 = vld [vmem:[%s1 + $0x40] sm:$0xff]
  %v30 = vld [vmem:[%s1 + $0x48] sm:$0xff]
  %v31 = vld [vmem:[%s1 + $0x50] sm:$0xff]
  %v32 = vld [vmem:[%s1 + $0x58] sm:$0xff]
  %v33 = vld [vmem:[%s1 + $0x60] sm:$0xff]
  %v34 = vld [vmem:[%s1 + $0x68] sm:$0xff]
  %v35 = vld [vmem:[%s1 + $0x70] sm:$0xff]
  %v36 = vld [vmem:[%s1 + $0x78] sm:$0xff]
  %v37 = vld [vmem:[%s1 + $0x80] sm:$0xff]
  %v38 = vld [vmem:[%s1 + $0x88] sm:$0xff]
  %v39 = vld [vmem:[%s1 + $0x90] sm:$0xff]
  %v40 = vld [vmem:[%s1 + $0x98] sm:$0xff]
  %v41 = vld [vmem:[%s1 + $0xa0] sm:$0xff]
  %v42 = vld [vmem:[%s1 + $0xa8] sm:$0xff]
  %v43 = vld [vmem:[%s1 + $0xb0] sm:$0xff]
  %v44 = vld [vmem:[%s1 + $0xb8] sm:$0xff]
  %v45 = vld [vmem:[%s1 + $0xc0] sm:$0xff]
  %v46 = vld [vmem:[%s1 + $0xc8] sm:$0xff]
  %v47 = vld [vmem:[%s1 + $0xd0] sm:$0xff]
  %v48 = vld [vmem:[%s1 + $0xd8] sm:$0xff]
  %v49 = vld [vmem:[%s1 + $0xe0] sm:$0xff]
  %v50 = vld [vmem:[%s1 + $0xe8] sm:$0xff]
  %v51 = vld [vmem:[%s1 + $0xf0] sm:$0xff]
  %v52 = vld [vmem:[%s1 + $0xf8] sm:$0xff]
  %v53 = vld [vmem:[%s1 + $0x100] sm:$0xff]
  %v54 = vld [vmem:[%s1 + $0x108] sm:$0xff]
  %v55 = vld [vmem:[%s1 + $0x110] sm:$0xff]
  %v56 = vld [vmem:[%s1 + $0x118] sm:$0xff]
  %v57 = vld [vmem:[%s1 + $0x120] sm:$0xff]
  %v58 = vld [vmem:[%s1 + $0x128] sm:$0xff]
  %v59 = vld [vmem:[%s1 + $0x130] sm:$0xff]
  %v60 = vld [vmem:[%s1 + $0x138] sm:$0xff]
  %v61 = vld [vmem:[%s1 + $0x140] sm:$0xff]
  %v62 = vld [vmem:[%s1 + $0x148] sm:$0xff]
  %v63 = vld [vmem:[%s1 + $0x150] sm:$0xff]
  %v64 = vld [vmem:[%s1 + $0x158] sm:$0xff]
  %v65 = vld [vmem:[%s1 + $0x160] sm:$0xff]
  %v66 = vld [vmem:[%s1 + $0x168] sm:$0xff]
  %v67 = vld [vmem:[%s1 + $0x170] sm:$0xff]
  %v68 = vld [vmem:[%s1 + $0x178] sm:$0xff]
  %v69 = vld [vmem:[%s1 + $0x180] sm:$0xff]
  %v70 = vld [vmem:[%s1 + $0x188] sm:$0xff]
  %v71 = vld [vmem:[%s1 + $0x190] sm:$0xff]
  %v72 = vld [vmem:[%s1 + $0x198] sm:$0xff]
  %v73 = vld [vmem:[%s1 + $0x1a0] sm:$0xff]
  %v74 = vld [vmem:[%s1 + $0x1a8] sm:$0xff]
  %v75 = vld [vmem:[%s1 + $0x1b0] sm:$0xff]
  %v76 = vld [vmem:[%s1 + $0x1b8] sm:$0xff]
  %v77 = vld [vmem:[%s1 + $0x1c0] sm:$0xff]
  %v78 = vld [vmem:[%s1 + $0x1c8] sm:$0xff]
  %v79 = vld [vmem:[%s1 + $0x1d0] sm:$0xff]
  %v80 = vld [vmem:[%s1 + $0x1d8] sm:$0xff]
  %v81 = vld [vmem:[%s1 + $0x1e0] sm:$0xff]
  %v82 = vld [vmem:[%s1 + $0x1e8] sm:$0xff]
  %v83 = vld [vmem:[%s1 + $0x1f0] sm:$0xff]
  %v84 = vld [vmem:[%s1 + $0x1f8] sm:$0xff]
  %v85 = vld [vmem:[%s0] sm:$0x1]
  %v86 = vld [vmem:[%s0 + $0x1] sm:$0x1]
  %v89 = vlaneseq
  %v90 = vshrl.u32 %v89, 7
  %v91 = vsub.s32 0, %v90
  %v92 = vrot.slane %v85, %v91
  %v93 = vlaneseq
  %v94 = vshrl.u32 %v93, 7
  %v95 = vsub.s32 0, %v94
  %v96 = vrot.slane %v86, %v95
  %v99 = vmul.f32 %v21, %v92
  %v100 = vmul.f32 %v22, %v92
  %v101 = vmul.f32 %v23, %v92
  %v102 = vmul.f32 %v24, %v92
  %v103 = vmul.f32 %v25, %v92
  %v104 = vmul.f32 %v26, %v92
  %v105 = vmul.f32 %v27, %v92
  %v106 = vmul.f32 %v28, %v92
  %v107 = vmul.f32 %v29, %v92
  %v108 = vmul.f32 %v30, %v92
  %v109 = vmul.f32 %v31, %v92
  %v110 = vmul.f32 %v32, %v92
  %v111 = vmul.f32 %v33, %v92
  %v112 = vmul.f32 %v34, %v92
  %v113 = vmul.f32 %v35, %v92
  %v114 = vmul.f32 %v36, %v92
  %v115 = vmul.f32 %v37, %v92
  %v116 = vmul.f32 %v38, %v92
  %v117 = vmul.f32 %v39, %v92
  %v118 = vmul.f32 %v40, %v92
  %v119 = vmul.f32 %v41, %v92
  %v120 = vmul.f32 %v42, %v92
  %v121 = vmul.f32 %v43, %v92
  %v122 = vmul.f32 %v44, %v92
  %v123 = vmul.f32 %v45, %v92
  %v124 = vmul.f32 %v46, %v92
  %v125 = vmul.f32 %v47, %v92
  %v126 = vmul.f32 %v48, %v92
  %v127 = vmul.f32 %v49, %v92
  %v128 = vmul.f32 %v50, %v92
  %v129 = vmul.f32 %v51, %v92
  %v130 = vmul.f32 %v52, %v92
  %v131 = vmul.f32 %v53, %v96
  %v132 = vmul.f32 %v54, %v96
  %v133 = vmul.f32 %v55, %v96
  %v134 = vmul.f32 %v56, %v96
  %v135 = vmul.f32 %v57, %v96
  %v136 = vmul.f32 %v58, %v96
  %v137 = vmul.f32 %v59, %v96
  %v138 = vmul.f32 %v60, %v96
  %v139 = vmul.f32 %v61, %v96
  %v140 = vmul.f32 %v62, %v96
  %v141 = vmul.f32 %v63, %v96
  %v142 = vmul.f32 %v64, %v96
  %v143 = vmul.f32 %v65, %v96
  %v144 = vmul.f32 %v66, %v96
  %v145 = vmul.f32 %v67, %v96
  %v146 = vmul.f32 %v68, %v96
  %v147 = vmul.f32 %v69, %v96
  %v148 = vmul.f32 %v70, %v96
  %v149 = vmul.f32 %v71, %v96
  %v150 = vmul.f32 %v72, %v96
  %v151 = vmul.f32 %v73, %v96
  %v152 = vmul.f32 %v74, %v96
  %v153 = vmul.f32 %v75, %v96
  %v154 = vmul.f32 %v76, %v96
  %v155 = vmul.f32 %v77, %v96
  %v156 = vmul.f32 %v78, %v96
  %v157 = vmul.f32 %v79, %v96
  %v158 = vmul.f32 %v80, %v96
  %v159 = vmul.f32 %v81, %v96
  %v160 = vmul.f32 %v82, %v96
  %v161 = vmul.f32 %v83, %v96
  %v162 = vmul.f32 %v84, %v96
  %v163 = vpack.c.bf16 %v100, %v99
  %v164 = vpack.c.bf16 %v102, %v101
  %v165 = vpack.c.bf16 %v104, %v103
  %v166 = vpack.c.bf16 %v106, %v105
  %v167 = vpack.c.bf16 %v108, %v107
  %v168 = vpack.c.bf16 %v110, %v109
  %v169 = vpack.c.bf16 %v112, %v111
  %v170 = vpack.c.bf16 %v114, %v113
  %v171 = vpack.c.bf16 %v116, %v115
  %v172 = vpack.c.bf16 %v118, %v117
  %v173 = vpack.c.bf16 %v120, %v119
  %v174 = vpack.c.bf16 %v122, %v121
  %v175 = vpack.c.bf16 %v124, %v123
  %v176 = vpack.c.bf16 %v126, %v125
  %v177 = vpack.c.bf16 %v128, %v127
  %v178 = vpack.c.bf16 %v130, %v129
  %v179 = vpack.c.bf16 %v132, %v131
  %v180 = vpack.c.bf16 %v134, %v133
  %v181 = vpack.c.bf16 %v136, %v135
  %v182 = vpack.c.bf16 %v138, %v137
  %v183 = vpack.c.bf16 %v140, %v139
  %v184 = vpack.c.bf16 %v142, %v141
  %v185 = vpack.c.bf16 %v144, %v143
  %v186 = vpack.c.bf16 %v146, %v145
  %v187 = vpack.c.bf16 %v148, %v147
  %v188 = vpack.c.bf16 %v150, %v149
  %v189 = vpack.c.bf16 %v152, %v151
  %v190 = vpack.c.bf16 %v154, %v153
  %v191 = vpack.c.bf16 %v156, %v155
  %v192 = vpack.c.bf16 %v158, %v157
  %v193 = vpack.c.bf16 %v160, %v159
  %v194 = vpack.c.bf16 %v162, %v161
  %v195 = vld [vmem:[%s2] sm:$0x3]
  %vm196 = vcmask 31744
  %v198 = vsel %vm196, %v163, 0
  %v201 = vsel %vm196, %v164, 0
  %v204 = vsel %vm196, %v165, 0
  %v207 = vsel %vm196, %v166, 0
  %v210 = vsel %vm196, %v167, 0
  %v213 = vsel %vm196, %v168, 0
  %v216 = vsel %vm196, %v169, 0
  %v219 = vsel %vm196, %v170, 0
  %v222 = vsel %vm196, %v171, 0
  %v225 = vsel %vm196, %v172, 0
  %v228 = vsel %vm196, %v173, 0
  %v231 = vsel %vm196, %v174, 0
  %v234 = vsel %vm196, %v175, 0
  %v237 = vsel %vm196, %v176, 0
  %v240 = vsel %vm196, %v177, 0
  %v243 = vsel %vm196, %v178, 0
  %v246 = vsel %vm196, %v179, 0
  %v249 = vsel %vm196, %v180, 0
  %v252 = vsel %vm196, %v181, 0
  %v255 = vsel %vm196, %v182, 0
  %v258 = vsel %vm196, %v183, 0
  %v261 = vsel %vm196, %v184, 0
  %v264 = vsel %vm196, %v185, 0
  %v267 = vsel %vm196, %v186, 0
  %v270 = vsel %vm196, %v187, 0
  %v273 = vsel %vm196, %v188, 0
  %v276 = vsel %vm196, %v189, 0
  %v279 = vsel %vm196, %v190, 0
  %v282 = vsel %vm196, %v191, 0
  %v285 = vsel %vm196, %v192, 0
  %v288 = vsel %vm196, %v193, 0
  %v291 = vsel %vm196, %v194, 0
  %vm293 = vcmask 1041408
  %v295 = vsel %vm293, %v195, 0
  %297 = vmatprep.subr.bf16.mxu0 0
  %298 = vmatpush1.bf16.msra.mxu0 0
  %299 = vmatprep.subr.bf16.mxu0 0
  %300 = vmatpush1.bf16.msra.mxu0 0
  %301 = vmatprep.subr.bf16.mxu0 0
  %302 = vmatpush1.bf16.msra.mxu0 0
  %303 = vmatprep.subr.bf16.mxu0 0
  %304 = vmatpush1.bf16.msra.mxu0 0
  %305 = vmatprep.subr.bf16.mxu0 0
  %306 = vmatpush1.bf16.msra.mxu0 0
  %307 = vmatprep.subr.bf16.mxu0 0
  %308 = vmatpush1.bf16.msra.mxu0 0
  %309 = vmatprep.subr.bf16.mxu0 0
  %310 = vmatpush1.bf16.msra.mxu0 0
  %311 = vmatprep.subr.bf16.mxu0 0
  %312 = vmatpush1.bf16.msra.mxu0 %v295
  %313 = vmatprep.subr.bf16.mxu0 0
  %314 = vmatpush2.bf16.msra.mxu0 0
  %315 = vmatprep.subr.bf16.mxu0 0
  %316 = vmatpush2.bf16.msra.mxu0 0
  %317 = vmatprep.subr.bf16.mxu0 0
  %318 = vmatpush2.bf16.msra.mxu0 0
  %319 = vmatprep.subr.bf16.mxu0 0
  %320 = vmatpush2.bf16.msra.mxu0 0
  %321 = vmatprep.subr.bf16.mxu0 0
  %322 = vmatpush2.bf16.msra.mxu0 0
  %323 = vmatprep.subr.bf16.mxu0 0
  %324 = vmatpush2.bf16.msra.mxu0 0
  %325 = vmatprep.subr.bf16.mxu0 0
  %326 = vmatpush2.bf16.msra.mxu0 0
  %327 = vmatprep.subr.bf16.mxu0 0
  %328 = vmatpush2.bf16.msra.mxu0 0
  %329 = vmatprep.mubr.bf16.mxu0 0
  %330 = vmatmul.mubr.bf16.gmra.mxu0 %v198
  %v331 = vpop.f32.mrf.mxu0
  %v332 = vadd.f32 0.0, %v331
  %v333 = vpop.f32.mrf.mxu0
  %v334 = vpop.f32.mrf.mxu0
  %v335 = vadd.f32 0.0, %v334
  %v336 = vpop.f32.mrf.mxu0
  %337 = vmatprep.mubr.bf16.mxu0 0
  %338 = vmatmul.mubr.bf16.gmra.mxu0 %v201
  %v339 = vpop.f32.mrf.mxu0
  %v340 = vadd.f32 0.0, %v339
  %v341 = vpop.f32.mrf.mxu0
  %v342 = vpop.f32.mrf.mxu0
  %v343 = vadd.f32 0.0, %v342
  %v344 = vpop.f32.mrf.mxu0
  %345 = vmatprep.mubr.bf16.mxu0 0
  %346 = vmatmul.mubr.bf16.gmra.mxu0 %v204
  %v347 = vpop.f32.mrf.mxu0
  %v348 = vadd.f32 0.0, %v347
  %v349 = vpop.f32.mrf.mxu0
  %v350 = vpop.f32.mrf.mxu0
  %v351 = vadd.f32 0.0, %v350
  %v352 = vpop.f32.mrf.mxu0
  %353 = vmatprep.mubr.bf16.mxu0 0
  %354 = vmatmul.mubr.bf16.gmra.mxu0 %v207
  %v355 = vpop.f32.mrf.mxu0
  %v356 = vadd.f32 0.0, %v355
  %v357 = vpop.f32.mrf.mxu0
  %v358 = vpop.f32.mrf.mxu0
  %v359 = vadd.f32 0.0, %v358
  %v360 = vpop.f32.mrf.mxu0
  %361 = vmatprep.mubr.bf16.mxu0 0
  %362 = vmatmul.mubr.bf16.gmra.mxu0 %v210
  %v363 = vpop.f32.mrf.mxu0
  %v364 = vadd.f32 0.0, %v363
  %v365 = vpop.f32.mrf.mxu0
  %v366 = vpop.f32.mrf.mxu0
  %v367 = vadd.f32 0.0, %v366
  %v368 = vpop.f32.mrf.mxu0
  %369 = vmatprep.mubr.bf16.mxu0 0
  %370 = vmatmul.mubr.bf16.gmra.mxu0 %v213
  %v371 = vpop.f32.mrf.mxu0
  %v372 = vadd.f32 0.0, %v371
  %v373 = vpop.f32.mrf.mxu0
  %v374 = vpop.f32.mrf.mxu0
  %v375 = vadd.f32 0.0, %v374
  %v376 = vpop.f32.mrf.mxu0
  %377 = vmatprep.mubr.bf16.mxu0 0
  %378 = vmatmul.mubr.bf16.gmra.mxu0 %v216
  %v379 = vpop.f32.mrf.mxu0
  %v380 = vadd.f32 0.0, %v379
  %v381 = vpop.f32.mrf.mxu0
  %v382 = vpop.f32.mrf.mxu0
  %v383 = vadd.f32 0.0, %v382
  %v384 = vpop.f32.mrf.mxu0
  %385 = vmatprep.mubr.bf16.mxu0 0
  %386 = vmatmul.mubr.bf16.gmra.mxu0 %v219
  %v387 = vpop.f32.mrf.mxu0
  %v388 = vadd.f32 0.0, %v387
  %v389 = vpop.f32.mrf.mxu0
  %v390 = vpop.f32.mrf.mxu0
  %v391 = vadd.f32 0.0, %v390
  %v392 = vpop.f32.mrf.mxu0
  %393 = vmatprep.mubr.bf16.mxu0 0
  %394 = vmatmul.mubr.bf16.gmra.mxu0 %v222
  %v395 = vpop.f32.mrf.mxu0
  %v396 = vadd.f32 0.0, %v395
  %v397 = vpop.f32.mrf.mxu0
  %v398 = vpop.f32.mrf.mxu0
  %v399 = vadd.f32 0.0, %v398
  %v400 = vpop.f32.mrf.mxu0
  %401 = vmatprep.mubr.bf16.mxu0 0
  %402 = vmatmul.mubr.bf16.gmra.mxu0 %v225
  %v403 = vpop.f32.mrf.mxu0
  %v404 = vadd.f32 0.0, %v403
  %v405 = vpop.f32.mrf.mxu0
  %v406 = vpop.f32.mrf.mxu0
  %v407 = vadd.f32 0.0, %v406
  %v408 = vpop.f32.mrf.mxu0
  %409 = vmatprep.mubr.bf16.mxu0 0
  %410 = vmatmul.mubr.bf16.gmra.mxu0 %v228
  %v411 = vpop.f32.mrf.mxu0
  %v412 = vadd.f32 0.0, %v411
  %v413 = vpop.f32.mrf.mxu0
  %v414 = vpop.f32.mrf.mxu0
  %v415 = vadd.f32 0.0, %v414
  %v416 = vpop.f32.mrf.mxu0
  %417 = vmatprep.mubr.bf16.mxu0 0
  %418 = vmatmul.mubr.bf16.gmra.mxu0 %v231
  %v419 = vpop.f32.mrf.mxu0
  %v420 = vadd.f32 0.0, %v419
  %v421 = vpop.f32.mrf.mxu0
  %v422 = vpop.f32.mrf.mxu0
  %v423 = vadd.f32 0.0, %v422
  %v424 = vpop.f32.mrf.mxu0
  %425 = vmatprep.mubr.bf16.mxu0 0
  %426 = vmatmul.mubr.bf16.gmra.mxu0 %v234
  %v427 = vpop.f32.mrf.mxu0
  %v428 = vadd.f32 0.0, %v427
  %v429 = vpop.f32.mrf.mxu0
  %v430 = vpop.f32.mrf.mxu0
  %v431 = vadd.f32 0.0, %v430
  %v432 = vpop.f32.mrf.mxu0
  %433 = vmatprep.mubr.bf16.mxu0 0
  %434 = vmatmul.mubr.bf16.gmra.mxu0 %v237
  %v435 = vpop.f32.mrf.mxu0
  %v436 = vadd.f32 0.0, %v435
  %v437 = vpop.f32.mrf.mxu0
  %v438 = vpop.f32.mrf.mxu0
  %v439 = vadd.f32 0.0, %v438
  %v440 = vpop.f32.mrf.mxu0
  %441 = vmatprep.mubr.bf16.mxu0 0
  %442 = vmatmul.mubr.bf16.gmra.mxu0 %v240
  %v443 = vpop.f32.mrf.mxu0
  %v444 = vadd.f32 0.0, %v443
  %v445 = vpop.f32.mrf.mxu0
  %v446 = vpop.f32.mrf.mxu0
  %v447 = vadd.f32 0.0, %v446
  %v448 = vpop.f32.mrf.mxu0
  %449 = vmatprep.mubr.bf16.mxu0 0
  %450 = vmatmul.mubr.bf16.gmra.mxu0 %v243
  %v451 = vpop.f32.mrf.mxu0
  %v452 = vadd.f32 0.0, %v451
  %v453 = vpop.f32.mrf.mxu0
  %v454 = vpop.f32.mrf.mxu0
  %v455 = vadd.f32 0.0, %v454
  %v456 = vpop.f32.mrf.mxu0
  %457 = vmatprep.mubr.bf16.mxu0 0
  %458 = vmatmul.mubr.bf16.gmra.mxu0 %v246
  %v459 = vpop.f32.mrf.mxu0
  %v460 = vadd.f32 0.0, %v459
  %v461 = vpop.f32.mrf.mxu0
  %v462 = vpop.f32.mrf.mxu0
  %v463 = vadd.f32 0.0, %v462
  %v464 = vpop.f32.mrf.mxu0
  %465 = vmatprep.mubr.bf16.mxu0 0
  %466 = vmatmul.mubr.bf16.gmra.mxu0 %v249
  %v467 = vpop.f32.mrf.mxu0
  %v468 = vadd.f32 0.0, %v467
  %v469 = vpop.f32.mrf.mxu0
  %v470 = vpop.f32.mrf.mxu0
  %v471 = vadd.f32 0.0, %v470
  %v472 = vpop.f32.mrf.mxu0
  %473 = vmatprep.mubr.bf16.mxu0 0
  %474 = vmatmul.mubr.bf16.gmra.mxu0 %v252
  %v475 = vpop.f32.mrf.mxu0
  %v476 = vadd.f32 0.0, %v475
  %v477 = vpop.f32.mrf.mxu0
  %v478 = vpop.f32.mrf.mxu0
  %v479 = vadd.f32 0.0, %v478
  %v480 = vpop.f32.mrf.mxu0
  %481 = vmatprep.mubr.bf16.mxu0 0
  %482 = vmatmul.mubr.bf16.gmra.mxu0 %v255
  %v483 = vpop.f32.mrf.mxu0
  %v484 = vadd.f32 0.0, %v483
  %v485 = vpop.f32.mrf.mxu0
  %v486 = vpop.f32.mrf.mxu0
  %v487 = vadd.f32 0.0, %v486
  %v488 = vpop.f32.mrf.mxu0
  %489 = vmatprep.mubr.bf16.mxu0 0
  %490 = vmatmul.mubr.bf16.gmra.mxu0 %v258
  %v491 = vpop.f32.mrf.mxu0
  %v492 = vadd.f32 0.0, %v491
  %v493 = vpop.f32.mrf.mxu0
  %v494 = vpop.f32.mrf.mxu0
  %v495 = vadd.f32 0.0, %v494
  %v496 = vpop.f32.mrf.mxu0
  %497 = vmatprep.mubr.bf16.mxu0 0
  %498 = vmatmul.mubr.bf16.gmra.mxu0 %v261
  %v499 = vpop.f32.mrf.mxu0
  %v500 = vadd.f32 0.0, %v499
  %v501 = vpop.f32.mrf.mxu0
  %v502 = vpop.f32.mrf.mxu0
  %v503 = vadd.f32 0.0, %v502
  %v504 = vpop.f32.mrf.mxu0
  %505 = vmatprep.mubr.bf16.mxu0 0
  %506 = vmatmul.mubr.bf16.gmra.mxu0 %v264
  %v507 = vpop.f32.mrf.mxu0
  %v508 = vadd.f32 0.0, %v507
  %v509 = vpop.f32.mrf.mxu0
  %v510 = vpop.f32.mrf.mxu0
  %v511 = vadd.f32 0.0, %v510
  %v512 = vpop.f32.mrf.mxu0
  %513 = vmatprep.mubr.bf16.mxu0 0
  %514 = vmatmul.mubr.bf16.gmra.mxu0 %v267
  %v515 = vpop.f32.mrf.mxu0
  %v516 = vadd.f32 0.0, %v515
  %v517 = vpop.f32.mrf.mxu0
  %v518 = vpop.f32.mrf.mxu0
  %v519 = vadd.f32 0.0, %v518
  %v520 = vpop.f32.mrf.mxu0
  %521 = vmatprep.mubr.bf16.mxu0 0
  %522 = vmatmul.mubr.bf16.gmra.mxu0 %v270
  %v523 = vpop.f32.mrf.mxu0
  %v524 = vadd.f32 0.0, %v523
  %v525 = vpop.f32.mrf.mxu0
  %v526 = vpop.f32.mrf.mxu0
  %v527 = vadd.f32 0.0, %v526
  %v528 = vpop.f32.mrf.mxu0
  %529 = vmatprep.mubr.bf16.mxu0 0
  %530 = vmatmul.mubr.bf16.gmra.mxu0 %v273
  %v531 = vpop.f32.mrf.mxu0
  %v532 = vadd.f32 0.0, %v531
  %v533 = vpop.f32.mrf.mxu0
  %v534 = vpop.f32.mrf.mxu0
  %v535 = vadd.f32 0.0, %v534
  %v536 = vpop.f32.mrf.mxu0
  %537 = vmatprep.mubr.bf16.mxu0 0
  %538 = vmatmul.mubr.bf16.gmra.mxu0 %v276
  %v539 = vpop.f32.mrf.mxu0
  %v540 = vadd.f32 0.0, %v539
  %v541 = vpop.f32.mrf.mxu0
  %v542 = vpop.f32.mrf.mxu0
  %v543 = vadd.f32 0.0, %v542
  %v544 = vpop.f32.mrf.mxu0
  %545 = vmatprep.mubr.bf16.mxu0 0
  %546 = vmatmul.mubr.bf16.gmra.mxu0 %v279
  %v547 = vpop.f32.mrf.mxu0
  %v548 = vadd.f32 0.0, %v547
  %v549 = vpop.f32.mrf.mxu0
  %v550 = vpop.f32.mrf.mxu0
  %v551 = vadd.f32 0.0, %v550
  %v552 = vpop.f32.mrf.mxu0
  %553 = vmatprep.mubr.bf16.mxu0 0
  %554 = vmatmul.mubr.bf16.gmra.mxu0 %v282
  %v555 = vpop.f32.mrf.mxu0
  %v556 = vadd.f32 0.0, %v555
  %v557 = vpop.f32.mrf.mxu0
  %v558 = vpop.f32.mrf.mxu0
  %v559 = vadd.f32 0.0, %v558
  %v560 = vpop.f32.mrf.mxu0
  %561 = vmatprep.mubr.bf16.mxu0 0
  %562 = vmatmul.mubr.bf16.gmra.mxu0 %v285
  %v563 = vpop.f32.mrf.mxu0
  %v564 = vadd.f32 0.0, %v563
  %v565 = vpop.f32.mrf.mxu0
  %v566 = vpop.f32.mrf.mxu0
  %v567 = vadd.f32 0.0, %v566
  %v568 = vpop.f32.mrf.mxu0
  %569 = vmatprep.mubr.bf16.mxu0 0
  %570 = vmatmul.mubr.bf16.gmra.mxu0 %v288
  %v571 = vpop.f32.mrf.mxu0
  %v572 = vadd.f32 0.0, %v571
  %v573 = vpop.f32.mrf.mxu0
  %v574 = vpop.f32.mrf.mxu0
  %v575 = vadd.f32 0.0, %v574
  %v576 = vpop.f32.mrf.mxu0
  %577 = vmatprep.mubr.bf16.mxu0 0
  %578 = vmatmul.mubr.bf16.gmra.mxu0 %v291
  %v579 = vpop.f32.mrf.mxu0
  %v580 = vadd.f32 0.0, %v579
  %v581 = vpop.f32.mrf.mxu0
  %v582 = vpop.f32.mrf.mxu0
  %v583 = vadd.f32 0.0, %v582
  %v584 = vpop.f32.mrf.mxu0
  %585 = vdwg.mxu0
  %vm586 = vcmask 64512
  %587 = vst.msk [vmem:[#allocation2] sm:$0xff] %vm586, 0.0
  %588 = vst.msk [vmem:[#allocation2 + $0x8] sm:$0xff] %vm586, 0.0
  %589 = vst.msk [vmem:[#allocation2 + $0x10] sm:$0xff] %vm586, 0.0
  %590 = vst.msk [vmem:[#allocation2 + $0x1b0] sm:$0xff] %vm586, 0.0
  %591 = vst.msk [vmem:[#allocation2 + $0x1b8] sm:$0xff] %vm586, 0.0
  %592 = vst.msk [vmem:[#allocation2 + $0x1c0] sm:$0xff] %vm586, 0.0
  %s593 = scalar_lea.vmem [#allocation2], 408
  %594 = vst.msk [vmem:[%s593] sm:$0xff] %vm586, 0.0
  %595 = vst.msk [vmem:[%s593 + $0x8] sm:$0xff] %vm586, 0.0
  %596 = vst.msk [vmem:[%s593 + $0x10] sm:$0xff] %vm586, 0.0
  %597 = vst.msk [vmem:[%s593 + $0x1b0] sm:$0xff] %vm586, 0.0
  %598 = vst.msk [vmem:[%s593 + $0x1b8] sm:$0xff] %vm586, 0.0
  %599 = vst.msk [vmem:[%s593 + $0x1c0] sm:$0xff] %vm586, 0.0
  %vm600 = vcmask 57344
  %601 = vst.msk [vmem:[#allocation2] sm:$0x1] %vm600, 0.0
  %602 = vst.msk [vmem:[#allocation2 + $0x18] sm:$0x1] %vm600, 0.0
  %603 = vst.msk [vmem:[#allocation2 + $0x30] sm:$0x1] %vm600, 0.0
  %604 = vst.msk [vmem:[#allocation2 + $0x48] sm:$0x1] %vm600, 0.0
  %605 = vst.msk [vmem:[#allocation2 + $0x60] sm:$0x1] %vm600, 0.0
  %606 = vst.msk [vmem:[#allocation2 + $0x78] sm:$0x1] %vm600, 0.0
  %607 = vst.msk [vmem:[#allocation2 + $0x90] sm:$0x1] %vm600, 0.0
  %608 = vst.msk [vmem:[#allocation2 + $0xa8] sm:$0x1] %vm600, 0.0
  %609 = vst.msk [vmem:[#allocation2 + $0xc0] sm:$0x1] %vm600, 0.0
  %610 = vst.msk [vmem:[#allocation2 + $0xd8] sm:$0x1] %vm600, 0.0
  %611 = vst.msk [vmem:[#allocation2 + $0xf0] sm:$0x1] %vm600, 0.0
  %612 = vst.msk [vmem:[#allocation2 + $0x108] sm:$0x1] %vm600, 0.0
  %613 = vst.msk [vmem:[#allocation2 + $0x120] sm:$0x1] %vm600, 0.0
  %614 = vst.msk [vmem:[#allocation2 + $0x138] sm:$0x1] %vm600, 0.0
  %615 = vst.msk [vmem:[#allocation2 + $0x150] sm:$0x1] %vm600, 0.0
  %616 = vst.msk [vmem:[#allocation2 + $0x168] sm:$0x1] %vm600, 0.0
  %617 = vst.msk [vmem:[#allocation2 + $0x180] sm:$0x1] %vm600, 0.0
  %618 = vst.msk [vmem:[#allocation2 + $0x198] sm:$0x1] %vm600, 0.0
  %619 = vst.msk [vmem:[#allocation2 + $0x1b0] sm:$0x1] %vm600, 0.0
  %620 = vst.msk [vmem:[#allocation2 + $0x1c8] sm:$0x1] %vm600, 0.0
  %621 = vst.msk [vmem:[#allocation2 + $0x1e0] sm:$0x1] %vm600, 0.0
  %622 = vst.msk [vmem:[#allocation2 + $0x1f8] sm:$0x1] %vm600, 0.0
  %623 = vst.msk [vmem:[#allocation2 + $0x210] sm:$0x1] %vm600, 0.0
  %624 = vst.msk [vmem:[#allocation2 + $0x228] sm:$0x1] %vm600, 0.0
  %625 = vst.msk [vmem:[#allocation2 + $0x240] sm:$0x1] %vm600, 0.0
  %626 = vst.msk [vmem:[#allocation2 + $0x258] sm:$0x1] %vm600, 0.0
  %627 = vst.msk [vmem:[#allocation2 + $0x270] sm:$0x1] %vm600, 0.0
  %628 = vst.msk [vmem:[#allocation2 + $0x288] sm:$0x1] %vm600, 0.0
  %629 = vst.msk [vmem:[#allocation2 + $0x2a0] sm:$0x1] %vm600, 0.0
  %630 = vst.msk [vmem:[#allocation2 + $0x2b8] sm:$0x1] %vm600, 0.0
  %631 = vst.msk [vmem:[#allocation2 + $0x2d0] sm:$0x1] %vm600, 0.0
  %632 = vst.msk [vmem:[#allocation2 + $0x2e8] sm:$0x1] %vm600, 0.0
  %633 = vst.msk [vmem:[#allocation2 + $0x300] sm:$0x1] %vm600, 0.0
  %634 = vst.msk [vmem:[#allocation2 + $0x318] sm:$0x1] %vm600, 0.0
  %635 = vst.msk [vmem:[#allocation2 + $0x330] sm:$0x1] %vm600, 0.0
  %636 = vst.msk [vmem:[#allocation2 + $0x348] sm:$0x1] %vm600, 0.0
  %vm637 = vcmask 63488
  %638 = vst.msk [vmem:[#allocation2 + $0x11] sm:$0x7f] %vm637, 0.0
  %639 = vst.msk [vmem:[#allocation2 + $0x29] sm:$0x7f] %vm637, 0.0
  %640 = vst.msk [vmem:[#allocation2 + $0x41] sm:$0x7f] %vm637, 0.0
  %641 = vst.msk [vmem:[#allocation2 + $0x59] sm:$0x7f] %vm637, 0.0
  %642 = vst.msk [vmem:[#allocation2 + $0x71] sm:$0x7f] %vm637, 0.0
  %643 = vst.msk [vmem:[#allocation2 + $0x89] sm:$0x7f] %vm637, 0.0
  %644 = vst.msk [vmem:[#allocation2 + $0xa1] sm:$0x7f] %vm637, 0.0
  %645 = vst.msk [vmem:[#allocation2 + $0xb9] sm:$0x7f] %vm637, 0.0
  %646 = vst.msk [vmem:[#allocation2 + $0xd1] sm:$0x7f] %vm637, 0.0
  %647 = vst.msk [vmem:[#allocation2 + $0xe9] sm:$0x7f] %vm637, 0.0
  %648 = vst.msk [vmem:[#allocation2 + $0x101] sm:$0x7f] %vm637, 0.0
  %649 = vst.msk [vmem:[#allocation2 + $0x119] sm:$0x7f] %vm637, 0.0
  %650 = vst.msk [vmem:[#allocation2 + $0x131] sm:$0x7f] %vm637, 0.0
  %651 = vst.msk [vmem:[#allocation2 + $0x149] sm:$0x7f] %vm637, 0.0
  %652 = vst.msk [vmem:[#allocation2 + $0x161] sm:$0x7f] %vm637, 0.0
  %653 = vst.msk [vmem:[#allocation2 + $0x179] sm:$0x7f] %vm637, 0.0
  %654 = vst.msk [vmem:[#allocation2 + $0x191] sm:$0x7f] %vm637, 0.0
  %655 = vst.msk [vmem:[#allocation2 + $0x1a9] sm:$0x7f] %vm637, 0.0
  %656 = vst.msk [vmem:[#allocation2 + $0x1c1] sm:$0x7f] %vm637, 0.0
  %657 = vst.msk [vmem:[#allocation2 + $0x1d9] sm:$0x7f] %vm637, 0.0
  %658 = vst.msk [vmem:[#allocation2 + $0x1f1] sm:$0x7f] %vm637, 0.0
  %659 = vst.msk [vmem:[#allocation2 + $0x209] sm:$0x7f] %vm637, 0.0
  %660 = vst.msk [vmem:[#allocation2 + $0x221] sm:$0x7f] %vm637, 0.0
  %661 = vst.msk [vmem:[#allocation2 + $0x239] sm:$0x7f] %vm637, 0.0
  %662 = vst.msk [vmem:[#allocation2 + $0x251] sm:$0x7f] %vm637, 0.0
  %663 = vst.msk [vmem:[#allocation2 + $0x269] sm:$0x7f] %vm637, 0.0
  %664 = vst.msk [vmem:[#allocation2 + $0x281] sm:$0x7f] %vm637, 0.0
  %665 = vst.msk [vmem:[#allocation2 + $0x299] sm:$0x7f] %vm637, 0.0
  %666 = vst.msk [vmem:[#allocation2 + $0x2b1] sm:$0x7f] %vm637, 0.0
  %667 = vst.msk [vmem:[#allocation2 + $0x2c9] sm:$0x7f] %vm637, 0.0
  %668 = vst.msk [vmem:[#allocation2 + $0x2e1] sm:$0x7f] %vm637, 0.0
  %669 = vst.msk [vmem:[#allocation2 + $0x2f9] sm:$0x7f] %vm637, 0.0
  %670 = vst.msk [vmem:[#allocation2 + $0x311] sm:$0x7f] %vm637, 0.0
  %671 = vst.msk [vmem:[#allocation2 + $0x329] sm:$0x7f] %vm637, 0.0
  %672 = vst.msk [vmem:[#allocation2 + $0x341] sm:$0x7f] %vm637, 0.0
  %673 = vst.msk [vmem:[#allocation2 + $0x359] sm:$0x7f] %vm637, 0.0
  %s674 = scalar_lea.vmem [#allocation2], 24
  %675 = vst.msk [vmem:[%s674 + $0x1] sm:$0xff] %vm586, %v332
  %676 = vst.msk [vmem:[%s674 + $0x9] sm:$0xff] %vm586, %v335
  %677 = vst.msk [vmem:[%s674 + $0x19] sm:$0xff] %vm586, %v340
  %678 = vst.msk [vmem:[%s674 + $0x21] sm:$0xff] %vm586, %v343
  %679 = vst.msk [vmem:[%s674 + $0x31] sm:$0xff] %vm586, %v348
  %680 = vst.msk [vmem:[%s674 + $0x39] sm:$0xff] %vm586, %v351
  %681 = vst.msk [vmem:[%s674 + $0x49] sm:$0xff] %vm586, %v356
  %682 = vst.msk [vmem:[%s674 + $0x51] sm:$0xff] %vm586, %v359
  %683 = vst.msk [vmem:[%s674 + $0x61] sm:$0xff] %vm586, %v364
  %684 = vst.msk [vmem:[%s674 + $0x69] sm:$0xff] %vm586, %v367
  %685 = vst.msk [vmem:[%s674 + $0x79] sm:$0xff] %vm586, %v372
  %686 = vst.msk [vmem:[%s674 + $0x81] sm:$0xff] %vm586, %v375
  %687 = vst.msk [vmem:[%s674 + $0x91] sm:$0xff] %vm586, %v380
  %688 = vst.msk [vmem:[%s674 + $0x99] sm:$0xff] %vm586, %v383
  %689 = vst.msk [vmem:[%s674 + $0xa9] sm:$0xff] %vm586, %v388
  %690 = vst.msk [vmem:[%s674 + $0xb1] sm:$0xff] %vm586, %v391
  %691 = vst.msk [vmem:[%s674 + $0xc1] sm:$0xff] %vm586, %v396
  %692 = vst.msk [vmem:[%s674 + $0xc9] sm:$0xff] %vm586, %v399
  %693 = vst.msk [vmem:[%s674 + $0xd9] sm:$0xff] %vm586, %v404
  %694 = vst.msk [vmem:[%s674 + $0xe1] sm:$0xff] %vm586, %v407
  %695 = vst.msk [vmem:[%s674 + $0xf1] sm:$0xff] %vm586, %v412
  %696 = vst.msk [vmem:[%s674 + $0xf9] sm:$0xff] %vm586, %v415
  %697 = vst.msk [vmem:[%s674 + $0x109] sm:$0xff] %vm586, %v420
  %698 = vst.msk [vmem:[%s674 + $0x111] sm:$0xff] %vm586, %v423
  %699 = vst.msk [vmem:[%s674 + $0x121] sm:$0xff] %vm586, %v428
  %700 = vst.msk [vmem:[%s674 + $0x129] sm:$0xff] %vm586, %v431
  %701 = vst.msk [vmem:[%s674 + $0x139] sm:$0xff] %vm586, %v436
  %702 = vst.msk [vmem:[%s674 + $0x141] sm:$0xff] %vm586, %v439
  %703 = vst.msk [vmem:[%s674 + $0x151] sm:$0xff] %vm586, %v444
  %704 = vst.msk [vmem:[%s674 + $0x159] sm:$0xff] %vm586, %v447
  %705 = vst.msk [vmem:[%s674 + $0x169] sm:$0xff] %vm586, %v452
  %706 = vst.msk [vmem:[%s674 + $0x171] sm:$0xff] %vm586, %v455
  %707 = vst.msk [vmem:[%s674 + $0x1b1] sm:$0xff] %vm586, %v460
  %708 = vst.msk [vmem:[%s674 + $0x1b9] sm:$0xff] %vm586, %v463
  %709 = vst.msk [vmem:[%s674 + $0x1c9] sm:$0xff] %vm586, %v468
  %710 = vst.msk [vmem:[%s674 + $0x1d1] sm:$0xff] %vm586, %v471
  %711 = vst.msk [vmem:[%s674 + $0x1e1] sm:$0xff] %vm586, %v476
  %712 = vst.msk [vmem:[%s674 + $0x1e9] sm:$0xff] %vm586, %v479
  %713 = vst.msk [vmem:[%s674 + $0x1f9] sm:$0xff] %vm586, %v484
  %714 = vst.msk [vmem:[%s674 + $0x201] sm:$0xff] %vm586, %v487
  %715 = vst.msk [vmem:[%s674 + $0x211] sm:$0xff] %vm586, %v492
  %716 = vst.msk [vmem:[%s674 + $0x219] sm:$0xff] %vm586, %v495
  %717 = vst.msk [vmem:[%s674 + $0x229] sm:$0xff] %vm586, %v500
  %718 = vst.msk [vmem:[%s674 + $0x231] sm:$0xff] %vm586, %v503
  %719 = vst.msk [vmem:[%s674 + $0x241] sm:$0xff] %vm586, %v508
  %720 = vst.msk [vmem:[%s674 + $0x249] sm:$0xff] %vm586, %v511
  %721 = vst.msk [vmem:[%s674 + $0x259] sm:$0xff] %vm586, %v516
  %722 = vst.msk [vmem:[%s674 + $0x261] sm:$0xff] %vm586, %v519
  %723 = vst.msk [vmem:[%s674 + $0x271] sm:$0xff] %vm586, %v524
  %724 = vst.msk [vmem:[%s674 + $0x279] sm:$0xff] %vm586, %v527
  %725 = vst.msk [vmem:[%s674 + $0x289] sm:$0xff] %vm586, %v532
  %726 = vst.msk [vmem:[%s674 + $0x291] sm:$0xff] %vm586, %v535
  %727 = vst.msk [vmem:[%s674 + $0x2a1] sm:$0xff] %vm586, %v540
  %728 = vst.msk [vmem:[%s674 + $0x2a9] sm:$0xff] %vm586, %v543
  %729 = vst.msk [vmem:[%s674 + $0x2b9] sm:$0xff] %vm586, %v548
  %730 = vst.msk [vmem:[%s674 + $0x2c1] sm:$0xff] %vm586, %v551
  %731 = vst.msk [vmem:[%s674 + $0x2d1] sm:$0xff] %vm586, %v556
  %732 = vst.msk [vmem:[%s674 + $0x2d9] sm:$0xff] %vm586, %v559
  %733 = vst.msk [vmem:[%s674 + $0x2e9] sm:$0xff] %vm586, %v564
  %734 = vst.msk [vmem:[%s674 + $0x2f1] sm:$0xff] %vm586, %v567
  %735 = vst.msk [vmem:[%s674 + $0x301] sm:$0xff] %vm586, %v572
  %736 = vst.msk [vmem:[%s674 + $0x309] sm:$0xff] %vm586, %v575
  %737 = vst.msk [vmem:[%s674 + $0x319] sm:$0xff] %vm586, %v580
  %738 = vst.msk [vmem:[%s674 + $0x321] sm:$0xff] %vm586, %v583
  %v739 = vld [vmem:[#allocation2] sm:$0xff]
  %v740 = vld [vmem:[#allocation2 + $0x8] sm:$0xff]
  %v741 = vld [vmem:[#allocation2 + $0x10] sm:$0xff]
  %v742 = vld [vmem:[#allocation2 + $0x18] sm:$0xff]
  %v743 = vld [vmem:[#allocation2 + $0x20] sm:$0xff]
  %v744 = vld [vmem:[#allocation2 + $0x28] sm:$0xff]
  %v745 = vld [vmem:[#allocation2 + $0x30] sm:$0xff]
  %v746 = vld [vmem:[#allocation2 + $0x38] sm:$0xff]
  %v747 = vld [vmem:[#allocation2 + $0x40] sm:$0xff]
  %v748 = vld [vmem:[#allocation2 + $0x48] sm:$0xff]
  %v749 = vld [vmem:[#allocation2 + $0x50] sm:$0xff]
  %v750 = vld [vmem:[#allocation2 + $0x58] sm:$0xff]
  %v751 = vld [vmem:[#allocation2 + $0x60] sm:$0xff]
  %v752 = vld [vmem:[#allocation2 + $0x68] sm:$0xff]
  %v753 = vld [vmem:[#allocation2 + $0x70] sm:$0xff]
  %v754 = vld [vmem:[#allocation2 + $0x78] sm:$0xff]
  %v755 = vld [vmem:[#allocation2 + $0x80] sm:$0xff]
  %v756 = vld [vmem:[#allocation2 + $0x88] sm:$0xff]
  %v757 = vld [vmem:[#allocation2 + $0x90] sm:$0xff]
  %v758 = vld [vmem:[#allocation2 + $0x98] sm:$0xff]
  %v759 = vld [vmem:[#allocation2 + $0xa0] sm:$0xff]
  %v760 = vld [vmem:[#allocation2 + $0xa8] sm:$0xff]
  %v761 = vld [vmem:[#allocation2 + $0xb0] sm:$0xff]
  %v762 = vld [vmem:[#allocation2 + $0xb8] sm:$0xff]
  %v763 = vld [vmem:[#allocation2 + $0xc0] sm:$0xff]
  %v764 = vld [vmem:[#allocation2 + $0xc8] sm:$0xff]
  %v765 = vld [vmem:[#allocation2 + $0xd0] sm:$0xff]
  %v766 = vld [vmem:[#allocation2 + $0xd8] sm:$0xff]
  %v767 = vld [vmem:[#allocation2 + $0xe0] sm:$0xff]
  %v768 = vld [vmem:[#allocation2 + $0xe8] sm:$0xff]
  %v769 = vld [vmem:[#allocation2 + $0xf0] sm:$0xff]
  %v770 = vld [vmem:[#allocation2 + $0xf8] sm:$0xff]
  %v771 = vld [vmem:[#allocation2 + $0x100] sm:$0xff]
  %v772 = vld [vmem:[#allocation2 + $0x108] sm:$0xff]
  %v773 = vld [vmem:[#allocation2 + $0x110] sm:$0xff]
  %v774 = vld [vmem:[#allocation2 + $0x118] sm:$0xff]
  %v775 = vld [vmem:[#allocation2 + $0x120] sm:$0xff]
  %v776 = vld [vmem:[#allocation2 + $0x128] sm:$0xff]
  %v777 = vld [vmem:[#allocation2 + $0x130] sm:$0xff]
  %v778 = vld [vmem:[#allocation2 + $0x138] sm:$0xff]
  %v779 = vld [vmem:[#allocation2 + $0x140] sm:$0xff]
  %v780 = vld [vmem:[#allocation2 + $0x148] sm:$0xff]
  %v781 = vld [vmem:[#allocation2 + $0x150] sm:$0xff]
  %v782 = vld [vmem:[#allocation2 + $0x158] sm:$0xff]
  %v783 = vld [vmem:[#allocation2 + $0x160] sm:$0xff]
  %v784 = vld [vmem:[#allocation2 + $0x168] sm:$0xff]
  %v785 = vld [vmem:[#allocation2 + $0x170] sm:$0xff]
  %v786 = vld [vmem:[#allocation2 + $0x178] sm:$0xff]
  %v787 = vld [vmem:[#allocation2 + $0x180] sm:$0xff]
  %v788 = vld [vmem:[#allocation2 + $0x188] sm:$0xff]
  %v789 = vld [vmem:[#allocation2 + $0x190] sm:$0xff]
  %v790 = vld [vmem:[#allocation2 + $0x198] sm:$0xff]
  %v791 = vld [vmem:[#allocation2 + $0x1a0] sm:$0xff]
  %v792 = vld [vmem:[#allocation2 + $0x1a8] sm:$0xff]
  %v793 = vld [vmem:[#allocation2 + $0x1b0] sm:$0xff]
  %v794 = vld [vmem:[#allocation2 + $0x1b8] sm:$0xff]
  %v795 = vld [vmem:[#allocation2 + $0x1c0] sm:$0xff]
  %v796 = vld [vmem:[#allocation2 + $0x1c8] sm:$0xff]
  %v797 = vld [vmem:[#allocation2 + $0x1d0] sm:$0xff]
  %v798 = vld [vmem:[#allocation2 + $0x1d8] sm:$0xff]
  %v799 = vld [vmem:[#allocation2 + $0x1e0] sm:$0xff]
  %v800 = vld [vmem:[#allocation2 + $0x1e8] sm:$0xff]
  %v801 = vld [vmem:[#allocation2 + $0x1f0] sm:$0xff]
  %v802 = vld [vmem:[#allocation2 + $0x1f8] sm:$0xff]
  %v803 = vld [vmem:[#allocation2 + $0x200] sm:$0xff]
  %v804 = vld [vmem:[#allocation2 + $0x208] sm:$0xff]
  %v805 = vld [vmem:[#allocation2 + $0x210] sm:$0xff]
  %v806 = vld [vmem:[#allocation2 + $0x218] sm:$0xff]
  %v807 = vld [vmem:[#allocation2 + $0x220] sm:$0xff]
  %v808 = vld [vmem:[#allocation2 + $0x228] sm:$0xff]
  %v809 = vld [vmem:[#allocation2 + $0x230] sm:$0xff]
  %v810 = vld [vmem:[#allocation2 + $0x238] sm:$0xff]
  %v811 = vld [vmem:[#allocation2 + $0x240] sm:$0xff]
  %v812 = vld [vmem:[#allocation2 + $0x248] sm:$0xff]
  %v813 = vld [vmem:[#allocation2 + $0x250] sm:$0xff]
  %v814 = vld [vmem:[#allocation2 + $0x258] sm:$0xff]
  %v815 = vld [vmem:[#allocation2 + $0x260] sm:$0xff]
  %v816 = vld [vmem:[#allocation2 + $0x268] sm:$0xff]
  %v817 = vld [vmem:[#allocation2 + $0x270] sm:$0xff]
  %v818 = vld [vmem:[#allocation2 + $0x278] sm:$0xff]
  %v819 = vld [vmem:[#allocation2 + $0x280] sm:$0xff]
  %v820 = vld [vmem:[#allocation2 + $0x288] sm:$0xff]
  %v821 = vld [vmem:[#allocation2 + $0x290] sm:$0xff]
  %v822 = vld [vmem:[#allocation2 + $0x298] sm:$0xff]
  %v823 = vld [vmem:[#allocation2 + $0x2a0] sm:$0xff]
  %v824 = vld [vmem:[#allocation2 + $0x2a8] sm:$0xff]
  %v825 = vld [vmem:[#allocation2 + $0x2b0] sm:$0xff]
  %v826 = vld [vmem:[#allocation2 + $0x2b8] sm:$0xff]
  %v827 = vld [vmem:[#allocation2 + $0x2c0] sm:$0xff]
  %v828 = vld [vmem:[#allocation2 + $0x2c8] sm:$0xff]
  %v829 = vld [vmem:[#allocation2 + $0x2d0] sm:$0xff]
  %v830 = vld [vmem:[#allocation2 + $0x2d8] sm:$0xff]
  %v831 = vld [vmem:[#allocation2 + $0x2e0] sm:$0xff]
  %v832 = vld [vmem:[#allocation2 + $0x2e8] sm:$0xff]
  %v833 = vld [vmem:[#allocation2 + $0x2f0] sm:$0xff]
  %v834 = vld [vmem:[#allocation2 + $0x2f8] sm:$0xff]
  %v835 = vld [vmem:[#allocation2 + $0x300] sm:$0xff]
  %v836 = vld [vmem:[#allocation2 + $0x308] sm:$0xff]
  %v837 = vld [vmem:[#allocation2 + $0x310] sm:$0xff]
  %v838 = vld [vmem:[#allocation2 + $0x318] sm:$0xff]
  %v839 = vld [vmem:[#allocation2 + $0x320] sm:$0xff]
  %v840 = vld [vmem:[#allocation2 + $0x328] sm:$0xff]
  %v841 = vld [vmem:[#allocation2 + $0x330] sm:$0xff]
  %v842 = vld [vmem:[#allocation2 + $0x338] sm:$0xff]
  %v843 = vld [vmem:[#allocation2 + $0x340] sm:$0xff]
  %v844 = vld [vmem:[#allocation2 + $0x348] sm:$0xff]
  %v845 = vld [vmem:[#allocation2 + $0x350] sm:$0xff]
  %v846 = vld [vmem:[#allocation2 + $0x358] sm:$0xff]
  %v847 = vld [vmem:[%s3] sm:$0xff]
  %v848 = vld [vmem:[%s3 + $0x8] sm:$0x1]
  %v849 = vlaneseq
  %v850 = vshrl.u32 %v849, 7
  %v851 = vsub.s32 0, %v850
  %v852 = vrot.slane %v847, %v851
  %v853 = vmul.f32 %v739, %v852
  %v854 = vmul.f32 %v740, %v852
  %v855 = vmul.f32 %v742, %v852
  %v856 = vmul.f32 %v743, %v852
  %v857 = vmul.f32 %v745, %v852
  %v858 = vmul.f32 %v746, %v852
  %v859 = vmul.f32 %v748, %v852
  %v860 = vmul.f32 %v749, %v852
  %v861 = vmul.f32 %v751, %v852
  %v862 = vmul.f32 %v752, %v852
  %v863 = vmul.f32 %v754, %v852
  %v864 = vmul.f32 %v755, %v852
  %v865 = vmul.f32 %v757, %v852
  %v866 = vmul.f32 %v758, %v852
  %v867 = vmul.f32 %v760, %v852
  %v868 = vmul.f32 %v761, %v852
  %v869 = vmul.f32 %v763, %v852
  %v870 = vmul.f32 %v764, %v852
  %v871 = vmul.f32 %v766, %v852
  %v872 = vmul.f32 %v767, %v852
  %v873 = vmul.f32 %v769, %v852
  %v874 = vmul.f32 %v770, %v852
  %v875 = vmul.f32 %v772, %v852
  %v876 = vmul.f32 %v773, %v852
  %v877 = vmul.f32 %v775, %v852
  %v878 = vmul.f32 %v776, %v852
  %v879 = vmul.f32 %v778, %v852
  %v880 = vmul.f32 %v779, %v852
  %v881 = vmul.f32 %v781, %v852
  %v882 = vmul.f32 %v782, %v852
  %v883 = vmul.f32 %v784, %v852
  %v884 = vmul.f32 %v785, %v852
  %v885 = vmul.f32 %v793, %v852
  %v886 = vmul.f32 %v794, %v852
  %v887 = vmul.f32 %v796, %v852
  %v888 = vmul.f32 %v797, %v852
  %v889 = vmul.f32 %v799, %v852
  %v890 = vmul.f32 %v800, %v852
  %v891 = vmul.f32 %v802, %v852
  %v892 = vmul.f32 %v803, %v852
  %v893 = vmul.f32 %v805, %v852
  %v894 = vmul.f32 %v806, %v852
  %v895 = vmul.f32 %v808, %v852
  %v896 = vmul.f32 %v809, %v852
  %v897 = vmul.f32 %v811, %v852
  %v898 = vmul.f32 %v812, %v852
  %v899 = vmul.f32 %v814, %v852
  %v900 = vmul.f32 %v815, %v852
  %v901 = vmul.f32 %v817, %v852
  %v902 = vmul.f32 %v818, %v852
  %v903 = vmul.f32 %v820, %v852
  %v904 = vmul.f32 %v821, %v852
  %v905 = vmul.f32 %v823, %v852
  %v906 = vmul.f32 %v824, %v852
  %v907 = vmul.f32 %v826, %v852
  %v908 = vmul.f32 %v827, %v852
  %v909 = vmul.f32 %v829, %v852
  %v910 = vmul.f32 %v830, %v852
  %v911 = vmul.f32 %v832, %v852
  %v912 = vmul.f32 %v833, %v852
  %v913 = vmul.f32 %v835, %v852
  %v914 = vmul.f32 %v836, %v852
  %v915 = vmul.f32 %v838, %v852
  %v916 = vmul.f32 %v839, %v852
  %v917 = vlaneseq
  %v918 = vshrl.u32 %v917, 7
  %v919 = vsub.s32 1, %v918
  %v920 = vrot.slane %v847, %v919
  %v921 = vmul.f32 %v739, %v920
  %v922 = vmul.f32 %v740, %v920
  %v923 = vmul.f32 %v741, %v920
  %v924 = vmul.f32 %v742, %v920
  %v925 = vmul.f32 %v743, %v920
  %v926 = vmul.f32 %v744, %v920
  %v927 = vmul.f32 %v745, %v920
  %v928 = vmul.f32 %v746, %v920
  %v929 = vmul.f32 %v747, %v920
  %v930 = vmul.f32 %v748, %v920
  %v931 = vmul.f32 %v749, %v920
  %v932 = vmul.f32 %v750, %v920
  %v933 = vmul.f32 %v751, %v920
  %v934 = vmul.f32 %v752, %v920
  %v935 = vmul.f32 %v753, %v920
  %v936 = vmul.f32 %v754, %v920
  %v937 = vmul.f32 %v755, %v920
  %v938 = vmul.f32 %v756, %v920
  %v939 = vmul.f32 %v757, %v920
  %v940 = vmul.f32 %v758, %v920
  %v941 = vmul.f32 %v759, %v920
  %v942 = vmul.f32 %v760, %v920
  %v943 = vmul.f32 %v761, %v920
  %v944 = vmul.f32 %v762, %v920
  %v945 = vmul.f32 %v763, %v920
  %v946 = vmul.f32 %v764, %v920
  %v947 = vmul.f32 %v765, %v920
  %v948 = vmul.f32 %v766, %v920
  %v949 = vmul.f32 %v767, %v920
  %v950 = vmul.f32 %v768, %v920
  %v951 = vmul.f32 %v769, %v920
  %v952 = vmul.f32 %v770, %v920
  %v953 = vmul.f32 %v771, %v920
  %v954 = vmul.f32 %v772, %v920
  %v955 = vmul.f32 %v773, %v920
  %v956 = vmul.f32 %v774, %v920
  %v957 = vmul.f32 %v775, %v920
  %v958 = vmul.f32 %v776, %v920
  %v959 = vmul.f32 %v777, %v920
  %v960 = vmul.f32 %v778, %v920
  %v961 = vmul.f32 %v779, %v920
  %v962 = vmul.f32 %v780, %v920
  %v963 = vmul.f32 %v781, %v920
  %v964 = vmul.f32 %v782, %v920
  %v965 = vmul.f32 %v783, %v920
  %v966 = vmul.f32 %v784, %v920
  %v967 = vmul.f32 %v785, %v920
  %v968 = vmul.f32 %v786, %v920
  %v969 = vmul.f32 %v793, %v920
  %v970 = vmul.f32 %v794, %v920
  %v971 = vmul.f32 %v795, %v920
  %v972 = vmul.f32 %v796, %v920
  %v973 = vmul.f32 %v797, %v920
  %v974 = vmul.f32 %v798, %v920
  %v975 = vmul.f32 %v799, %v920
  %v976 = vmul.f32 %v800, %v920
  %v977 = vmul.f32 %v801, %v920
  %v978 = vmul.f32 %v802, %v920
  %v979 = vmul.f32 %v803, %v920
  %v980 = vmul.f32 %v804, %v920
  %v981 = vmul.f32 %v805, %v920
  %v982 = vmul.f32 %v806, %v920
  %v983 = vmul.f32 %v807, %v920
  %v984 = vmul.f32 %v808, %v920
  %v985 = vmul.f32 %v809, %v920
  %v986 = vmul.f32 %v810, %v920
  %v987 = vmul.f32 %v811, %v920
  %v988 = vmul.f32 %v812, %v920
  %v989 = vmul.f32 %v813, %v920
  %v990 = vmul.f32 %v814, %v920
  %v991 = vmul.f32 %v815, %v920
  %v992 = vmul.f32 %v816, %v920
  %v993 = vmul.f32 %v817, %v920
  %v994 = vmul.f32 %v818, %v920
  %v995 = vmul.f32 %v819, %v920
  %v996 = vmul.f32 %v820, %v920
  %v997 = vmul.f32 %v821, %v920
  %v998 = vmul.f32 %v822, %v920
  %v999 = vmul.f32 %v823, %v920
  %v1000 = vmul.f32 %v824, %v920
  %v1001 = vmul.f32 %v825, %v920
  %v1002 = vmul.f32 %v826, %v920
  %v1003 = vmul.f32 %v827, %v920
  %v1004 = vmul.f32 %v828, %v920
  %v1005 = vmul.f32 %v829, %v920
  %v1006 = vmul.f32 %v830, %v920
  %v1007 = vmul.f32 %v831, %v920
  %v1008 = vmul.f32 %v832, %v920
  %v1009 = vmul.f32 %v833, %v920
  %v1010 = vmul.f32 %v834, %v920
  %v1011 = vmul.f32 %v835, %v920
  %v1012 = vmul.f32 %v836, %v920
  %v1013 = vmul.f32 %v837, %v920
  %v1014 = vmul.f32 %v838, %v920
  %v1015 = vmul.f32 %v839, %v920
  %v1016 = vmul.f32 %v840, %v920
  %vm1113 = vcmask 1046528
  %v1114 = vrot.slane %v921, 1
  %v1115 = vrot.slane %v922, 1
  %v1116 = vsel %vm1113, %v1114, %v1115
  %v1117 = vrot.slane %v923, 1
  %v1118 = vsel %vm1113, %v1115, %v1117
  %v1119 = vrot.slane %v924, 1
  %v1120 = vrot.slane %v925, 1
  %v1121 = vsel %vm1113, %v1119, %v1120
  %v1122 = vrot.slane %v926, 1
  %v1123 = vsel %vm1113, %v1120, %v1122
  %v1124 = vrot.slane %v927, 1
  %v1125 = vrot.slane %v928, 1
  %v1126 = vsel %vm1113, %v1124, %v1125
  %v1127 = vrot.slane %v929, 1
  %v1128 = vsel %vm1113, %v1125, %v1127
  %v1129 = vrot.slane %v930, 1
  %v1130 = vrot.slane %v931, 1
  %v1131 = vsel %vm1113, %v1129, %v1130
  %v1132 = vrot.slane %v932, 1
  %v1133 = vsel %vm1113, %v1130, %v1132
  %v1134 = vrot.slane %v933, 1
  %v1135 = vrot.slane %v934, 1
  %v1136 = vsel %vm1113, %v1134, %v1135
  %v1137 = vrot.slane %v935, 1
  %v1138 = vsel %vm1113, %v1135, %v1137
  %v1139 = vrot.slane %v936, 1
  %v1140 = vrot.slane %v937, 1
  %v1141 = vsel %vm1113, %v1139, %v1140
  %v1142 = vrot.slane %v938, 1
  %v1143 = vsel %vm1113, %v1140, %v1142
  %v1144 = vrot.slane %v939, 1
  %v1145 = vrot.slane %v940, 1
  %v1146 = vsel %vm1113, %v1144, %v1145
  %v1147 = vrot.slane %v941, 1
  %v1148 = vsel %vm1113, %v1145, %v1147
  %v1149 = vrot.slane %v942, 1
  %v1150 = vrot.slane %v943, 1
  %v1151 = vsel %vm1113, %v1149, %v1150
  %v1152 = vrot.slane %v944, 1
  %v1153 = vsel %vm1113, %v1150, %v1152
  %v1154 = vrot.slane %v945, 1
  %v1155 = vrot.slane %v946, 1
  %v1156 = vsel %vm1113, %v1154, %v1155
  %v1157 = vrot.slane %v947, 1
  %v1158 = vsel %vm1113, %v1155, %v1157
  %v1159 = vrot.slane %v948, 1
  %v1160 = vrot.slane %v949, 1
  %v1161 = vsel %vm1113, %v1159, %v1160
  %v1162 = vrot.slane %v950, 1
  %v1163 = vsel %vm1113, %v1160, %v1162
  %v1164 = vrot.slane %v951, 1
  %v1165 = vrot.slane %v952, 1
  %v1166 = vsel %vm1113, %v1164, %v1165
  %v1167 = vrot.slane %v953, 1
  %v1168 = vsel %vm1113, %v1165, %v1167
  %v1169 = vrot.slane %v954, 1
  %v1170 = vrot.slane %v955, 1
  %v1171 = vsel %vm1113, %v1169, %v1170
  %v1172 = vrot.slane %v956, 1
  %v1173 = vsel %vm1113, %v1170, %v1172
  %v1174 = vrot.slane %v957, 1
  %v1175 = vrot.slane %v958, 1
  %v1176 = vsel %vm1113, %v1174, %v1175
  %v1177 = vrot.slane %v959, 1
  %v1178 = vsel %vm1113, %v1175, %v1177
  %v1179 = vrot.slane %v960, 1
  %v1180 = vrot.slane %v961, 1
  %v1181 = vsel %vm1113, %v1179, %v1180
  %v1182 = vrot.slane %v962, 1
  %v1183 = vsel %vm1113, %v1180, %v1182
  %v1184 = vrot.slane %v963, 1
  %v1185 = vrot.slane %v964, 1
  %v1186 = vsel %vm1113, %v1184, %v1185
  %v1187 = vrot.slane %v965, 1
  %v1188 = vsel %vm1113, %v1185, %v1187
  %v1189 = vrot.slane %v966, 1
  %v1190 = vrot.slane %v967, 1
  %v1191 = vsel %vm1113, %v1189, %v1190
  %v1192 = vrot.slane %v968, 1
  %v1193 = vsel %vm1113, %v1190, %v1192
  %v1194 = vrot.slane %v969, 1
  %v1195 = vrot.slane %v970, 1
  %v1196 = vsel %vm1113, %v1194, %v1195
  %v1197 = vrot.slane %v971, 1
  %v1198 = vsel %vm1113, %v1195, %v1197
  %v1199 = vrot.slane %v972, 1
  %v1200 = vrot.slane %v973, 1
  %v1201 = vsel %vm1113, %v1199, %v1200
  %v1202 = vrot.slane %v974, 1
  %v1203 = vsel %vm1113, %v1200, %v1202
  %v1204 = vrot.slane %v975, 1
  %v1205 = vrot.slane %v976, 1
  %v1206 = vsel %vm1113, %v1204, %v1205
  %v1207 = vrot.slane %v977, 1
  %v1208 = vsel %vm1113, %v1205, %v1207
  %v1209 = vrot.slane %v978, 1
  %v1210 = vrot.slane %v979, 1
  %v1211 = vsel %vm1113, %v1209, %v1210
  %v1212 = vrot.slane %v980, 1
  %v1213 = vsel %vm1113, %v1210, %v1212
  %v1214 = vrot.slane %v981, 1
  %v1215 = vrot.slane %v982, 1
  %v1216 = vsel %vm1113, %v1214, %v1215
  %v1217 = vrot.slane %v983, 1
  %v1218 = vsel %vm1113, %v1215, %v1217
  %v1219 = vrot.slane %v984, 1
  %v1220 = vrot.slane %v985, 1
  %v1221 = vsel %vm1113, %v1219, %v1220
  %v1222 = vrot.slane %v986, 1
  %v1223 = vsel %vm1113, %v1220, %v1222
  %v1224 = vrot.slane %v987, 1
  %v1225 = vrot.slane %v988, 1
  %v1226 = vsel %vm1113, %v1224, %v1225
  %v1227 = vrot.slane %v989, 1
  %v1228 = vsel %vm1113, %v1225, %v1227
  %v1229 = vrot.slane %v990, 1
  %v1230 = vrot.slane %v991, 1
  %v1231 = vsel %vm1113, %v1229, %v1230
  %v1232 = vrot.slane %v992, 1
  %v1233 = vsel %vm1113, %v1230, %v1232
  %v1234 = vrot.slane %v993, 1
  %v1235 = vrot.slane %v994, 1
  %v1236 = vsel %vm1113, %v1234, %v1235
  %v1237 = vrot.slane %v995, 1
  %v1238 = vsel %vm1113, %v1235, %v1237
  %v1239 = vrot.slane %v996, 1
  %v1240 = vrot.slane %v997, 1
  %v1241 = vsel %vm1113, %v1239, %v1240
  %v1242 = vrot.slane %v998, 1
  %v1243 = vsel %vm1113, %v1240, %v1242
  %v1244 = vrot.slane %v999, 1
  %v1245 = vrot.slane %v1000, 1
  %v1246 = vsel %vm1113, %v1244, %v1245
  %v1247 = vrot.slane %v1001, 1
  %v1248 = vsel %vm1113, %v1245, %v1247
  %v1249 = vrot.slane %v1002, 1
  %v1250 = vrot.slane %v1003, 1
  %v1251 = vsel %vm1113, %v1249, %v1250
  %v1252 = vrot.slane %v1004, 1
  %v1253 = vsel %vm1113, %v1250, %v1252
  %v1254 = vrot.slane %v1005, 1
  %v1255 = vrot.slane %v1006, 1
  %v1256 = vsel %vm1113, %v1254, %v1255
  %v1257 = vrot.slane %v1007, 1
  %v1258 = vsel %vm1113, %v1255, %v1257
  %v1259 = vrot.slane %v1008, 1
  %v1260 = vrot.slane %v1009, 1
  %v1261 = vsel %vm1113, %v1259, %v1260
  %v1262 = vrot.slane %v1010, 1
  %v1263 = vsel %vm1113, %v1260, %v1262
  %v1264 = vrot.slane %v1011, 1
  %v1265 = vrot.slane %v1012, 1
  %v1266 = vsel %vm1113, %v1264, %v1265
  %v1267 = vrot.slane %v1013, 1
  %v1268 = vsel %vm1113, %v1265, %v1267
  %v1269 = vrot.slane %v1014, 1
  %v1270 = vrot.slane %v1015, 1
  %v1271 = vsel %vm1113, %v1269, %v1270
  %v1272 = vrot.slane %v1016, 1
  %v1273 = vsel %vm1113, %v1270, %v1272
  %v1338 = vadd.f32 %v853, %v1116
  %v1339 = vadd.f32 %v854, %v1118
  %v1340 = vadd.f32 %v855, %v1121
  %v1341 = vadd.f32 %v856, %v1123
  %v1342 = vadd.f32 %v857, %v1126
  %v1343 = vadd.f32 %v858, %v1128
  %v1344 = vadd.f32 %v859, %v1131
  %v1345 = vadd.f32 %v860, %v1133
  %v1346 = vadd.f32 %v861, %v1136
  %v1347 = vadd.f32 %v862, %v1138
  %v1348 = vadd.f32 %v863, %v1141
  %v1349 = vadd.f32 %v864, %v1143
  %v1350 = vadd.f32 %v865, %v1146
  %v1351 = vadd.f32 %v866, %v1148
  %v1352 = vadd.f32 %v867, %v1151
  %v1353 = vadd.f32 %v868, %v1153
  %v1354 = vadd.f32 %v869, %v1156
  %v1355 = vadd.f32 %v870, %v1158
  %v1356 = vadd.f32 %v871, %v1161
  %v1357 = vadd.f32 %v872, %v1163
  %v1358 = vadd.f32 %v873, %v1166
  %v1359 = vadd.f32 %v874, %v1168
  %v1360 = vadd.f32 %v875, %v1171
  %v1361 = vadd.f32 %v876, %v1173
  %v1362 = vadd.f32 %v877, %v1176
  %v1363 = vadd.f32 %v878, %v1178
  %v1364 = vadd.f32 %v879, %v1181
  %v1365 = vadd.f32 %v880, %v1183
  %v1366 = vadd.f32 %v881, %v1186
  %v1367 = vadd.f32 %v882, %v1188
  %v1368 = vadd.f32 %v883, %v1191
  %v1369 = vadd.f32 %v884, %v1193
  %v1370 = vadd.f32 %v885, %v1196
  %v1371 = vadd.f32 %v886, %v1198
  %v1372 = vadd.f32 %v887, %v1201
  %v1373 = vadd.f32 %v888, %v1203
  %v1374 = vadd.f32 %v889, %v1206
  %v1375 = vadd.f32 %v890, %v1208
  %v1376 = vadd.f32 %v891, %v1211
  %v1377 = vadd.f32 %v892, %v1213
  %v1378 = vadd.f32 %v893, %v1216
  %v1379 = vadd.f32 %v894, %v1218
  %v1380 = vadd.f32 %v895, %v1221
  %v1381 = vadd.f32 %v896, %v1223
  %v1382 = vadd.f32 %v897, %v1226
  %v1383 = vadd.f32 %v898, %v1228
  %v1384 = vadd.f32 %v899, %v1231
  %v1385 = vadd.f32 %v900, %v1233
  %v1386 = vadd.f32 %v901, %v1236
  %v1387 = vadd.f32 %v902, %v1238
  %v1388 = vadd.f32 %v903, %v1241
  %v1389 = vadd.f32 %v904, %v1243
  %v1390 = vadd.f32 %v905, %v1246
  %v1391 = vadd.f32 %v906, %v1248
  %v1392 = vadd.f32 %v907, %v1251
  %v1393 = vadd.f32 %v908, %v1253
  %v1394 = vadd.f32 %v909, %v1256
  %v1395 = vadd.f32 %v910, %v1258
  %v1396 = vadd.f32 %v911, %v1261
  %v1397 = vadd.f32 %v912, %v1263
  %v1398 = vadd.f32 %v913, %v1266
  %v1399 = vadd.f32 %v914, %v1268
  %v1400 = vadd.f32 %v915, %v1271
  %v1401 = vadd.f32 %v916, %v1273
  %v1402 = vlaneseq
  %v1403 = vshrl.u32 %v1402, 7
  %v1404 = vsub.s32 2, %v1403
  %v1405 = vrot.slane %v847, %v1404
  %v1406 = vmul.f32 %v739, %v1405
  %v1407 = vmul.f32 %v740, %v1405
  %v1408 = vmul.f32 %v741, %v1405
  %v1409 = vmul.f32 %v742, %v1405
  %v1410 = vmul.f32 %v743, %v1405
  %v1411 = vmul.f32 %v744, %v1405
  %v1412 = vmul.f32 %v745, %v1405
  %v1413 = vmul.f32 %v746, %v1405
  %v1414 = vmul.f32 %v747, %v1405
  %v1415 = vmul.f32 %v748, %v1405
  %v1416 = vmul.f32 %v749, %v1405
  %v1417 = vmul.f32 %v750, %v1405
  %v1418 = vmul.f32 %v751, %v1405
  %v1419 = vmul.f32 %v752, %v1405
  %v1420 = vmul.f32 %v753, %v1405
  %v1421 = vmul.f32 %v754, %v1405
  %v1422 = vmul.f32 %v755, %v1405
  %v1423 = vmul.f32 %v756, %v1405
  %v1424 = vmul.f32 %v757, %v1405
  %v1425 = vmul.f32 %v758, %v1405
  %v1426 = vmul.f32 %v759, %v1405
  %v1427 = vmul.f32 %v760, %v1405
  %v1428 = vmul.f32 %v761, %v1405
  %v1429 = vmul.f32 %v762, %v1405
  %v1430 = vmul.f32 %v763, %v1405
  %v1431 = vmul.f32 %v764, %v1405
  %v1432 = vmul.f32 %v765, %v1405
  %v1433 = vmul.f32 %v766, %v1405
  %v1434 = vmul.f32 %v767, %v1405
  %v1435 = vmul.f32 %v768, %v1405
  %v1436 = vmul.f32 %v769, %v1405
  %v1437 = vmul.f32 %v770, %v1405
  %v1438 = vmul.f32 %v771, %v1405
  %v1439 = vmul.f32 %v772, %v1405
  %v1440 = vmul.f32 %v773, %v1405
  %v1441 = vmul.f32 %v774, %v1405
  %v1442 = vmul.f32 %v775, %v1405
  %v1443 = vmul.f32 %v776, %v1405
  %v1444 = vmul.f32 %v777, %v1405
  %v1445 = vmul.f32 %v778, %v1405
  %v1446 = vmul.f32 %v779, %v1405
  %v1447 = vmul.f32 %v780, %v1405
  %v1448 = vmul.f32 %v781, %v1405
  %v1449 = vmul.f32 %v782, %v1405
  %v1450 = vmul.f32 %v783, %v1405
  %v1451 = vmul.f32 %v784, %v1405
  %v1452 = vmul.f32 %v785, %v1405
  %v1453 = vmul.f32 %v786, %v1405
  %v1454 = vmul.f32 %v793, %v1405
  %v1455 = vmul.f32 %v794, %v1405
  %v1456 = vmul.f32 %v795, %v1405
  %v1457 = vmul.f32 %v796, %v1405
  %v1458 = vmul.f32 %v797, %v1405
  %v1459 = vmul.f32 %v798, %v1405
  %v1460 = vmul.f32 %v799, %v1405
  %v1461 = vmul.f32 %v800, %v1405
  %v1462 = vmul.f32 %v801, %v1405
  %v1463 = vmul.f32 %v802, %v1405
  %v1464 = vmul.f32 %v803, %v1405
  %v1465 = vmul.f32 %v804, %v1405
  %v1466 = vmul.f32 %v805, %v1405
  %v1467 = vmul.f32 %v806, %v1405
  %v1468 = vmul.f32 %v807, %v1405
  %v1469 = vmul.f32 %v808, %v1405
  %v1470 = vmul.f32 %v809, %v1405
  %v1471 = vmul.f32 %v810, %v1405
  %v1472 = vmul.f32 %v811, %v1405
  %v1473 = vmul.f32 %v812, %v1405
  %v1474 = vmul.f32 %v813, %v1405
  %v1475 = vmul.f32 %v814, %v1405
  %v1476 = vmul.f32 %v815, %v1405
  %v1477 = vmul.f32 %v816, %v1405
  %v1478 = vmul.f32 %v817, %v1405
  %v1479 = vmul.f32 %v818, %v1405
  %v1480 = vmul.f32 %v819, %v1405
  %v1481 = vmul.f32 %v820, %v1405
  %v1482 = vmul.f32 %v821, %v1405
  %v1483 = vmul.f32 %v822, %v1405
  %v1484 = vmul.f32 %v823, %v1405
  %v1485 = vmul.f32 %v824, %v1405
  %v1486 = vmul.f32 %v825, %v1405
  %v1487 = vmul.f32 %v826, %v1405
  %v1488 = vmul.f32 %v827, %v1405
  %v1489 = vmul.f32 %v828, %v1405
  %v1490 = vmul.f32 %v829, %v1405
  %v1491 = vmul.f32 %v830, %v1405
  %v1492 = vmul.f32 %v831, %v1405
  %v1493 = vmul.f32 %v832, %v1405
  %v1494 = vmul.f32 %v833, %v1405
  %v1495 = vmul.f32 %v834, %v1405
  %v1496 = vmul.f32 %v835, %v1405
  %v1497 = vmul.f32 %v836, %v1405
  %v1498 = vmul.f32 %v837, %v1405
  %v1499 = vmul.f32 %v838, %v1405
  %v1500 = vmul.f32 %v839, %v1405
  %v1501 = vmul.f32 %v840, %v1405
  %vm1598 = vcmask 1045504
  %v1599 = vrot.slane %v1406, 2
  %v1600 = vrot.slane %v1407, 2
  %v1601 = vsel %vm1598, %v1599, %v1600
  %v1602 = vrot.slane %v1408, 2
  %v1603 = vsel %vm1598, %v1600, %v1602
  %v1604 = vrot.slane %v1409, 2
  %v1605 = vrot.slane %v1410, 2
  %v1606 = vsel %vm1598, %v1604, %v1605
  %v1607 = vrot.slane %v1411, 2
  %v1608 = vsel %vm1598, %v1605, %v1607
  %v1609 = vrot.slane %v1412, 2
  %v1610 = vrot.slane %v1413, 2
  %v1611 = vsel %vm1598, %v1609, %v1610
  %v1612 = vrot.slane %v1414, 2
  %v1613 = vsel %vm1598, %v1610, %v1612
  %v1614 = vrot.slane %v1415, 2
  %v1615 = vrot.slane %v1416, 2
  %v1616 = vsel %vm1598, %v1614, %v1615
  %v1617 = vrot.slane %v1417, 2
  %v1618 = vsel %vm1598, %v1615, %v1617
  %v1619 = vrot.slane %v1418, 2
  %v1620 = vrot.slane %v1419, 2
  %v1621 = vsel %vm1598, %v1619, %v1620
  %v1622 = vrot.slane %v1420, 2
  %v1623 = vsel %vm1598, %v1620, %v1622
  %v1624 = vrot.slane %v1421, 2
  %v1625 = vrot.slane %v1422, 2
  %v1626 = vsel %vm1598, %v1624, %v1625
  %v1627 = vrot.slane %v1423, 2
  %v1628 = vsel %vm1598, %v1625, %v1627
  %v1629 = vrot.slane %v1424, 2
  %v1630 = vrot.slane %v1425, 2
  %v1631 = vsel %vm1598, %v1629, %v1630
  %v1632 = vrot.slane %v1426, 2
  %v1633 = vsel %vm1598, %v1630, %v1632
  %v1634 = vrot.slane %v1427, 2
  %v1635 = vrot.slane %v1428, 2
  %v1636 = vsel %vm1598, %v1634, %v1635
  %v1637 = vrot.slane %v1429, 2
  %v1638 = vsel %vm1598, %v1635, %v1637
  %v1639 = vrot.slane %v1430, 2
  %v1640 = vrot.slane %v1431, 2
  %v1641 = vsel %vm1598, %v1639, %v1640
  %v1642 = vrot.slane %v1432, 2
  %v1643 = vsel %vm1598, %v1640, %v1642
  %v1644 = vrot.slane %v1433, 2
  %v1645 = vrot.slane %v1434, 2
  %v1646 = vsel %vm1598, %v1644, %v1645
  %v1647 = vrot.slane %v1435, 2
  %v1648 = vsel %vm1598, %v1645, %v1647
  %v1649 = vrot.slane %v1436, 2
  %v1650 = vrot.slane %v1437, 2
  %v1651 = vsel %vm1598, %v1649, %v1650
  %v1652 = vrot.slane %v1438, 2
  %v1653 = vsel %vm1598, %v1650, %v1652
  %v1654 = vrot.slane %v1439, 2
  %v1655 = vrot.slane %v1440, 2
  %v1656 = vsel %vm1598, %v1654, %v1655
  %v1657 = vrot.slane %v1441, 2
  %v1658 = vsel %vm1598, %v1655, %v1657
  %v1659 = vrot.slane %v1442, 2
  %v1660 = vrot.slane %v1443, 2
  %v1661 = vsel %vm1598, %v1659, %v1660
  %v1662 = vrot.slane %v1444, 2
  %v1663 = vsel %vm1598, %v1660, %v1662
  %v1664 = vrot.slane %v1445, 2
  %v1665 = vrot.slane %v1446, 2
  %v1666 = vsel %vm1598, %v1664, %v1665
  %v1667 = vrot.slane %v1447, 2
  %v1668 = vsel %vm1598, %v1665, %v1667
  %v1669 = vrot.slane %v1448, 2
  %v1670 = vrot.slane %v1449, 2
  %v1671 = vsel %vm1598, %v1669, %v1670
  %v1672 = vrot.slane %v1450, 2
  %v1673 = vsel %vm1598, %v1670, %v1672
  %v1674 = vrot.slane %v1451, 2
  %v1675 = vrot.slane %v1452, 2
  %v1676 = vsel %vm1598, %v1674, %v1675
  %v1677 = vrot.slane %v1453, 2
  %v1678 = vsel %vm1598, %v1675, %v1677
  %v1679 = vrot.slane %v1454, 2
  %v1680 = vrot.slane %v1455, 2
  %v1681 = vsel %vm1598, %v1679, %v1680
  %v1682 = vrot.slane %v1456, 2
  %v1683 = vsel %vm1598, %v1680, %v1682
  %v1684 = vrot.slane %v1457, 2
  %v1685 = vrot.slane %v1458, 2
  %v1686 = vsel %vm1598, %v1684, %v1685
  %v1687 = vrot.slane %v1459, 2
  %v1688 = vsel %vm1598, %v1685, %v1687
  %v1689 = vrot.slane %v1460, 2
  %v1690 = vrot.slane %v1461, 2
  %v1691 = vsel %vm1598, %v1689, %v1690
  %v1692 = vrot.slane %v1462, 2
  %v1693 = vsel %vm1598, %v1690, %v1692
  %v1694 = vrot.slane %v1463, 2
  %v1695 = vrot.slane %v1464, 2
  %v1696 = vsel %vm1598, %v1694, %v1695
  %v1697 = vrot.slane %v1465, 2
  %v1698 = vsel %vm1598, %v1695, %v1697
  %v1699 = vrot.slane %v1466, 2
  %v1700 = vrot.slane %v1467, 2
  %v1701 = vsel %vm1598, %v1699, %v1700
  %v1702 = vrot.slane %v1468, 2
  %v1703 = vsel %vm1598, %v1700, %v1702
  %v1704 = vrot.slane %v1469, 2
  %v1705 = vrot.slane %v1470, 2
  %v1706 = vsel %vm1598, %v1704, %v1705
  %v1707 = vrot.slane %v1471, 2
  %v1708 = vsel %vm1598, %v1705, %v1707
  %v1709 = vrot.slane %v1472, 2
  %v1710 = vrot.slane %v1473, 2
  %v1711 = vsel %vm1598, %v1709, %v1710
  %v1712 = vrot.slane %v1474, 2
  %v1713 = vsel %vm1598, %v1710, %v1712
  %v1714 = vrot.slane %v1475, 2
  %v1715 = vrot.slane %v1476, 2
  %v1716 = vsel %vm1598, %v1714, %v1715
  %v1717 = vrot.slane %v1477, 2
  %v1718 = vsel %vm1598, %v1715, %v1717
  %v1719 = vrot.slane %v1478, 2
  %v1720 = vrot.slane %v1479, 2
  %v1721 = vsel %vm1598, %v1719, %v1720
  %v1722 = vrot.slane %v1480, 2
  %v1723 = vsel %vm1598, %v1720, %v1722
  %v1724 = vrot.slane %v1481, 2
  %v1725 = vrot.slane %v1482, 2
  %v1726 = vsel %vm1598, %v1724, %v1725
  %v1727 = vrot.slane %v1483, 2
  %v1728 = vsel %vm1598, %v1725, %v1727
  %v1729 = vrot.slane %v1484, 2
  %v1730 = vrot.slane %v1485, 2
  %v1731 = vsel %vm1598, %v1729, %v1730
  %v1732 = vrot.slane %v1486, 2
  %v1733 = vsel %vm1598, %v1730, %v1732
  %v1734 = vrot.slane %v1487, 2
  %v1735 = vrot.slane %v1488, 2
  %v1736 = vsel %vm1598, %v1734, %v1735
  %v1737 = vrot.slane %v1489, 2
  %v1738 = vsel %vm1598, %v1735, %v1737
  %v1739 = vrot.slane %v1490, 2
  %v1740 = vrot.slane %v1491, 2
  %v1741 = vsel %vm1598, %v1739, %v1740
  %v1742 = vrot.slane %v1492, 2
  %v1743 = vsel %vm1598, %v1740, %v1742
  %v1744 = vrot.slane %v1493, 2
  %v1745 = vrot.slane %v1494, 2
  %v1746 = vsel %vm1598, %v1744, %v1745
  %v1747 = vrot.slane %v1495, 2
  %v1748 = vsel %vm1598, %v1745, %v1747
  %v1749 = vrot.slane %v1496, 2
  %v1750 = vrot.slane %v1497, 2
  %v1751 = vsel %vm1598, %v1749, %v1750
  %v1752 = vrot.slane %v1498, 2
  %v1753 = vsel %vm1598, %v1750, %v1752
  %v1754 = vrot.slane %v1499, 2
  %v1755 = vrot.slane %v1500, 2
  %v1756 = vsel %vm1598, %v1754, %v1755
  %v1757 = vrot.slane %v1501, 2
  %v1758 = vsel %vm1598, %v1755, %v1757
  %v1823 = vadd.f32 %v1338, %v1601
  %v1824 = vadd.f32 %v1339, %v1603
  %v1825 = vadd.f32 %v1340, %v1606
  %v1826 = vadd.f32 %v1341, %v1608
  %v1827 = vadd.f32 %v1342, %v1611
  %v1828 = vadd.f32 %v1343, %v1613
  %v1829 = vadd.f32 %v1344, %v1616
  %v1830 = vadd.f32 %v1345, %v1618
  %v1831 = vadd.f32 %v1346, %v1621
  %v1832 = vadd.f32 %v1347, %v1623
  %v1833 = vadd.f32 %v1348, %v1626
  %v1834 = vadd.f32 %v1349, %v1628
  %v1835 = vadd.f32 %v1350, %v1631
  %v1836 = vadd.f32 %v1351, %v1633
  %v1837 = vadd.f32 %v1352, %v1636
  %v1838 = vadd.f32 %v1353, %v1638
  %v1839 = vadd.f32 %v1354, %v1641
  %v1840 = vadd.f32 %v1355, %v1643
  %v1841 = vadd.f32 %v1356, %v1646
  %v1842 = vadd.f32 %v1357, %v1648
  %v1843 = vadd.f32 %v1358, %v1651
  %v1844 = vadd.f32 %v1359, %v1653
  %v1845 = vadd.f32 %v1360, %v1656
  %v1846 = vadd.f32 %v1361, %v1658
  %v1847 = vadd.f32 %v1362, %v1661
  %v1848 = vadd.f32 %v1363, %v1663
  %v1849 = vadd.f32 %v1364, %v1666
  %v1850 = vadd.f32 %v1365, %v1668
  %v1851 = vadd.f32 %v1366, %v1671
  %v1852 = vadd.f32 %v1367, %v1673
  %v1853 = vadd.f32 %v1368, %v1676
  %v1854 = vadd.f32 %v1369, %v1678
  %v1855 = vadd.f32 %v1370, %v1681
  %v1856 = vadd.f32 %v1371, %v1683
  %v1857 = vadd.f32 %v1372, %v1686
  %v1858 = vadd.f32 %v1373, %v1688
  %v1859 = vadd.f32 %v1374, %v1691
  %v1860 = vadd.f32 %v1375, %v1693
  %v1861 = vadd.f32 %v1376, %v1696
  %v1862 = vadd.f32 %v1377, %v1698
  %v1863 = vadd.f32 %v1378, %v1701
  %v1864 = vadd.f32 %v1379, %v1703
  %v1865 = vadd.f32 %v1380, %v1706
  %v1866 = vadd.f32 %v1381, %v1708
  %v1867 = vadd.f32 %v1382, %v1711
  %v1868 = vadd.f32 %v1383, %v1713
  %v1869 = vadd.f32 %v1384, %v1716
  %v1870 = vadd.f32 %v1385, %v1718
  %v1871 = vadd.f32 %v1386, %v1721
  %v1872 = vadd.f32 %v1387, %v1723
  %v1873 = vadd.f32 %v1388, %v1726
  %v1874 = vadd.f32 %v1389, %v1728
  %v1875 = vadd.f32 %v1390, %v1731
  %v1876 = vadd.f32 %v1391, %v1733
  %v1877 = vadd.f32 %v1392, %v1736
  %v1878 = vadd.f32 %v1393, %v1738
  %v1879 = vadd.f32 %v1394, %v1741
  %v1880 = vadd.f32 %v1395, %v1743
  %v1881 = vadd.f32 %v1396, %v1746
  %v1882 = vadd.f32 %v1397, %v1748
  %v1883 = vadd.f32 %v1398, %v1751
  %v1884 = vadd.f32 %v1399, %v1753
  %v1885 = vadd.f32 %v1400, %v1756
  %v1886 = vadd.f32 %v1401, %v1758
  %v1887 = vlaneseq
  %v1888 = vshrl.u32 %v1887, 7
  %v1889 = vsub.s32 3, %v1888
  %v1890 = vrot.slane %v847, %v1889
  %v1891 = vmul.f32 %v742, %v1890
  %v1892 = vmul.f32 %v743, %v1890
  %v1893 = vmul.f32 %v745, %v1890
  %v1894 = vmul.f32 %v746, %v1890
  %v1895 = vmul.f32 %v748, %v1890
  %v1896 = vmul.f32 %v749, %v1890
  %v1897 = vmul.f32 %v751, %v1890
  %v1898 = vmul.f32 %v752, %v1890
  %v1899 = vmul.f32 %v754, %v1890
  %v1900 = vmul.f32 %v755, %v1890
  %v1901 = vmul.f32 %v757, %v1890
  %v1902 = vmul.f32 %v758, %v1890
  %v1903 = vmul.f32 %v760, %v1890
  %v1904 = vmul.f32 %v761, %v1890
  %v1905 = vmul.f32 %v763, %v1890
  %v1906 = vmul.f32 %v764, %v1890
  %v1907 = vmul.f32 %v766, %v1890
  %v1908 = vmul.f32 %v767, %v1890
  %v1909 = vmul.f32 %v769, %v1890
  %v1910 = vmul.f32 %v770, %v1890
  %v1911 = vmul.f32 %v772, %v1890
  %v1912 = vmul.f32 %v773, %v1890
  %v1913 = vmul.f32 %v775, %v1890
  %v1914 = vmul.f32 %v776, %v1890
  %v1915 = vmul.f32 %v778, %v1890
  %v1916 = vmul.f32 %v779, %v1890
  %v1917 = vmul.f32 %v781, %v1890
  %v1918 = vmul.f32 %v782, %v1890
  %v1919 = vmul.f32 %v784, %v1890
  %v1920 = vmul.f32 %v785, %v1890
  %v1921 = vmul.f32 %v787, %v1890
  %v1922 = vmul.f32 %v788, %v1890
  %v1923 = vmul.f32 %v796, %v1890
  %v1924 = vmul.f32 %v797, %v1890
  %v1925 = vmul.f32 %v799, %v1890
  %v1926 = vmul.f32 %v800, %v1890
  %v1927 = vmul.f32 %v802, %v1890
  %v1928 = vmul.f32 %v803, %v1890
  %v1929 = vmul.f32 %v805, %v1890
  %v1930 = vmul.f32 %v806, %v1890
  %v1931 = vmul.f32 %v808, %v1890
  %v1932 = vmul.f32 %v809, %v1890
  %v1933 = vmul.f32 %v811, %v1890
  %v1934 = vmul.f32 %v812, %v1890
  %v1935 = vmul.f32 %v814, %v1890
  %v1936 = vmul.f32 %v815, %v1890
  %v1937 = vmul.f32 %v817, %v1890
  %v1938 = vmul.f32 %v818, %v1890
  %v1939 = vmul.f32 %v820, %v1890
  %v1940 = vmul.f32 %v821, %v1890
  %v1941 = vmul.f32 %v823, %v1890
  %v1942 = vmul.f32 %v824, %v1890
  %v1943 = vmul.f32 %v826, %v1890
  %v1944 = vmul.f32 %v827, %v1890
  %v1945 = vmul.f32 %v829, %v1890
  %v1946 = vmul.f32 %v830, %v1890
  %v1947 = vmul.f32 %v832, %v1890
  %v1948 = vmul.f32 %v833, %v1890
  %v1949 = vmul.f32 %v835, %v1890
  %v1950 = vmul.f32 %v836, %v1890
  %v1951 = vmul.f32 %v838, %v1890
  %v1952 = vmul.f32 %v839, %v1890
  %v1953 = vmul.f32 %v841, %v1890
  %v1954 = vmul.f32 %v842, %v1890
  %v1955 = vadd.f32 %v1823, %v1891
  %v1956 = vadd.f32 %v1824, %v1892
  %v1957 = vadd.f32 %v1825, %v1893
  %v1958 = vadd.f32 %v1826, %v1894
  %v1959 = vadd.f32 %v1827, %v1895
  %v1960 = vadd.f32 %v1828, %v1896
  %v1961 = vadd.f32 %v1829, %v1897
  %v1962 = vadd.f32 %v1830, %v1898
  %v1963 = vadd.f32 %v1831, %v1899
  %v1964 = vadd.f32 %v1832, %v1900
  %v1965 = vadd.f32 %v1833, %v1901
  %v1966 = vadd.f32 %v1834, %v1902
  %v1967 = vadd.f32 %v1835, %v1903
  %v1968 = vadd.f32 %v1836, %v1904
  %v1969 = vadd.f32 %v1837, %v1905
  %v1970 = vadd.f32 %v1838, %v1906
  %v1971 = vadd.f32 %v1839, %v1907
  %v1972 = vadd.f32 %v1840, %v1908
  %v1973 = vadd.f32 %v1841, %v1909
  %v1974 = vadd.f32 %v1842, %v1910
  %v1975 = vadd.f32 %v1843, %v1911
  %v1976 = vadd.f32 %v1844, %v1912
  %v1977 = vadd.f32 %v1845, %v1913
  %v1978 = vadd.f32 %v1846, %v1914
  %v1979 = vadd.f32 %v1847, %v1915
  %v1980 = vadd.f32 %v1848, %v1916
  %v1981 = vadd.f32 %v1849, %v1917
  %v1982 = vadd.f32 %v1850, %v1918
  %v1983 = vadd.f32 %v1851, %v1919
  %v1984 = vadd.f32 %v1852, %v1920
  %v1985 = vadd.f32 %v1853, %v1921
  %v1986 = vadd.f32 %v1854, %v1922
  %v1987 = vadd.f32 %v1855, %v1923
  %v1988 = vadd.f32 %v1856, %v1924
  %v1989 = vadd.f32 %v1857, %v1925
  %v1990 = vadd.f32 %v1858, %v1926
  %v1991 = vadd.f32 %v1859, %v1927
  %v1992 = vadd.f32 %v1860, %v1928
  %v1993 = vadd.f32 %v1861, %v1929
  %v1994 = vadd.f32 %v1862, %v1930
  %v1995 = vadd.f32 %v1863, %v1931
  %v1996 = vadd.f32 %v1864, %v1932
  %v1997 = vadd.f32 %v1865, %v1933
  %v1998 = vadd.f32 %v1866, %v1934
  %v1999 = vadd.f32 %v1867, %v1935
  %v2000 = vadd.f32 %v1868, %v1936
  %v2001 = vadd.f32 %v1869, %v1937
  %v2002 = vadd.f32 %v1870, %v1938
  %v2003 = vadd.f32 %v1871, %v1939
  %v2004 = vadd.f32 %v1872, %v1940
  %v2005 = vadd.f32 %v1873, %v1941
  %v2006 = vadd.f32 %v1874, %v1942
  %v2007 = vadd.f32 %v1875, %v1943
  %v2008 = vadd.f32 %v1876, %v1944
  %v2009 = vadd.f32 %v1877, %v1945
  %v2010 = vadd.f32 %v1878, %v1946
  %v2011 = vadd.f32 %v1879, %v1947
  %v2012 = vadd.f32 %v1880, %v1948
  %v2013 = vadd.f32 %v1881, %v1949
  %v2014 = vadd.f32 %v1882, %v1950
  %v2015 = vadd.f32 %v1883, %v1951
  %v2016 = vadd.f32 %v1884, %v1952
  %v2017 = vadd.f32 %v1885, %v1953
  %v2018 = vadd.f32 %v1886, %v1954
  %v2019 = vlaneseq
  %v2020 = vshrl.u32 %v2019, 7
  %v2021 = vsub.s32 4, %v2020
  %v2022 = vrot.slane %v847, %v2021
  %v2023 = vmul.f32 %v742, %v2022
  %v2024 = vmul.f32 %v743, %v2022
  %v2025 = vmul.f32 %v744, %v2022
  %v2026 = vmul.f32 %v745, %v2022
  %v2027 = vmul.f32 %v746, %v2022
  %v2028 = vmul.f32 %v747, %v2022
  %v2029 = vmul.f32 %v748, %v2022
  %v2030 = vmul.f32 %v749, %v2022
  %v2031 = vmul.f32 %v750, %v2022
  %v2032 = vmul.f32 %v751, %v2022
  %v2033 = vmul.f32 %v752, %v2022
  %v2034 = vmul.f32 %v753, %v2022
  %v2035 = vmul.f32 %v754, %v2022
  %v2036 = vmul.f32 %v755, %v2022
  %v2037 = vmul.f32 %v756, %v2022
  %v2038 = vmul.f32 %v757, %v2022
  %v2039 = vmul.f32 %v758, %v2022
  %v2040 = vmul.f32 %v759, %v2022
  %v2041 = vmul.f32 %v760, %v2022
  %v2042 = vmul.f32 %v761, %v2022
  %v2043 = vmul.f32 %v762, %v2022
  %v2044 = vmul.f32 %v763, %v2022
  %v2045 = vmul.f32 %v764, %v2022
  %v2046 = vmul.f32 %v765, %v2022
  %v2047 = vmul.f32 %v766, %v2022
  %v2048 = vmul.f32 %v767, %v2022
  %v2049 = vmul.f32 %v768, %v2022
  %v2050 = vmul.f32 %v769, %v2022
  %v2051 = vmul.f32 %v770, %v2022
  %v2052 = vmul.f32 %v771, %v2022
  %v2053 = vmul.f32 %v772, %v2022
  %v2054 = vmul.f32 %v773, %v2022
  %v2055 = vmul.f32 %v774, %v2022
  %v2056 = vmul.f32 %v775, %v2022
  %v2057 = vmul.f32 %v776, %v2022
  %v2058 = vmul.f32 %v777, %v2022
  %v2059 = vmul.f32 %v778, %v2022
  %v2060 = vmul.f32 %v779, %v2022
  %v2061 = vmul.f32 %v780, %v2022
  %v2062 = vmul.f32 %v781, %v2022
  %v2063 = vmul.f32 %v782, %v2022
  %v2064 = vmul.f32 %v783, %v2022
  %v2065 = vmul.f32 %v784, %v2022
  %v2066 = vmul.f32 %v785, %v2022
  %v2067 = vmul.f32 %v786, %v2022
  %v2068 = vmul.f32 %v787, %v2022
  %v2069 = vmul.f32 %v788, %v2022
  %v2070 = vmul.f32 %v789, %v2022
  %v2071 = vmul.f32 %v796, %v2022
  %v2072 = vmul.f32 %v797, %v2022
  %v2073 = vmul.f32 %v798, %v2022
  %v2074 = vmul.f32 %v799, %v2022
  %v2075 = vmul.f32 %v800, %v2022
  %v2076 = vmul.f32 %v801, %v2022
  %v2077 = vmul.f32 %v802, %v2022
  %v2078 = vmul.f32 %v803, %v2022
  %v2079 = vmul.f32 %v804, %v2022
  %v2080 = vmul.f32 %v805, %v2022
  %v2081 = vmul.f32 %v806, %v2022
  %v2082 = vmul.f32 %v807, %v2022
  %v2083 = vmul.f32 %v808, %v2022
  %v2084 = vmul.f32 %v809, %v2022
  %v2085 = vmul.f32 %v810, %v2022
  %v2086 = vmul.f32 %v811, %v2022
  %v2087 = vmul.f32 %v812, %v2022
  %v2088 = vmul.f32 %v813, %v2022
  %v2089 = vmul.f32 %v814, %v2022
  %v2090 = vmul.f32 %v815, %v2022
  %v2091 = vmul.f32 %v816, %v2022
  %v2092 = vmul.f32 %v817, %v2022
  %v2093 = vmul.f32 %v818, %v2022
  %v2094 = vmul.f32 %v819, %v2022
  %v2095 = vmul.f32 %v820, %v2022
  %v2096 = vmul.f32 %v821, %v2022
  %v2097 = vmul.f32 %v822, %v2022
  %v2098 = vmul.f32 %v823, %v2022
  %v2099 = vmul.f32 %v824, %v2022
  %v2100 = vmul.f32 %v825, %v2022
  %v2101 = vmul.f32 %v826, %v2022
  %v2102 = vmul.f32 %v827, %v2022
  %v2103 = vmul.f32 %v828, %v2022
  %v2104 = vmul.f32 %v829, %v2022
  %v2105 = vmul.f32 %v830, %v2022
  %v2106 = vmul.f32 %v831, %v2022
  %v2107 = vmul.f32 %v832, %v2022
  %v2108 = vmul.f32 %v833, %v2022
  %v2109 = vmul.f32 %v834, %v2022
  %v2110 = vmul.f32 %v835, %v2022
  %v2111 = vmul.f32 %v836, %v2022
  %v2112 = vmul.f32 %v837, %v2022
  %v2113 = vmul.f32 %v838, %v2022
  %v2114 = vmul.f32 %v839, %v2022
  %v2115 = vmul.f32 %v840, %v2022
  %v2116 = vmul.f32 %v841, %v2022
  %v2117 = vmul.f32 %v842, %v2022
  %v2118 = vmul.f32 %v843, %v2022
  %v2215 = vrot.slane %v2023, 1
  %v2216 = vrot.slane %v2024, 1
  %v2217 = vsel %vm1113, %v2215, %v2216
  %v2218 = vrot.slane %v2025, 1
  %v2219 = vsel %vm1113, %v2216, %v2218
  %v2220 = vrot.slane %v2026, 1
  %v2221 = vrot.slane %v2027, 1
  %v2222 = vsel %vm1113, %v2220, %v2221
  %v2223 = vrot.slane %v2028, 1
  %v2224 = vsel %vm1113, %v2221, %v2223
  %v2225 = vrot.slane %v2029, 1
  %v2226 = vrot.slane %v2030, 1
  %v2227 = vsel %vm1113, %v2225, %v2226
  %v2228 = vrot.slane %v2031, 1
  %v2229 = vsel %vm1113, %v2226, %v2228
  %v2230 = vrot.slane %v2032, 1
  %v2231 = vrot.slane %v2033, 1
  %v2232 = vsel %vm1113, %v2230, %v2231
  %v2233 = vrot.slane %v2034, 1
  %v2234 = vsel %vm1113, %v2231, %v2233
  %v2235 = vrot.slane %v2035, 1
  %v2236 = vrot.slane %v2036, 1
  %v2237 = vsel %vm1113, %v2235, %v2236
  %v2238 = vrot.slane %v2037, 1
  %v2239 = vsel %vm1113, %v2236, %v2238
  %v2240 = vrot.slane %v2038, 1
  %v2241 = vrot.slane %v2039, 1
  %v2242 = vsel %vm1113, %v2240, %v2241
  %v2243 = vrot.slane %v2040, 1
  %v2244 = vsel %vm1113, %v2241, %v2243
  %v2245 = vrot.slane %v2041, 1
  %v2246 = vrot.slane %v2042, 1
  %v2247 = vsel %vm1113, %v2245, %v2246
  %v2248 = vrot.slane %v2043, 1
  %v2249 = vsel %vm1113, %v2246, %v2248
  %v2250 = vrot.slane %v2044, 1
  %v2251 = vrot.slane %v2045, 1
  %v2252 = vsel %vm1113, %v2250, %v2251
  %v2253 = vrot.slane %v2046, 1
  %v2254 = vsel %vm1113, %v2251, %v2253
  %v2255 = vrot.slane %v2047, 1
  %v2256 = vrot.slane %v2048, 1
  %v2257 = vsel %vm1113, %v2255, %v2256
  %v2258 = vrot.slane %v2049, 1
  %v2259 = vsel %vm1113, %v2256, %v2258
  %v2260 = vrot.slane %v2050, 1
  %v2261 = vrot.slane %v2051, 1
  %v2262 = vsel %vm1113, %v2260, %v2261
  %v2263 = vrot.slane %v2052, 1
  %v2264 = vsel %vm1113, %v2261, %v2263
  %v2265 = vrot.slane %v2053, 1
  %v2266 = vrot.slane %v2054, 1
  %v2267 = vsel %vm1113, %v2265, %v2266
  %v2268 = vrot.slane %v2055, 1
  %v2269 = vsel %vm1113, %v2266, %v2268
  %v2270 = vrot.slane %v2056, 1
  %v2271 = vrot.slane %v2057, 1
  %v2272 = vsel %vm1113, %v2270, %v2271
  %v2273 = vrot.slane %v2058, 1
  %v2274 = vsel %vm1113, %v2271, %v2273
  %v2275 = vrot.slane %v2059, 1
  %v2276 = vrot.slane %v2060, 1
  %v2277 = vsel %vm1113, %v2275, %v2276
  %v2278 = vrot.slane %v2061, 1
  %v2279 = vsel %vm1113, %v2276, %v2278
  %v2280 = vrot.slane %v2062, 1
  %v2281 = vrot.slane %v2063, 1
  %v2282 = vsel %vm1113, %v2280, %v2281
  %v2283 = vrot.slane %v2064, 1
  %v2284 = vsel %vm1113, %v2281, %v2283
  %v2285 = vrot.slane %v2065, 1
  %v2286 = vrot.slane %v2066, 1
  %v2287 = vsel %vm1113, %v2285, %v2286
  %v2288 = vrot.slane %v2067, 1
  %v2289 = vsel %vm1113, %v2286, %v2288
  %v2290 = vrot.slane %v2068, 1
  %v2291 = vrot.slane %v2069, 1
  %v2292 = vsel %vm1113, %v2290, %v2291
  %v2293 = vrot.slane %v2070, 1
  %v2294 = vsel %vm1113, %v2291, %v2293
  %v2295 = vrot.slane %v2071, 1
  %v2296 = vrot.slane %v2072, 1
  %v2297 = vsel %vm1113, %v2295, %v2296
  %v2298 = vrot.slane %v2073, 1
  %v2299 = vsel %vm1113, %v2296, %v2298
  %v2300 = vrot.slane %v2074, 1
  %v2301 = vrot.slane %v2075, 1
  %v2302 = vsel %vm1113, %v2300, %v2301
  %v2303 = vrot.slane %v2076, 1
  %v2304 = vsel %vm1113, %v2301, %v2303
  %v2305 = vrot.slane %v2077, 1
  %v2306 = vrot.slane %v2078, 1
  %v2307 = vsel %vm1113, %v2305, %v2306
  %v2308 = vrot.slane %v2079, 1
  %v2309 = vsel %vm1113, %v2306, %v2308
  %v2310 = vrot.slane %v2080, 1
  %v2311 = vrot.slane %v2081, 1
  %v2312 = vsel %vm1113, %v2310, %v2311
  %v2313 = vrot.slane %v2082, 1
  %v2314 = vsel %vm1113, %v2311, %v2313
  %v2315 = vrot.slane %v2083, 1
  %v2316 = vrot.slane %v2084, 1
  %v2317 = vsel %vm1113, %v2315, %v2316
  %v2318 = vrot.slane %v2085, 1
  %v2319 = vsel %vm1113, %v2316, %v2318
  %v2320 = vrot.slane %v2086, 1
  %v2321 = vrot.slane %v2087, 1
  %v2322 = vsel %vm1113, %v2320, %v2321
  %v2323 = vrot.slane %v2088, 1
  %v2324 = vsel %vm1113, %v2321, %v2323
  %v2325 = vrot.slane %v2089, 1
  %v2326 = vrot.slane %v2090, 1
  %v2327 = vsel %vm1113, %v2325, %v2326
  %v2328 = vrot.slane %v2091, 1
  %v2329 = vsel %vm1113, %v2326, %v2328
  %v2330 = vrot.slane %v2092, 1
  %v2331 = vrot.slane %v2093, 1
  %v2332 = vsel %vm1113, %v2330, %v2331
  %v2333 = vrot.slane %v2094, 1
  %v2334 = vsel %vm1113, %v2331, %v2333
  %v2335 = vrot.slane %v2095, 1
  %v2336 = vrot.slane %v2096, 1
  %v2337 = vsel %vm1113, %v2335, %v2336
  %v2338 = vrot.slane %v2097, 1
  %v2339 = vsel %vm1113, %v2336, %v2338
  %v2340 = vrot.slane %v2098, 1
  %v2341 = vrot.slane %v2099, 1
  %v2342 = vsel %vm1113, %v2340, %v2341
  %v2343 = vrot.slane %v2100, 1
  %v2344 = vsel %vm1113, %v2341, %v2343
  %v2345 = vrot.slane %v2101, 1
  %v2346 = vrot.slane %v2102, 1
  %v2347 = vsel %vm1113, %v2345, %v2346
  %v2348 = vrot.slane %v2103, 1
  %v2349 = vsel %vm1113, %v2346, %v2348
  %v2350 = vrot.slane %v2104, 1
  %v2351 = vrot.slane %v2105, 1
  %v2352 = vsel %vm1113, %v2350, %v2351
  %v2353 = vrot.slane %v2106, 1
  %v2354 = vsel %vm1113, %v2351, %v2353
  %v2355 = vrot.slane %v2107, 1
  %v2356 = vrot.slane %v2108, 1
  %v2357 = vsel %vm1113, %v2355, %v2356
  %v2358 = vrot.slane %v2109, 1
  %v2359 = vsel %vm1113, %v2356, %v2358
  %v2360 = vrot.slane %v2110, 1
  %v2361 = vrot.slane %v2111, 1
  %v2362 = vsel %vm1113, %v2360, %v2361
  %v2363 = vrot.slane %v2112, 1
  %v2364 = vsel %vm1113, %v2361, %v2363
  %v2365 = vrot.slane %v2113, 1
  %v2366 = vrot.slane %v2114, 1
  %v2367 = vsel %vm1113, %v2365, %v2366
  %v2368 = vrot.slane %v2115, 1
  %v2369 = vsel %vm1113, %v2366, %v2368
  %v2370 = vrot.slane %v2116, 1
  %v2371 = vrot.slane %v2117, 1
  %v2372 = vsel %vm1113, %v2370, %v2371
  %v2373 = vrot.slane %v2118, 1
  %v2374 = vsel %vm1113, %v2371, %v2373
  %v2439 = vadd.f32 %v1955, %v2217
  %v2440 = vadd.f32 %v1956, %v2219
  %v2441 = vadd.f32 %v1957, %v2222
  %v2442 = vadd.f32 %v1958, %v2224
  %v2443 = vadd.f32 %v1959, %v2227
  %v2444 = vadd.f32 %v1960, %v2229
  %v2445 = vadd.f32 %v1961, %v2232
  %v2446 = vadd.f32 %v1962, %v2234
  %v2447 = vadd.f32 %v1963, %v2237
  %v2448 = vadd.f32 %v1964, %v2239
  %v2449 = vadd.f32 %v1965, %v2242
  %v2450 = vadd.f32 %v1966, %v2244
  %v2451 = vadd.f32 %v1967, %v2247
  %v2452 = vadd.f32 %v1968, %v2249
  %v2453 = vadd.f32 %v1969, %v2252
  %v2454 = vadd.f32 %v1970, %v2254
  %v2455 = vadd.f32 %v1971, %v2257
  %v2456 = vadd.f32 %v1972, %v2259
  %v2457 = vadd.f32 %v1973, %v2262
  %v2458 = vadd.f32 %v1974, %v2264
  %v2459 = vadd.f32 %v1975, %v2267
  %v2460 = vadd.f32 %v1976, %v2269
  %v2461 = vadd.f32 %v1977, %v2272
  %v2462 = vadd.f32 %v1978, %v2274
  %v2463 = vadd.f32 %v1979, %v2277
  %v2464 = vadd.f32 %v1980, %v2279
  %v2465 = vadd.f32 %v1981, %v2282
  %v2466 = vadd.f32 %v1982, %v2284
  %v2467 = vadd.f32 %v1983, %v2287
  %v2468 = vadd.f32 %v1984, %v2289
  %v2469 = vadd.f32 %v1985, %v2292
  %v2470 = vadd.f32 %v1986, %v2294
  %v2471 = vadd.f32 %v1987, %v2297
  %v2472 = vadd.f32 %v1988, %v2299
  %v2473 = vadd.f32 %v1989, %v2302
  %v2474 = vadd.f32 %v1990, %v2304
  %v2475 = vadd.f32 %v1991, %v2307
  %v2476 = vadd.f32 %v1992, %v2309
  %v2477 = vadd.f32 %v1993, %v2312
  %v2478 = vadd.f32 %v1994, %v2314
  %v2479 = vadd.f32 %v1995, %v2317
  %v2480 = vadd.f32 %v1996, %v2319
  %v2481 = vadd.f32 %v1997, %v2322
  %v2482 = vadd.f32 %v1998, %v2324
  %v2483 = vadd.f32 %v1999, %v2327
  %v2484 = vadd.f32 %v2000, %v2329
  %v2485 = vadd.f32 %v2001, %v2332
  %v2486 = vadd.f32 %v2002, %v2334
  %v2487 = vadd.f32 %v2003, %v2337
  %v2488 = vadd.f32 %v2004, %v2339
  %v2489 = vadd.f32 %v2005, %v2342
  %v2490 = vadd.f32 %v2006, %v2344
  %v2491 = vadd.f32 %v2007, %v2347
  %v2492 = vadd.f32 %v2008, %v2349
  %v2493 = vadd.f32 %v2009, %v2352
  %v2494 = vadd.f32 %v2010, %v2354
  %v2495 = vadd.f32 %v2011, %v2357
  %v2496 = vadd.f32 %v2012, %v2359
  %v2497 = vadd.f32 %v2013, %v2362
  %v2498 = vadd.f32 %v2014, %v2364
  %v2499 = vadd.f32 %v2015, %v2367
  %v2500 = vadd.f32 %v2016, %v2369
  %v2501 = vadd.f32 %v2017, %v2372
  %v2502 = vadd.f32 %v2018, %v2374
  %v2503 = vlaneseq
  %v2504 = vshrl.u32 %v2503, 7
  %v2505 = vsub.s32 5, %v2504
  %v2506 = vrot.slane %v847, %v2505
  %v2507 = vmul.f32 %v742, %v2506
  %v2508 = vmul.f32 %v743, %v2506
  %v2509 = vmul.f32 %v744, %v2506
  %v2510 = vmul.f32 %v745, %v2506
  %v2511 = vmul.f32 %v746, %v2506
  %v2512 = vmul.f32 %v747, %v2506
  %v2513 = vmul.f32 %v748, %v2506
  %v2514 = vmul.f32 %v749, %v2506
  %v2515 = vmul.f32 %v750, %v2506
  %v2516 = vmul.f32 %v751, %v2506
  %v2517 = vmul.f32 %v752, %v2506
  %v2518 = vmul.f32 %v753, %v2506
  %v2519 = vmul.f32 %v754, %v2506
  %v2520 = vmul.f32 %v755, %v2506
  %v2521 = vmul.f32 %v756, %v2506
  %v2522 = vmul.f32 %v757, %v2506
  %v2523 = vmul.f32 %v758, %v2506
  %v2524 = vmul.f32 %v759, %v2506
  %v2525 = vmul.f32 %v760, %v2506
  %v2526 = vmul.f32 %v761, %v2506
  %v2527 = vmul.f32 %v762, %v2506
  %v2528 = vmul.f32 %v763, %v2506
  %v2529 = vmul.f32 %v764, %v2506
  %v2530 = vmul.f32 %v765, %v2506
  %v2531 = vmul.f32 %v766, %v2506
  %v2532 = vmul.f32 %v767, %v2506
  %v2533 = vmul.f32 %v768, %v2506
  %v2534 = vmul.f32 %v769, %v2506
  %v2535 = vmul.f32 %v770, %v2506
  %v2536 = vmul.f32 %v771, %v2506
  %v2537 = vmul.f32 %v772, %v2506
  %v2538 = vmul.f32 %v773, %v2506
  %v2539 = vmul.f32 %v774, %v2506
  %v2540 = vmul.f32 %v775, %v2506
  %v2541 = vmul.f32 %v776, %v2506
  %v2542 = vmul.f32 %v777, %v2506
  %v2543 = vmul.f32 %v778, %v2506
  %v2544 = vmul.f32 %v779, %v2506
  %v2545 = vmul.f32 %v780, %v2506
  %v2546 = vmul.f32 %v781, %v2506
  %v2547 = vmul.f32 %v782, %v2506
  %v2548 = vmul.f32 %v783, %v2506
  %v2549 = vmul.f32 %v784, %v2506
  %v2550 = vmul.f32 %v785, %v2506
  %v2551 = vmul.f32 %v786, %v2506
  %v2552 = vmul.f32 %v787, %v2506
  %v2553 = vmul.f32 %v788, %v2506
  %v2554 = vmul.f32 %v789, %v2506
  %v2555 = vmul.f32 %v796, %v2506
  %v2556 = vmul.f32 %v797, %v2506
  %v2557 = vmul.f32 %v798, %v2506
  %v2558 = vmul.f32 %v799, %v2506
  %v2559 = vmul.f32 %v800, %v2506
  %v2560 = vmul.f32 %v801, %v2506
  %v2561 = vmul.f32 %v802, %v2506
  %v2562 = vmul.f32 %v803, %v2506
  %v2563 = vmul.f32 %v804, %v2506
  %v2564 = vmul.f32 %v805, %v2506
  %v2565 = vmul.f32 %v806, %v2506
  %v2566 = vmul.f32 %v807, %v2506
  %v2567 = vmul.f32 %v808, %v2506
  %v2568 = vmul.f32 %v809, %v2506
  %v2569 = vmul.f32 %v810, %v2506
  %v2570 = vmul.f32 %v811, %v2506
  %v2571 = vmul.f32 %v812, %v2506
  %v2572 = vmul.f32 %v813, %v2506
  %v2573 = vmul.f32 %v814, %v2506
  %v2574 = vmul.f32 %v815, %v2506
  %v2575 = vmul.f32 %v816, %v2506
  %v2576 = vmul.f32 %v817, %v2506
  %v2577 = vmul.f32 %v818, %v2506
  %v2578 = vmul.f32 %v819, %v2506
  %v2579 = vmul.f32 %v820, %v2506
  %v2580 = vmul.f32 %v821, %v2506
  %v2581 = vmul.f32 %v822, %v2506
  %v2582 = vmul.f32 %v823, %v2506
  %v2583 = vmul.f32 %v824, %v2506
  %v2584 = vmul.f32 %v825, %v2506
  %v2585 = vmul.f32 %v826, %v2506
  %v2586 = vmul.f32 %v827, %v2506
  %v2587 = vmul.f32 %v828, %v2506
  %v2588 = vmul.f32 %v829, %v2506
  %v2589 = vmul.f32 %v830, %v2506
  %v2590 = vmul.f32 %v831, %v2506
  %v2591 = vmul.f32 %v832, %v2506
  %v2592 = vmul.f32 %v833, %v2506
  %v2593 = vmul.f32 %v834, %v2506
  %v2594 = vmul.f32 %v835, %v2506
  %v2595 = vmul.f32 %v836, %v2506
  %v2596 = vmul.f32 %v837, %v2506
  %v2597 = vmul.f32 %v838, %v2506
  %v2598 = vmul.f32 %v839, %v2506
  %v2599 = vmul.f32 %v840, %v2506
  %v2600 = vmul.f32 %v841, %v2506
  %v2601 = vmul.f32 %v842, %v2506
  %v2602 = vmul.f32 %v843, %v2506
  %v2699 = vrot.slane %v2507, 2
  %v2700 = vrot.slane %v2508, 2
  %v2701 = vsel %vm1598, %v2699, %v2700
  %v2702 = vrot.slane %v2509, 2
  %v2703 = vsel %vm1598, %v2700, %v2702
  %v2704 = vrot.slane %v2510, 2
  %v2705 = vrot.slane %v2511, 2
  %v2706 = vsel %vm1598, %v2704, %v2705
  %v2707 = vrot.slane %v2512, 2
  %v2708 = vsel %vm1598, %v2705, %v2707
  %v2709 = vrot.slane %v2513, 2
  %v2710 = vrot.slane %v2514, 2
  %v2711 = vsel %vm1598, %v2709, %v2710
  %v2712 = vrot.slane %v2515, 2
  %v2713 = vsel %vm1598, %v2710, %v2712
  %v2714 = vrot.slane %v2516, 2
  %v2715 = vrot.slane %v2517, 2
  %v2716 = vsel %vm1598, %v2714, %v2715
  %v2717 = vrot.slane %v2518, 2
  %v2718 = vsel %vm1598, %v2715, %v2717
  %v2719 = vrot.slane %v2519, 2
  %v2720 = vrot.slane %v2520, 2
  %v2721 = vsel %vm1598, %v2719, %v2720
  %v2722 = vrot.slane %v2521, 2
  %v2723 = vsel %vm1598, %v2720, %v2722
  %v2724 = vrot.slane %v2522, 2
  %v2725 = vrot.slane %v2523, 2
  %v2726 = vsel %vm1598, %v2724, %v2725
  %v2727 = vrot.slane %v2524, 2
  %v2728 = vsel %vm1598, %v2725, %v2727
  %v2729 = vrot.slane %v2525, 2
  %v2730 = vrot.slane %v2526, 2
  %v2731 = vsel %vm1598, %v2729, %v2730
  %v2732 = vrot.slane %v2527, 2
  %v2733 = vsel %vm1598, %v2730, %v2732
  %v2734 = vrot.slane %v2528, 2
  %v2735 = vrot.slane %v2529, 2
  %v2736 = vsel %vm1598, %v2734, %v2735
  %v2737 = vrot.slane %v2530, 2
  %v2738 = vsel %vm1598, %v2735, %v2737
  %v2739 = vrot.slane %v2531, 2
  %v2740 = vrot.slane %v2532, 2
  %v2741 = vsel %vm1598, %v2739, %v2740
  %v2742 = vrot.slane %v2533, 2
  %v2743 = vsel %vm1598, %v2740, %v2742
  %v2744 = vrot.slane %v2534, 2
  %v2745 = vrot.slane %v2535, 2
  %v2746 = vsel %vm1598, %v2744, %v2745
  %v2747 = vrot.slane %v2536, 2
  %v2748 = vsel %vm1598, %v2745, %v2747
  %v2749 = vrot.slane %v2537, 2
  %v2750 = vrot.slane %v2538, 2
  %v2751 = vsel %vm1598, %v2749, %v2750
  %v2752 = vrot.slane %v2539, 2
  %v2753 = vsel %vm1598, %v2750, %v2752
  %v2754 = vrot.slane %v2540, 2
  %v2755 = vrot.slane %v2541, 2
  %v2756 = vsel %vm1598, %v2754, %v2755
  %v2757 = vrot.slane %v2542, 2
  %v2758 = vsel %vm1598, %v2755, %v2757
  %v2759 = vrot.slane %v2543, 2
  %v2760 = vrot.slane %v2544, 2
  %v2761 = vsel %vm1598, %v2759, %v2760
  %v2762 = vrot.slane %v2545, 2
  %v2763 = vsel %vm1598, %v2760, %v2762
  %v2764 = vrot.slane %v2546, 2
  %v2765 = vrot.slane %v2547, 2
  %v2766 = vsel %vm1598, %v2764, %v2765
  %v2767 = vrot.slane %v2548, 2
  %v2768 = vsel %vm1598, %v2765, %v2767
  %v2769 = vrot.slane %v2549, 2
  %v2770 = vrot.slane %v2550, 2
  %v2771 = vsel %vm1598, %v2769, %v2770
  %v2772 = vrot.slane %v2551, 2
  %v2773 = vsel %vm1598, %v2770, %v2772
  %v2774 = vrot.slane %v2552, 2
  %v2775 = vrot.slane %v2553, 2
  %v2776 = vsel %vm1598, %v2774, %v2775
  %v2777 = vrot.slane %v2554, 2
  %v2778 = vsel %vm1598, %v2775, %v2777
  %v2779 = vrot.slane %v2555, 2
  %v2780 = vrot.slane %v2556, 2
  %v2781 = vsel %vm1598, %v2779, %v2780
  %v2782 = vrot.slane %v2557, 2
  %v2783 = vsel %vm1598, %v2780, %v2782
  %v2784 = vrot.slane %v2558, 2
  %v2785 = vrot.slane %v2559, 2
  %v2786 = vsel %vm1598, %v2784, %v2785
  %v2787 = vrot.slane %v2560, 2
  %v2788 = vsel %vm1598, %v2785, %v2787
  %v2789 = vrot.slane %v2561, 2
  %v2790 = vrot.slane %v2562, 2
  %v2791 = vsel %vm1598, %v2789, %v2790
  %v2792 = vrot.slane %v2563, 2
  %v2793 = vsel %vm1598, %v2790, %v2792
  %v2794 = vrot.slane %v2564, 2
  %v2795 = vrot.slane %v2565, 2
  %v2796 = vsel %vm1598, %v2794, %v2795
  %v2797 = vrot.slane %v2566, 2
  %v2798 = vsel %vm1598, %v2795, %v2797
  %v2799 = vrot.slane %v2567, 2
  %v2800 = vrot.slane %v2568, 2
  %v2801 = vsel %vm1598, %v2799, %v2800
  %v2802 = vrot.slane %v2569, 2
  %v2803 = vsel %vm1598, %v2800, %v2802
  %v2804 = vrot.slane %v2570, 2
  %v2805 = vrot.slane %v2571, 2
  %v2806 = vsel %vm1598, %v2804, %v2805
  %v2807 = vrot.slane %v2572, 2
  %v2808 = vsel %vm1598, %v2805, %v2807
  %v2809 = vrot.slane %v2573, 2
  %v2810 = vrot.slane %v2574, 2
  %v2811 = vsel %vm1598, %v2809, %v2810
  %v2812 = vrot.slane %v2575, 2
  %v2813 = vsel %vm1598, %v2810, %v2812
  %v2814 = vrot.slane %v2576, 2
  %v2815 = vrot.slane %v2577, 2
  %v2816 = vsel %vm1598, %v2814, %v2815
  %v2817 = vrot.slane %v2578, 2
  %v2818 = vsel %vm1598, %v2815, %v2817
  %v2819 = vrot.slane %v2579, 2
  %v2820 = vrot.slane %v2580, 2
  %v2821 = vsel %vm1598, %v2819, %v2820
  %v2822 = vrot.slane %v2581, 2
  %v2823 = vsel %vm1598, %v2820, %v2822
  %v2824 = vrot.slane %v2582, 2
  %v2825 = vrot.slane %v2583, 2
  %v2826 = vsel %vm1598, %v2824, %v2825
  %v2827 = vrot.slane %v2584, 2
  %v2828 = vsel %vm1598, %v2825, %v2827
  %v2829 = vrot.slane %v2585, 2
  %v2830 = vrot.slane %v2586, 2
  %v2831 = vsel %vm1598, %v2829, %v2830
  %v2832 = vrot.slane %v2587, 2
  %v2833 = vsel %vm1598, %v2830, %v2832
  %v2834 = vrot.slane %v2588, 2
  %v2835 = vrot.slane %v2589, 2
  %v2836 = vsel %vm1598, %v2834, %v2835
  %v2837 = vrot.slane %v2590, 2
  %v2838 = vsel %vm1598, %v2835, %v2837
  %v2839 = vrot.slane %v2591, 2
  %v2840 = vrot.slane %v2592, 2
  %v2841 = vsel %vm1598, %v2839, %v2840
  %v2842 = vrot.slane %v2593, 2
  %v2843 = vsel %vm1598, %v2840, %v2842
  %v2844 = vrot.slane %v2594, 2
  %v2845 = vrot.slane %v2595, 2
  %v2846 = vsel %vm1598, %v2844, %v2845
  %v2847 = vrot.slane %v2596, 2
  %v2848 = vsel %vm1598, %v2845, %v2847
  %v2849 = vrot.slane %v2597, 2
  %v2850 = vrot.slane %v2598, 2
  %v2851 = vsel %vm1598, %v2849, %v2850
  %v2852 = vrot.slane %v2599, 2
  %v2853 = vsel %vm1598, %v2850, %v2852
  %v2854 = vrot.slane %v2600, 2
  %v2855 = vrot.slane %v2601, 2
  %v2856 = vsel %vm1598, %v2854, %v2855
  %v2857 = vrot.slane %v2602, 2
  %v2858 = vsel %vm1598, %v2855, %v2857
  %v2923 = vadd.f32 %v2439, %v2701
  %v2924 = vadd.f32 %v2440, %v2703
  %v2925 = vadd.f32 %v2441, %v2706
  %v2926 = vadd.f32 %v2442, %v2708
  %v2927 = vadd.f32 %v2443, %v2711
  %v2928 = vadd.f32 %v2444, %v2713
  %v2929 = vadd.f32 %v2445, %v2716
  %v2930 = vadd.f32 %v2446, %v2718
  %v2931 = vadd.f32 %v2447, %v2721
  %v2932 = vadd.f32 %v2448, %v2723
  %v2933 = vadd.f32 %v2449, %v2726
  %v2934 = vadd.f32 %v2450, %v2728
  %v2935 = vadd.f32 %v2451, %v2731
  %v2936 = vadd.f32 %v2452, %v2733
  %v2937 = vadd.f32 %v2453, %v2736
  %v2938 = vadd.f32 %v2454, %v2738
  %v2939 = vadd.f32 %v2455, %v2741
  %v2940 = vadd.f32 %v2456, %v2743
  %v2941 = vadd.f32 %v2457, %v2746
  %v2942 = vadd.f32 %v2458, %v2748
  %v2943 = vadd.f32 %v2459, %v2751
  %v2944 = vadd.f32 %v2460, %v2753
  %v2945 = vadd.f32 %v2461, %v2756
  %v2946 = vadd.f32 %v2462, %v2758
  %v2947 = vadd.f32 %v2463, %v2761
  %v2948 = vadd.f32 %v2464, %v2763
  %v2949 = vadd.f32 %v2465, %v2766
  %v2950 = vadd.f32 %v2466, %v2768
  %v2951 = vadd.f32 %v2467, %v2771
  %v2952 = vadd.f32 %v2468, %v2773
  %v2953 = vadd.f32 %v2469, %v2776
  %v2954 = vadd.f32 %v2470, %v2778
  %v2955 = vadd.f32 %v2471, %v2781
  %v2956 = vadd.f32 %v2472, %v2783
  %v2957 = vadd.f32 %v2473, %v2786
  %v2958 = vadd.f32 %v2474, %v2788
  %v2959 = vadd.f32 %v2475, %v2791
  %v2960 = vadd.f32 %v2476, %v2793
  %v2961 = vadd.f32 %v2477, %v2796
  %v2962 = vadd.f32 %v2478, %v2798
  %v2963 = vadd.f32 %v2479, %v2801
  %v2964 = vadd.f32 %v2480, %v2803
  %v2965 = vadd.f32 %v2481, %v2806
  %v2966 = vadd.f32 %v2482, %v2808
  %v2967 = vadd.f32 %v2483, %v2811
  %v2968 = vadd.f32 %v2484, %v2813
  %v2969 = vadd.f32 %v2485, %v2816
  %v2970 = vadd.f32 %v2486, %v2818
  %v2971 = vadd.f32 %v2487, %v2821
  %v2972 = vadd.f32 %v2488, %v2823
  %v2973 = vadd.f32 %v2489, %v2826
  %v2974 = vadd.f32 %v2490, %v2828
  %v2975 = vadd.f32 %v2491, %v2831
  %v2976 = vadd.f32 %v2492, %v2833
  %v2977 = vadd.f32 %v2493, %v2836
  %v2978 = vadd.f32 %v2494, %v2838
  %v2979 = vadd.f32 %v2495, %v2841
  %v2980 = vadd.f32 %v2496, %v2843
  %v2981 = vadd.f32 %v2497, %v2846
  %v2982 = vadd.f32 %v2498, %v2848
  %v2983 = vadd.f32 %v2499, %v2851
  %v2984 = vadd.f32 %v2500, %v2853
  %v2985 = vadd.f32 %v2501, %v2856
  %v2986 = vadd.f32 %v2502, %v2858
  %v2987 = vlaneseq
  %v2988 = vshrl.u32 %v2987, 7
  %v2989 = vsub.s32 6, %v2988
  %v2990 = vrot.slane %v847, %v2989
  %v2991 = vmul.f32 %v745, %v2990
  %v2992 = vmul.f32 %v746, %v2990
  %v2993 = vmul.f32 %v748, %v2990
  %v2994 = vmul.f32 %v749, %v2990
  %v2995 = vmul.f32 %v751, %v2990
  %v2996 = vmul.f32 %v752, %v2990
  %v2997 = vmul.f32 %v754, %v2990
  %v2998 = vmul.f32 %v755, %v2990
  %v2999 = vmul.f32 %v757, %v2990
  %v3000 = vmul.f32 %v758, %v2990
  %v3001 = vmul.f32 %v760, %v2990
  %v3002 = vmul.f32 %v761, %v2990
  %v3003 = vmul.f32 %v763, %v2990
  %v3004 = vmul.f32 %v764, %v2990
  %v3005 = vmul.f32 %v766, %v2990
  %v3006 = vmul.f32 %v767, %v2990
  %v3007 = vmul.f32 %v769, %v2990
  %v3008 = vmul.f32 %v770, %v2990
  %v3009 = vmul.f32 %v772, %v2990
  %v3010 = vmul.f32 %v773, %v2990
  %v3011 = vmul.f32 %v775, %v2990
  %v3012 = vmul.f32 %v776, %v2990
  %v3013 = vmul.f32 %v778, %v2990
  %v3014 = vmul.f32 %v779, %v2990
  %v3015 = vmul.f32 %v781, %v2990
  %v3016 = vmul.f32 %v782, %v2990
  %v3017 = vmul.f32 %v784, %v2990
  %v3018 = vmul.f32 %v785, %v2990
  %v3019 = vmul.f32 %v787, %v2990
  %v3020 = vmul.f32 %v788, %v2990
  %v3021 = vmul.f32 %v790, %v2990
  %v3022 = vmul.f32 %v791, %v2990
  %v3023 = vmul.f32 %v799, %v2990
  %v3024 = vmul.f32 %v800, %v2990
  %v3025 = vmul.f32 %v802, %v2990
  %v3026 = vmul.f32 %v803, %v2990
  %v3027 = vmul.f32 %v805, %v2990
  %v3028 = vmul.f32 %v806, %v2990
  %v3029 = vmul.f32 %v808, %v2990
  %v3030 = vmul.f32 %v809, %v2990
  %v3031 = vmul.f32 %v811, %v2990
  %v3032 = vmul.f32 %v812, %v2990
  %v3033 = vmul.f32 %v814, %v2990
  %v3034 = vmul.f32 %v815, %v2990
  %v3035 = vmul.f32 %v817, %v2990
  %v3036 = vmul.f32 %v818, %v2990
  %v3037 = vmul.f32 %v820, %v2990
  %v3038 = vmul.f32 %v821, %v2990
  %v3039 = vmul.f32 %v823, %v2990
  %v3040 = vmul.f32 %v824, %v2990
  %v3041 = vmul.f32 %v826, %v2990
  %v3042 = vmul.f32 %v827, %v2990
  %v3043 = vmul.f32 %v829, %v2990
  %v3044 = vmul.f32 %v830, %v2990
  %v3045 = vmul.f32 %v832, %v2990
  %v3046 = vmul.f32 %v833, %v2990
  %v3047 = vmul.f32 %v835, %v2990
  %v3048 = vmul.f32 %v836, %v2990
  %v3049 = vmul.f32 %v838, %v2990
  %v3050 = vmul.f32 %v839, %v2990
  %v3051 = vmul.f32 %v841, %v2990
  %v3052 = vmul.f32 %v842, %v2990
  %v3053 = vmul.f32 %v844, %v2990
  %v3054 = vmul.f32 %v845, %v2990
  %v3055 = vadd.f32 %v2923, %v2991
  %v3056 = vadd.f32 %v2924, %v2992
  %v3057 = vadd.f32 %v2925, %v2993
  %v3058 = vadd.f32 %v2926, %v2994
  %v3059 = vadd.f32 %v2927, %v2995
  %v3060 = vadd.f32 %v2928, %v2996
  %v3061 = vadd.f32 %v2929, %v2997
  %v3062 = vadd.f32 %v2930, %v2998
  %v3063 = vadd.f32 %v2931, %v2999
  %v3064 = vadd.f32 %v2932, %v3000
  %v3065 = vadd.f32 %v2933, %v3001
  %v3066 = vadd.f32 %v2934, %v3002
  %v3067 = vadd.f32 %v2935, %v3003
  %v3068 = vadd.f32 %v2936, %v3004
  %v3069 = vadd.f32 %v2937, %v3005
  %v3070 = vadd.f32 %v2938, %v3006
  %v3071 = vadd.f32 %v2939, %v3007
  %v3072 = vadd.f32 %v2940, %v3008
  %v3073 = vadd.f32 %v2941, %v3009
  %v3074 = vadd.f32 %v2942, %v3010
  %v3075 = vadd.f32 %v2943, %v3011
  %v3076 = vadd.f32 %v2944, %v3012
  %v3077 = vadd.f32 %v2945, %v3013
  %v3078 = vadd.f32 %v2946, %v3014
  %v3079 = vadd.f32 %v2947, %v3015
  %v3080 = vadd.f32 %v2948, %v3016
  %v3081 = vadd.f32 %v2949, %v3017
  %v3082 = vadd.f32 %v2950, %v3018
  %v3083 = vadd.f32 %v2951, %v3019
  %v3084 = vadd.f32 %v2952, %v3020
  %v3085 = vadd.f32 %v2953, %v3021
  %v3086 = vadd.f32 %v2954, %v3022
  %v3087 = vadd.f32 %v2955, %v3023
  %v3088 = vadd.f32 %v2956, %v3024
  %v3089 = vadd.f32 %v2957, %v3025
  %v3090 = vadd.f32 %v2958, %v3026
  %v3091 = vadd.f32 %v2959, %v3027
  %v3092 = vadd.f32 %v2960, %v3028
  %v3093 = vadd.f32 %v2961, %v3029
  %v3094 = vadd.f32 %v2962, %v3030
  %v3095 = vadd.f32 %v2963, %v3031
  %v3096 = vadd.f32 %v2964, %v3032
  %v3097 = vadd.f32 %v2965, %v3033
  %v3098 = vadd.f32 %v2966, %v3034
  %v3099 = vadd.f32 %v2967, %v3035
  %v3100 = vadd.f32 %v2968, %v3036
  %v3101 = vadd.f32 %v2969, %v3037
  %v3102 = vadd.f32 %v2970, %v3038
  %v3103 = vadd.f32 %v2971, %v3039
  %v3104 = vadd.f32 %v2972, %v3040
  %v3105 = vadd.f32 %v2973, %v3041
  %v3106 = vadd.f32 %v2974, %v3042
  %v3107 = vadd.f32 %v2975, %v3043
  %v3108 = vadd.f32 %v2976, %v3044
  %v3109 = vadd.f32 %v2977, %v3045
  %v3110 = vadd.f32 %v2978, %v3046
  %v3111 = vadd.f32 %v2979, %v3047
  %v3112 = vadd.f32 %v2980, %v3048
  %v3113 = vadd.f32 %v2981, %v3049
  %v3114 = vadd.f32 %v2982, %v3050
  %v3115 = vadd.f32 %v2983, %v3051
  %v3116 = vadd.f32 %v2984, %v3052
  %v3117 = vadd.f32 %v2985, %v3053
  %v3118 = vadd.f32 %v2986, %v3054
  %v3119 = vlaneseq
  %v3120 = vshrl.u32 %v3119, 7
  %v3121 = vsub.s32 7, %v3120
  %v3122 = vrot.slane %v847, %v3121
  %v3123 = vmul.f32 %v745, %v3122
  %v3124 = vmul.f32 %v746, %v3122
  %v3125 = vmul.f32 %v747, %v3122
  %v3126 = vmul.f32 %v748, %v3122
  %v3127 = vmul.f32 %v749, %v3122
  %v3128 = vmul.f32 %v750, %v3122
  %v3129 = vmul.f32 %v751, %v3122
  %v3130 = vmul.f32 %v752, %v3122
  %v3131 = vmul.f32 %v753, %v3122
  %v3132 = vmul.f32 %v754, %v3122
  %v3133 = vmul.f32 %v755, %v3122
  %v3134 = vmul.f32 %v756, %v3122
  %v3135 = vmul.f32 %v757, %v3122
  %v3136 = vmul.f32 %v758, %v3122
  %v3137 = vmul.f32 %v759, %v3122
  %v3138 = vmul.f32 %v760, %v3122
  %v3139 = vmul.f32 %v761, %v3122
  %v3140 = vmul.f32 %v762, %v3122
  %v3141 = vmul.f32 %v763, %v3122
  %v3142 = vmul.f32 %v764, %v3122
  %v3143 = vmul.f32 %v765, %v3122
  %v3144 = vmul.f32 %v766, %v3122
  %v3145 = vmul.f32 %v767, %v3122
  %v3146 = vmul.f32 %v768, %v3122
  %v3147 = vmul.f32 %v769, %v3122
  %v3148 = vmul.f32 %v770, %v3122
  %v3149 = vmul.f32 %v771, %v3122
  %v3150 = vmul.f32 %v772, %v3122
  %v3151 = vmul.f32 %v773, %v3122
  %v3152 = vmul.f32 %v774, %v3122
  %v3153 = vmul.f32 %v775, %v3122
  %v3154 = vmul.f32 %v776, %v3122
  %v3155 = vmul.f32 %v777, %v3122
  %v3156 = vmul.f32 %v778, %v3122
  %v3157 = vmul.f32 %v779, %v3122
  %v3158 = vmul.f32 %v780, %v3122
  %v3159 = vmul.f32 %v781, %v3122
  %v3160 = vmul.f32 %v782, %v3122
  %v3161 = vmul.f32 %v783, %v3122
  %v3162 = vmul.f32 %v784, %v3122
  %v3163 = vmul.f32 %v785, %v3122
  %v3164 = vmul.f32 %v786, %v3122
  %v3165 = vmul.f32 %v787, %v3122
  %v3166 = vmul.f32 %v788, %v3122
  %v3167 = vmul.f32 %v789, %v3122
  %v3168 = vmul.f32 %v790, %v3122
  %v3169 = vmul.f32 %v791, %v3122
  %v3170 = vmul.f32 %v792, %v3122
  %v3171 = vmul.f32 %v799, %v3122
  %v3172 = vmul.f32 %v800, %v3122
  %v3173 = vmul.f32 %v801, %v3122
  %v3174 = vmul.f32 %v802, %v3122
  %v3175 = vmul.f32 %v803, %v3122
  %v3176 = vmul.f32 %v804, %v3122
  %v3177 = vmul.f32 %v805, %v3122
  %v3178 = vmul.f32 %v806, %v3122
  %v3179 = vmul.f32 %v807, %v3122
  %v3180 = vmul.f32 %v808, %v3122
  %v3181 = vmul.f32 %v809, %v3122
  %v3182 = vmul.f32 %v810, %v3122
  %v3183 = vmul.f32 %v811, %v3122
  %v3184 = vmul.f32 %v812, %v3122
  %v3185 = vmul.f32 %v813, %v3122
  %v3186 = vmul.f32 %v814, %v3122
  %v3187 = vmul.f32 %v815, %v3122
  %v3188 = vmul.f32 %v816, %v3122
  %v3189 = vmul.f32 %v817, %v3122
  %v3190 = vmul.f32 %v818, %v3122
  %v3191 = vmul.f32 %v819, %v3122
  %v3192 = vmul.f32 %v820, %v3122
  %v3193 = vmul.f32 %v821, %v3122
  %v3194 = vmul.f32 %v822, %v3122
  %v3195 = vmul.f32 %v823, %v3122
  %v3196 = vmul.f32 %v824, %v3122
  %v3197 = vmul.f32 %v825, %v3122
  %v3198 = vmul.f32 %v826, %v3122
  %v3199 = vmul.f32 %v827, %v3122
  %v3200 = vmul.f32 %v828, %v3122
  %v3201 = vmul.f32 %v829, %v3122
  %v3202 = vmul.f32 %v830, %v3122
  %v3203 = vmul.f32 %v831, %v3122
  %v3204 = vmul.f32 %v832, %v3122
  %v3205 = vmul.f32 %v833, %v3122
  %v3206 = vmul.f32 %v834, %v3122
  %v3207 = vmul.f32 %v835, %v3122
  %v3208 = vmul.f32 %v836, %v3122
  %v3209 = vmul.f32 %v837, %v3122
  %v3210 = vmul.f32 %v838, %v3122
  %v3211 = vmul.f32 %v839, %v3122
  %v3212 = vmul.f32 %v840, %v3122
  %v3213 = vmul.f32 %v841, %v3122
  %v3214 = vmul.f32 %v842, %v3122
  %v3215 = vmul.f32 %v843, %v3122
  %v3216 = vmul.f32 %v844, %v3122
  %v3217 = vmul.f32 %v845, %v3122
  %v3218 = vmul.f32 %v846, %v3122
  %v3315 = vrot.slane %v3123, 1
  %v3316 = vrot.slane %v3124, 1
  %v3317 = vsel %vm1113, %v3315, %v3316
  %v3318 = vrot.slane %v3125, 1
  %v3319 = vsel %vm1113, %v3316, %v3318
  %v3320 = vrot.slane %v3126, 1
  %v3321 = vrot.slane %v3127, 1
  %v3322 = vsel %vm1113, %v3320, %v3321
  %v3323 = vrot.slane %v3128, 1
  %v3324 = vsel %vm1113, %v3321, %v3323
  %v3325 = vrot.slane %v3129, 1
  %v3326 = vrot.slane %v3130, 1
  %v3327 = vsel %vm1113, %v3325, %v3326
  %v3328 = vrot.slane %v3131, 1
  %v3329 = vsel %vm1113, %v3326, %v3328
  %v3330 = vrot.slane %v3132, 1
  %v3331 = vrot.slane %v3133, 1
  %v3332 = vsel %vm1113, %v3330, %v3331
  %v3333 = vrot.slane %v3134, 1
  %v3334 = vsel %vm1113, %v3331, %v3333
  %v3335 = vrot.slane %v3135, 1
  %v3336 = vrot.slane %v3136, 1
  %v3337 = vsel %vm1113, %v3335, %v3336
  %v3338 = vrot.slane %v3137, 1
  %v3339 = vsel %vm1113, %v3336, %v3338
  %v3340 = vrot.slane %v3138, 1
  %v3341 = vrot.slane %v3139, 1
  %v3342 = vsel %vm1113, %v3340, %v3341
  %v3343 = vrot.slane %v3140, 1
  %v3344 = vsel %vm1113, %v3341, %v3343
  %v3345 = vrot.slane %v3141, 1
  %v3346 = vrot.slane %v3142, 1
  %v3347 = vsel %vm1113, %v3345, %v3346
  %v3348 = vrot.slane %v3143, 1
  %v3349 = vsel %vm1113, %v3346, %v3348
  %v3350 = vrot.slane %v3144, 1
  %v3351 = vrot.slane %v3145, 1
  %v3352 = vsel %vm1113, %v3350, %v3351
  %v3353 = vrot.slane %v3146, 1
  %v3354 = vsel %vm1113, %v3351, %v3353
  %v3355 = vrot.slane %v3147, 1
  %v3356 = vrot.slane %v3148, 1
  %v3357 = vsel %vm1113, %v3355, %v3356
  %v3358 = vrot.slane %v3149, 1
  %v3359 = vsel %vm1113, %v3356, %v3358
  %v3360 = vrot.slane %v3150, 1
  %v3361 = vrot.slane %v3151, 1
  %v3362 = vsel %vm1113, %v3360, %v3361
  %v3363 = vrot.slane %v3152, 1
  %v3364 = vsel %vm1113, %v3361, %v3363
  %v3365 = vrot.slane %v3153, 1
  %v3366 = vrot.slane %v3154, 1
  %v3367 = vsel %vm1113, %v3365, %v3366
  %v3368 = vrot.slane %v3155, 1
  %v3369 = vsel %vm1113, %v3366, %v3368
  %v3370 = vrot.slane %v3156, 1
  %v3371 = vrot.slane %v3157, 1
  %v3372 = vsel %vm1113, %v3370, %v3371
  %v3373 = vrot.slane %v3158, 1
  %v3374 = vsel %vm1113, %v3371, %v3373
  %v3375 = vrot.slane %v3159, 1
  %v3376 = vrot.slane %v3160, 1
  %v3377 = vsel %vm1113, %v3375, %v3376
  %v3378 = vrot.slane %v3161, 1
  %v3379 = vsel %vm1113, %v3376, %v3378
  %v3380 = vrot.slane %v3162, 1
  %v3381 = vrot.slane %v3163, 1
  %v3382 = vsel %vm1113, %v3380, %v3381
  %v3383 = vrot.slane %v3164, 1
  %v3384 = vsel %vm1113, %v3381, %v3383
  %v3385 = vrot.slane %v3165, 1
  %v3386 = vrot.slane %v3166, 1
  %v3387 = vsel %vm1113, %v3385, %v3386
  %v3388 = vrot.slane %v3167, 1
  %v3389 = vsel %vm1113, %v3386, %v3388
  %v3390 = vrot.slane %v3168, 1
  %v3391 = vrot.slane %v3169, 1
  %v3392 = vsel %vm1113, %v3390, %v3391
  %v3393 = vrot.slane %v3170, 1
  %v3394 = vsel %vm1113, %v3391, %v3393
  %v3395 = vrot.slane %v3171, 1
  %v3396 = vrot.slane %v3172, 1
  %v3397 = vsel %vm1113, %v3395, %v3396
  %v3398 = vrot.slane %v3173, 1
  %v3399 = vsel %vm1113, %v3396, %v3398
  %v3400 = vrot.slane %v3174, 1
  %v3401 = vrot.slane %v3175, 1
  %v3402 = vsel %vm1113, %v3400, %v3401
  %v3403 = vrot.slane %v3176, 1
  %v3404 = vsel %vm1113, %v3401, %v3403
  %v3405 = vrot.slane %v3177, 1
  %v3406 = vrot.slane %v3178, 1
  %v3407 = vsel %vm1113, %v3405, %v3406
  %v3408 = vrot.slane %v3179, 1
  %v3409 = vsel %vm1113, %v3406, %v3408
  %v3410 = vrot.slane %v3180, 1
  %v3411 = vrot.slane %v3181, 1
  %v3412 = vsel %vm1113, %v3410, %v3411
  %v3413 = vrot.slane %v3182, 1
  %v3414 = vsel %vm1113, %v3411, %v3413
  %v3415 = vrot.slane %v3183, 1
  %v3416 = vrot.slane %v3184, 1
  %v3417 = vsel %vm1113, %v3415, %v3416
  %v3418 = vrot.slane %v3185, 1
  %v3419 = vsel %vm1113, %v3416, %v3418
  %v3420 = vrot.slane %v3186, 1
  %v3421 = vrot.slane %v3187, 1
  %v3422 = vsel %vm1113, %v3420, %v3421
  %v3423 = vrot.slane %v3188, 1
  %v3424 = vsel %vm1113, %v3421, %v3423
  %v3425 = vrot.slane %v3189, 1
  %v3426 = vrot.slane %v3190, 1
  %v3427 = vsel %vm1113, %v3425, %v3426
  %v3428 = vrot.slane %v3191, 1
  %v3429 = vsel %vm1113, %v3426, %v3428
  %v3430 = vrot.slane %v3192, 1
  %v3431 = vrot.slane %v3193, 1
  %v3432 = vsel %vm1113, %v3430, %v3431
  %v3433 = vrot.slane %v3194, 1
  %v3434 = vsel %vm1113, %v3431, %v3433
  %v3435 = vrot.slane %v3195, 1
  %v3436 = vrot.slane %v3196, 1
  %v3437 = vsel %vm1113, %v3435, %v3436
  %v3438 = vrot.slane %v3197, 1
  %v3439 = vsel %vm1113, %v3436, %v3438
  %v3440 = vrot.slane %v3198, 1
  %v3441 = vrot.slane %v3199, 1
  %v3442 = vsel %vm1113, %v3440, %v3441
  %v3443 = vrot.slane %v3200, 1
  %v3444 = vsel %vm1113, %v3441, %v3443
  %v3445 = vrot.slane %v3201, 1
  %v3446 = vrot.slane %v3202, 1
  %v3447 = vsel %vm1113, %v3445, %v3446
  %v3448 = vrot.slane %v3203, 1
  %v3449 = vsel %vm1113, %v3446, %v3448
  %v3450 = vrot.slane %v3204, 1
  %v3451 = vrot.slane %v3205, 1
  %v3452 = vsel %vm1113, %v3450, %v3451
  %v3453 = vrot.slane %v3206, 1
  %v3454 = vsel %vm1113, %v3451, %v3453
  %v3455 = vrot.slane %v3207, 1
  %v3456 = vrot.slane %v3208, 1
  %v3457 = vsel %vm1113, %v3455, %v3456
  %v3458 = vrot.slane %v3209, 1
  %v3459 = vsel %vm1113, %v3456, %v3458
  %v3460 = vrot.slane %v3210, 1
  %v3461 = vrot.slane %v3211, 1
  %v3462 = vsel %vm1113, %v3460, %v3461
  %v3463 = vrot.slane %v3212, 1
  %v3464 = vsel %vm1113, %v3461, %v3463
  %v3465 = vrot.slane %v3213, 1
  %v3466 = vrot.slane %v3214, 1
  %v3467 = vsel %vm1113, %v3465, %v3466
  %v3468 = vrot.slane %v3215, 1
  %v3469 = vsel %vm1113, %v3466, %v3468
  %v3470 = vrot.slane %v3216, 1
  %v3471 = vrot.slane %v3217, 1
  %v3472 = vsel %vm1113, %v3470, %v3471
  %v3473 = vrot.slane %v3218, 1
  %v3474 = vsel %vm1113, %v3471, %v3473
  %v3539 = vadd.f32 %v3055, %v3317
  %v3540 = vadd.f32 %v3056, %v3319
  %v3541 = vadd.f32 %v3057, %v3322
  %v3542 = vadd.f32 %v3058, %v3324
  %v3543 = vadd.f32 %v3059, %v3327
  %v3544 = vadd.f32 %v3060, %v3329
  %v3545 = vadd.f32 %v3061, %v3332
  %v3546 = vadd.f32 %v3062, %v3334
  %v3547 = vadd.f32 %v3063, %v3337
  %v3548 = vadd.f32 %v3064, %v3339
  %v3549 = vadd.f32 %v3065, %v3342
  %v3550 = vadd.f32 %v3066, %v3344
  %v3551 = vadd.f32 %v3067, %v3347
  %v3552 = vadd.f32 %v3068, %v3349
  %v3553 = vadd.f32 %v3069, %v3352
  %v3554 = vadd.f32 %v3070, %v3354
  %v3555 = vadd.f32 %v3071, %v3357
  %v3556 = vadd.f32 %v3072, %v3359
  %v3557 = vadd.f32 %v3073, %v3362
  %v3558 = vadd.f32 %v3074, %v3364
  %v3559 = vadd.f32 %v3075, %v3367
  %v3560 = vadd.f32 %v3076, %v3369
  %v3561 = vadd.f32 %v3077, %v3372
  %v3562 = vadd.f32 %v3078, %v3374
  %v3563 = vadd.f32 %v3079, %v3377
  %v3564 = vadd.f32 %v3080, %v3379
  %v3565 = vadd.f32 %v3081, %v3382
  %v3566 = vadd.f32 %v3082, %v3384
  %v3567 = vadd.f32 %v3083, %v3387
  %v3568 = vadd.f32 %v3084, %v3389
  %v3569 = vadd.f32 %v3085, %v3392
  %v3570 = vadd.f32 %v3086, %v3394
  %v3571 = vadd.f32 %v3087, %v3397
  %v3572 = vadd.f32 %v3088, %v3399
  %v3573 = vadd.f32 %v3089, %v3402
  %v3574 = vadd.f32 %v3090, %v3404
  %v3575 = vadd.f32 %v3091, %v3407
  %v3576 = vadd.f32 %v3092, %v3409
  %v3577 = vadd.f32 %v3093, %v3412
  %v3578 = vadd.f32 %v3094, %v3414
  %v3579 = vadd.f32 %v3095, %v3417
  %v3580 = vadd.f32 %v3096, %v3419
  %v3581 = vadd.f32 %v3097, %v3422
  %v3582 = vadd.f32 %v3098, %v3424
  %v3583 = vadd.f32 %v3099, %v3427
  %v3584 = vadd.f32 %v3100, %v3429
  %v3585 = vadd.f32 %v3101, %v3432
  %v3586 = vadd.f32 %v3102, %v3434
  %v3587 = vadd.f32 %v3103, %v3437
  %v3588 = vadd.f32 %v3104, %v3439
  %v3589 = vadd.f32 %v3105, %v3442
  %v3590 = vadd.f32 %v3106, %v3444
  %v3591 = vadd.f32 %v3107, %v3447
  %v3592 = vadd.f32 %v3108, %v3449
  %v3593 = vadd.f32 %v3109, %v3452
  %v3594 = vadd.f32 %v3110, %v3454
  %v3595 = vadd.f32 %v3111, %v3457
  %v3596 = vadd.f32 %v3112, %v3459
  %v3597 = vadd.f32 %v3113, %v3462
  %v3598 = vadd.f32 %v3114, %v3464
  %v3599 = vadd.f32 %v3115, %v3467
  %v3600 = vadd.f32 %v3116, %v3469
  %v3601 = vadd.f32 %v3117, %v3472
  %v3602 = vadd.f32 %v3118, %v3474
  %v3603 = vlaneseq
  %v3604 = vshrl.u32 %v3603, 7
  %v3605 = vsub.s32 0, %v3604
  %v3606 = vrot.slane %v848, %v3605
  %v3607 = vmul.f32 %v745, %v3606
  %v3608 = vmul.f32 %v746, %v3606
  %v3609 = vmul.f32 %v747, %v3606
  %v3610 = vmul.f32 %v748, %v3606
  %v3611 = vmul.f32 %v749, %v3606
  %v3612 = vmul.f32 %v750, %v3606
  %v3613 = vmul.f32 %v751, %v3606
  %v3614 = vmul.f32 %v752, %v3606
  %v3615 = vmul.f32 %v753, %v3606
  %v3616 = vmul.f32 %v754, %v3606
  %v3617 = vmul.f32 %v755, %v3606
  %v3618 = vmul.f32 %v756, %v3606
  %v3619 = vmul.f32 %v757, %v3606
  %v3620 = vmul.f32 %v758, %v3606
  %v3621 = vmul.f32 %v759, %v3606
  %v3622 = vmul.f32 %v760, %v3606
  %v3623 = vmul.f32 %v761, %v3606
  %v3624 = vmul.f32 %v762, %v3606
  %v3625 = vmul.f32 %v763, %v3606
  %v3626 = vmul.f32 %v764, %v3606
  %v3627 = vmul.f32 %v765, %v3606
  %v3628 = vmul.f32 %v766, %v3606
  %v3629 = vmul.f32 %v767, %v3606
  %v3630 = vmul.f32 %v768, %v3606
  %v3631 = vmul.f32 %v769, %v3606
  %v3632 = vmul.f32 %v770, %v3606
  %v3633 = vmul.f32 %v771, %v3606
  %v3634 = vmul.f32 %v772, %v3606
  %v3635 = vmul.f32 %v773, %v3606
  %v3636 = vmul.f32 %v774, %v3606
  %v3637 = vmul.f32 %v775, %v3606
  %v3638 = vmul.f32 %v776, %v3606
  %v3639 = vmul.f32 %v777, %v3606
  %v3640 = vmul.f32 %v778, %v3606
  %v3641 = vmul.f32 %v779, %v3606
  %v3642 = vmul.f32 %v780, %v3606
  %v3643 = vmul.f32 %v781, %v3606
  %v3644 = vmul.f32 %v782, %v3606
  %v3645 = vmul.f32 %v783, %v3606
  %v3646 = vmul.f32 %v784, %v3606
  %v3647 = vmul.f32 %v785, %v3606
  %v3648 = vmul.f32 %v786, %v3606
  %v3649 = vmul.f32 %v787, %v3606
  %v3650 = vmul.f32 %v788, %v3606
  %v3651 = vmul.f32 %v789, %v3606
  %v3652 = vmul.f32 %v790, %v3606
  %v3653 = vmul.f32 %v791, %v3606
  %v3654 = vmul.f32 %v792, %v3606
  %v3655 = vmul.f32 %v799, %v3606
  %v3656 = vmul.f32 %v800, %v3606
  %v3657 = vmul.f32 %v801, %v3606
  %v3658 = vmul.f32 %v802, %v3606
  %v3659 = vmul.f32 %v803, %v3606
  %v3660 = vmul.f32 %v804, %v3606
  %v3661 = vmul.f32 %v805, %v3606
  %v3662 = vmul.f32 %v806, %v3606
  %v3663 = vmul.f32 %v807, %v3606
  %v3664 = vmul.f32 %v808, %v3606
  %v3665 = vmul.f32 %v809, %v3606
  %v3666 = vmul.f32 %v810, %v3606
  %v3667 = vmul.f32 %v811, %v3606
  %v3668 = vmul.f32 %v812, %v3606
  %v3669 = vmul.f32 %v813, %v3606
  %v3670 = vmul.f32 %v814, %v3606
  %v3671 = vmul.f32 %v815, %v3606
  %v3672 = vmul.f32 %v816, %v3606
  %v3673 = vmul.f32 %v817, %v3606
  %v3674 = vmul.f32 %v818, %v3606
  %v3675 = vmul.f32 %v819, %v3606
  %v3676 = vmul.f32 %v820, %v3606
  %v3677 = vmul.f32 %v821, %v3606
  %v3678 = vmul.f32 %v822, %v3606
  %v3679 = vmul.f32 %v823, %v3606
  %v3680 = vmul.f32 %v824, %v3606
  %v3681 = vmul.f32 %v825, %v3606
  %v3682 = vmul.f32 %v826, %v3606
  %v3683 = vmul.f32 %v827, %v3606
  %v3684 = vmul.f32 %v828, %v3606
  %v3685 = vmul.f32 %v829, %v3606
  %v3686 = vmul.f32 %v830, %v3606
  %v3687 = vmul.f32 %v831, %v3606
  %v3688 = vmul.f32 %v832, %v3606
  %v3689 = vmul.f32 %v833, %v3606
  %v3690 = vmul.f32 %v834, %v3606
  %v3691 = vmul.f32 %v835, %v3606
  %v3692 = vmul.f32 %v836, %v3606
  %v3693 = vmul.f32 %v837, %v3606
  %v3694 = vmul.f32 %v838, %v3606
  %v3695 = vmul.f32 %v839, %v3606
  %v3696 = vmul.f32 %v840, %v3606
  %v3697 = vmul.f32 %v841, %v3606
  %v3698 = vmul.f32 %v842, %v3606
  %v3699 = vmul.f32 %v843, %v3606
  %v3700 = vmul.f32 %v844, %v3606
  %v3701 = vmul.f32 %v845, %v3606
  %v3702 = vmul.f32 %v846, %v3606
  %v3799 = vrot.slane %v3607, 2
  %v3800 = vrot.slane %v3608, 2
  %v3801 = vsel %vm1598, %v3799, %v3800
  %v3802 = vrot.slane %v3609, 2
  %v3803 = vsel %vm1598, %v3800, %v3802
  %v3804 = vrot.slane %v3610, 2
  %v3805 = vrot.slane %v3611, 2
  %v3806 = vsel %vm1598, %v3804, %v3805
  %v3807 = vrot.slane %v3612, 2
  %v3808 = vsel %vm1598, %v3805, %v3807
  %v3809 = vrot.slane %v3613, 2
  %v3810 = vrot.slane %v3614, 2
  %v3811 = vsel %vm1598, %v3809, %v3810
  %v3812 = vrot.slane %v3615, 2
  %v3813 = vsel %vm1598, %v3810, %v3812
  %v3814 = vrot.slane %v3616, 2
  %v3815 = vrot.slane %v3617, 2
  %v3816 = vsel %vm1598, %v3814, %v3815
  %v3817 = vrot.slane %v3618, 2
  %v3818 = vsel %vm1598, %v3815, %v3817
  %v3819 = vrot.slane %v3619, 2
  %v3820 = vrot.slane %v3620, 2
  %v3821 = vsel %vm1598, %v3819, %v3820
  %v3822 = vrot.slane %v3621, 2
  %v3823 = vsel %vm1598, %v3820, %v3822
  %v3824 = vrot.slane %v3622, 2
  %v3825 = vrot.slane %v3623, 2
  %v3826 = vsel %vm1598, %v3824, %v3825
  %v3827 = vrot.slane %v3624, 2
  %v3828 = vsel %vm1598, %v3825, %v3827
  %v3829 = vrot.slane %v3625, 2
  %v3830 = vrot.slane %v3626, 2
  %v3831 = vsel %vm1598, %v3829, %v3830
  %v3832 = vrot.slane %v3627, 2
  %v3833 = vsel %vm1598, %v3830, %v3832
  %v3834 = vrot.slane %v3628, 2
  %v3835 = vrot.slane %v3629, 2
  %v3836 = vsel %vm1598, %v3834, %v3835
  %v3837 = vrot.slane %v3630, 2
  %v3838 = vsel %vm1598, %v3835, %v3837
  %v3839 = vrot.slane %v3631, 2
  %v3840 = vrot.slane %v3632, 2
  %v3841 = vsel %vm1598, %v3839, %v3840
  %v3842 = vrot.slane %v3633, 2
  %v3843 = vsel %vm1598, %v3840, %v3842
  %v3844 = vrot.slane %v3634, 2
  %v3845 = vrot.slane %v3635, 2
  %v3846 = vsel %vm1598, %v3844, %v3845
  %v3847 = vrot.slane %v3636, 2
  %v3848 = vsel %vm1598, %v3845, %v3847
  %v3849 = vrot.slane %v3637, 2
  %v3850 = vrot.slane %v3638, 2
  %v3851 = vsel %vm1598, %v3849, %v3850
  %v3852 = vrot.slane %v3639, 2
  %v3853 = vsel %vm1598, %v3850, %v3852
  %v3854 = vrot.slane %v3640, 2
  %v3855 = vrot.slane %v3641, 2
  %v3856 = vsel %vm1598, %v3854, %v3855
  %v3857 = vrot.slane %v3642, 2
  %v3858 = vsel %vm1598, %v3855, %v3857
  %v3859 = vrot.slane %v3643, 2
  %v3860 = vrot.slane %v3644, 2
  %v3861 = vsel %vm1598, %v3859, %v3860
  %v3862 = vrot.slane %v3645, 2
  %v3863 = vsel %vm1598, %v3860, %v3862
  %v3864 = vrot.slane %v3646, 2
  %v3865 = vrot.slane %v3647, 2
  %v3866 = vsel %vm1598, %v3864, %v3865
  %v3867 = vrot.slane %v3648, 2
  %v3868 = vsel %vm1598, %v3865, %v3867
  %v3869 = vrot.slane %v3649, 2
  %v3870 = vrot.slane %v3650, 2
  %v3871 = vsel %vm1598, %v3869, %v3870
  %v3872 = vrot.slane %v3651, 2
  %v3873 = vsel %vm1598, %v3870, %v3872
  %v3874 = vrot.slane %v3652, 2
  %v3875 = vrot.slane %v3653, 2
  %v3876 = vsel %vm1598, %v3874, %v3875
  %v3877 = vrot.slane %v3654, 2
  %v3878 = vsel %vm1598, %v3875, %v3877
  %v3879 = vrot.slane %v3655, 2
  %v3880 = vrot.slane %v3656, 2
  %v3881 = vsel %vm1598, %v3879, %v3880
  %v3882 = vrot.slane %v3657, 2
  %v3883 = vsel %vm1598, %v3880, %v3882
  %v3884 = vrot.slane %v3658, 2
  %v3885 = vrot.slane %v3659, 2
  %v3886 = vsel %vm1598, %v3884, %v3885
  %v3887 = vrot.slane %v3660, 2
  %v3888 = vsel %vm1598, %v3885, %v3887
  %v3889 = vrot.slane %v3661, 2
  %v3890 = vrot.slane %v3662, 2
  %v3891 = vsel %vm1598, %v3889, %v3890
  %v3892 = vrot.slane %v3663, 2
  %v3893 = vsel %vm1598, %v3890, %v3892
  %v3894 = vrot.slane %v3664, 2
  %v3895 = vrot.slane %v3665, 2
  %v3896 = vsel %vm1598, %v3894, %v3895
  %v3897 = vrot.slane %v3666, 2
  %v3898 = vsel %vm1598, %v3895, %v3897
  %v3899 = vrot.slane %v3667, 2
  %v3900 = vrot.slane %v3668, 2
  %v3901 = vsel %vm1598, %v3899, %v3900
  %v3902 = vrot.slane %v3669, 2
  %v3903 = vsel %vm1598, %v3900, %v3902
  %v3904 = vrot.slane %v3670, 2
  %v3905 = vrot.slane %v3671, 2
  %v3906 = vsel %vm1598, %v3904, %v3905
  %v3907 = vrot.slane %v3672, 2
  %v3908 = vsel %vm1598, %v3905, %v3907
  %v3909 = vrot.slane %v3673, 2
  %v3910 = vrot.slane %v3674, 2
  %v3911 = vsel %vm1598, %v3909, %v3910
  %v3912 = vrot.slane %v3675, 2
  %v3913 = vsel %vm1598, %v3910, %v3912
  %v3914 = vrot.slane %v3676, 2
  %v3915 = vrot.slane %v3677, 2
  %v3916 = vsel %vm1598, %v3914, %v3915
  %v3917 = vrot.slane %v3678, 2
  %v3918 = vsel %vm1598, %v3915, %v3917
  %v3919 = vrot.slane %v3679, 2
  %v3920 = vrot.slane %v3680, 2
  %v3921 = vsel %vm1598, %v3919, %v3920
  %v3922 = vrot.slane %v3681, 2
  %v3923 = vsel %vm1598, %v3920, %v3922
  %v3924 = vrot.slane %v3682, 2
  %v3925 = vrot.slane %v3683, 2
  %v3926 = vsel %vm1598, %v3924, %v3925
  %v3927 = vrot.slane %v3684, 2
  %v3928 = vsel %vm1598, %v3925, %v3927
  %v3929 = vrot.slane %v3685, 2
  %v3930 = vrot.slane %v3686, 2
  %v3931 = vsel %vm1598, %v3929, %v3930
  %v3932 = vrot.slane %v3687, 2
  %v3933 = vsel %vm1598, %v3930, %v3932
  %v3934 = vrot.slane %v3688, 2
  %v3935 = vrot.slane %v3689, 2
  %v3936 = vsel %vm1598, %v3934, %v3935
  %v3937 = vrot.slane %v3690, 2
  %v3938 = vsel %vm1598, %v3935, %v3937
  %v3939 = vrot.slane %v3691, 2
  %v3940 = vrot.slane %v3692, 2
  %v3941 = vsel %vm1598, %v3939, %v3940
  %v3942 = vrot.slane %v3693, 2
  %v3943 = vsel %vm1598, %v3940, %v3942
  %v3944 = vrot.slane %v3694, 2
  %v3945 = vrot.slane %v3695, 2
  %v3946 = vsel %vm1598, %v3944, %v3945
  %v3947 = vrot.slane %v3696, 2
  %v3948 = vsel %vm1598, %v3945, %v3947
  %v3949 = vrot.slane %v3697, 2
  %v3950 = vrot.slane %v3698, 2
  %v3951 = vsel %vm1598, %v3949, %v3950
  %v3952 = vrot.slane %v3699, 2
  %v3953 = vsel %vm1598, %v3950, %v3952
  %v3954 = vrot.slane %v3700, 2
  %v3955 = vrot.slane %v3701, 2
  %v3956 = vsel %vm1598, %v3954, %v3955
  %v3957 = vrot.slane %v3702, 2
  %v3958 = vsel %vm1598, %v3955, %v3957
  %v4023 = vadd.f32 %v3539, %v3801
  %v4024 = vadd.f32 %v3540, %v3803
  %v4025 = vadd.f32 %v3541, %v3806
  %v4026 = vadd.f32 %v3542, %v3808
  %v4027 = vadd.f32 %v3543, %v3811
  %v4028 = vadd.f32 %v3544, %v3813
  %v4029 = vadd.f32 %v3545, %v3816
  %v4030 = vadd.f32 %v3546, %v3818
  %v4031 = vadd.f32 %v3547, %v3821
  %v4032 = vadd.f32 %v3548, %v3823
  %v4033 = vadd.f32 %v3549, %v3826
  %v4034 = vadd.f32 %v3550, %v3828
  %v4035 = vadd.f32 %v3551, %v3831
  %v4036 = vadd.f32 %v3552, %v3833
  %v4037 = vadd.f32 %v3553, %v3836
  %v4038 = vadd.f32 %v3554, %v3838
  %v4039 = vadd.f32 %v3555, %v3841
  %v4040 = vadd.f32 %v3556, %v3843
  %v4041 = vadd.f32 %v3557, %v3846
  %v4042 = vadd.f32 %v3558, %v3848
  %v4043 = vadd.f32 %v3559, %v3851
  %v4044 = vadd.f32 %v3560, %v3853
  %v4045 = vadd.f32 %v3561, %v3856
  %v4046 = vadd.f32 %v3562, %v3858
  %v4047 = vadd.f32 %v3563, %v3861
  %v4048 = vadd.f32 %v3564, %v3863
  %v4049 = vadd.f32 %v3565, %v3866
  %v4050 = vadd.f32 %v3566, %v3868
  %v4051 = vadd.f32 %v3567, %v3871
  %v4052 = vadd.f32 %v3568, %v3873
  %v4053 = vadd.f32 %v3569, %v3876
  %v4054 = vadd.f32 %v3570, %v3878
  %v4055 = vadd.f32 %v3571, %v3881
  %v4056 = vadd.f32 %v3572, %v3883
  %v4057 = vadd.f32 %v3573, %v3886
  %v4058 = vadd.f32 %v3574, %v3888
  %v4059 = vadd.f32 %v3575, %v3891
  %v4060 = vadd.f32 %v3576, %v3893
  %v4061 = vadd.f32 %v3577, %v3896
  %v4062 = vadd.f32 %v3578, %v3898
  %v4063 = vadd.f32 %v3579, %v3901
  %v4064 = vadd.f32 %v3580, %v3903
  %v4065 = vadd.f32 %v3581, %v3906
  %v4066 = vadd.f32 %v3582, %v3908
  %v4067 = vadd.f32 %v3583, %v3911
  %v4068 = vadd.f32 %v3584, %v3913
  %v4069 = vadd.f32 %v3585, %v3916
  %v4070 = vadd.f32 %v3586, %v3918
  %v4071 = vadd.f32 %v3587, %v3921
  %v4072 = vadd.f32 %v3588, %v3923
  %v4073 = vadd.f32 %v3589, %v3926
  %v4074 = vadd.f32 %v3590, %v3928
  %v4075 = vadd.f32 %v3591, %v3931
  %v4076 = vadd.f32 %v3592, %v3933
  %v4077 = vadd.f32 %v3593, %v3936
  %v4078 = vadd.f32 %v3594, %v3938
  %v4079 = vadd.f32 %v3595, %v3941
  %v4080 = vadd.f32 %v3596, %v3943
  %v4081 = vadd.f32 %v3597, %v3946
  %v4082 = vadd.f32 %v3598, %v3948
  %v4083 = vadd.f32 %v3599, %v3951
  %v4084 = vadd.f32 %v3600, %v3953
  %v4085 = vadd.f32 %v3601, %v3956
  %v4086 = vadd.f32 %v3602, %v3958
  %v4087 = vld [vmem:[%s4] sm:$0x1]
  %v4089 = vlaneseq
  %v4090 = vshrl.u32 %v4089, 7
  %v4091 = vsub.s32 0, %v4090
  %v4092 = vrot.slane %v4087, %v4091
  %v4094 = vadd.f32 %v4023, %v4092
  %v4095 = vadd.f32 %v4024, %v4092
  %v4096 = vadd.f32 %v4025, %v4092
  %v4097 = vadd.f32 %v4026, %v4092
  %v4098 = vadd.f32 %v4027, %v4092
  %v4099 = vadd.f32 %v4028, %v4092
  %v4100 = vadd.f32 %v4029, %v4092
  %v4101 = vadd.f32 %v4030, %v4092
  %v4102 = vadd.f32 %v4031, %v4092
  %v4103 = vadd.f32 %v4032, %v4092
  %v4104 = vadd.f32 %v4033, %v4092
  %v4105 = vadd.f32 %v4034, %v4092
  %v4106 = vadd.f32 %v4035, %v4092
  %v4107 = vadd.f32 %v4036, %v4092
  %v4108 = vadd.f32 %v4037, %v4092
  %v4109 = vadd.f32 %v4038, %v4092
  %v4110 = vadd.f32 %v4039, %v4092
  %v4111 = vadd.f32 %v4040, %v4092
  %v4112 = vadd.f32 %v4041, %v4092
  %v4113 = vadd.f32 %v4042, %v4092
  %v4114 = vadd.f32 %v4043, %v4092
  %v4115 = vadd.f32 %v4044, %v4092
  %v4116 = vadd.f32 %v4045, %v4092
  %v4117 = vadd.f32 %v4046, %v4092
  %v4118 = vadd.f32 %v4047, %v4092
  %v4119 = vadd.f32 %v4048, %v4092
  %v4120 = vadd.f32 %v4049, %v4092
  %v4121 = vadd.f32 %v4050, %v4092
  %v4122 = vadd.f32 %v4051, %v4092
  %v4123 = vadd.f32 %v4052, %v4092
  %v4124 = vadd.f32 %v4053, %v4092
  %v4125 = vadd.f32 %v4054, %v4092
  %v4126 = vadd.f32 %v4055, %v4092
  %v4127 = vadd.f32 %v4056, %v4092
  %v4128 = vadd.f32 %v4057, %v4092
  %v4129 = vadd.f32 %v4058, %v4092
  %v4130 = vadd.f32 %v4059, %v4092
  %v4131 = vadd.f32 %v4060, %v4092
  %v4132 = vadd.f32 %v4061, %v4092
  %v4133 = vadd.f32 %v4062, %v4092
  %v4134 = vadd.f32 %v4063, %v4092
  %v4135 = vadd.f32 %v4064, %v4092
  %v4136 = vadd.f32 %v4065, %v4092
  %v4137 = vadd.f32 %v4066, %v4092
  %v4138 = vadd.f32 %v4067, %v4092
  %v4139 = vadd.f32 %v4068, %v4092
  %v4140 = vadd.f32 %v4069, %v4092
  %v4141 = vadd.f32 %v4070, %v4092
  %v4142 = vadd.f32 %v4071, %v4092
  %v4143 = vadd.f32 %v4072, %v4092
  %v4144 = vadd.f32 %v4073, %v4092
  %v4145 = vadd.f32 %v4074, %v4092
  %v4146 = vadd.f32 %v4075, %v4092
  %v4147 = vadd.f32 %v4076, %v4092
  %v4148 = vadd.f32 %v4077, %v4092
  %v4149 = vadd.f32 %v4078, %v4092
  %v4150 = vadd.f32 %v4079, %v4092
  %v4151 = vadd.f32 %v4080, %v4092
  %v4152 = vadd.f32 %v4081, %v4092
  %v4153 = vadd.f32 %v4082, %v4092
  %v4154 = vadd.f32 %v4083, %v4092
  %v4155 = vadd.f32 %v4084, %v4092
  %v4156 = vadd.f32 %v4085, %v4092
  %v4157 = vadd.f32 %v4086, %v4092
  %v4158 = vmul.f32 %v4094, 0.2
  %v4159 = vmul.f32 %v4095, 0.2
  %v4160 = vmul.f32 %v4096, 0.2
  %v4161 = vmul.f32 %v4097, 0.2
  %v4162 = vmul.f32 %v4098, 0.2
  %v4163 = vmul.f32 %v4099, 0.2
  %v4164 = vmul.f32 %v4100, 0.2
  %v4165 = vmul.f32 %v4101, 0.2
  %v4166 = vmul.f32 %v4102, 0.2
  %v4167 = vmul.f32 %v4103, 0.2
  %v4168 = vmul.f32 %v4104, 0.2
  %v4169 = vmul.f32 %v4105, 0.2
  %v4170 = vmul.f32 %v4106, 0.2
  %v4171 = vmul.f32 %v4107, 0.2
  %v4172 = vmul.f32 %v4108, 0.2
  %v4173 = vmul.f32 %v4109, 0.2
  %v4174 = vmul.f32 %v4110, 0.2
  %v4175 = vmul.f32 %v4111, 0.2
  %v4176 = vmul.f32 %v4112, 0.2
  %v4177 = vmul.f32 %v4113, 0.2
  %v4178 = vmul.f32 %v4114, 0.2
  %v4179 = vmul.f32 %v4115, 0.2
  %v4180 = vmul.f32 %v4116, 0.2
  %v4181 = vmul.f32 %v4117, 0.2
  %v4182 = vmul.f32 %v4118, 0.2
  %v4183 = vmul.f32 %v4119, 0.2
  %v4184 = vmul.f32 %v4120, 0.2
  %v4185 = vmul.f32 %v4121, 0.2
  %v4186 = vmul.f32 %v4122, 0.2
  %v4187 = vmul.f32 %v4123, 0.2
  %v4188 = vmul.f32 %v4124, 0.2
  %v4189 = vmul.f32 %v4125, 0.2
  %v4190 = vmul.f32 %v4126, 0.2
  %v4191 = vmul.f32 %v4127, 0.2
  %v4192 = vmul.f32 %v4128, 0.2
  %v4193 = vmul.f32 %v4129, 0.2
  %v4194 = vmul.f32 %v4130, 0.2
  %v4195 = vmul.f32 %v4131, 0.2
  %v4196 = vmul.f32 %v4132, 0.2
  %v4197 = vmul.f32 %v4133, 0.2
  %v4198 = vmul.f32 %v4134, 0.2
  %v4199 = vmul.f32 %v4135, 0.2
  %v4200 = vmul.f32 %v4136, 0.2
  %v4201 = vmul.f32 %v4137, 0.2
  %v4202 = vmul.f32 %v4138, 0.2
  %v4203 = vmul.f32 %v4139, 0.2
  %v4204 = vmul.f32 %v4140, 0.2
  %v4205 = vmul.f32 %v4141, 0.2
  %v4206 = vmul.f32 %v4142, 0.2
  %v4207 = vmul.f32 %v4143, 0.2
  %v4208 = vmul.f32 %v4144, 0.2
  %v4209 = vmul.f32 %v4145, 0.2
  %v4210 = vmul.f32 %v4146, 0.2
  %v4211 = vmul.f32 %v4147, 0.2
  %v4212 = vmul.f32 %v4148, 0.2
  %v4213 = vmul.f32 %v4149, 0.2
  %v4214 = vmul.f32 %v4150, 0.2
  %v4215 = vmul.f32 %v4151, 0.2
  %v4216 = vmul.f32 %v4152, 0.2
  %v4217 = vmul.f32 %v4153, 0.2
  %v4218 = vmul.f32 %v4154, 0.2
  %v4219 = vmul.f32 %v4155, 0.2
  %v4220 = vmul.f32 %v4156, 0.2
  %v4221 = vmul.f32 %v4157, 0.2
  %v4222 = vmax.f32 %v4094, %v4158
  %v4223 = vmax.f32 %v4095, %v4159
  %v4224 = vmax.f32 %v4096, %v4160
  %v4225 = vmax.f32 %v4097, %v4161
  %v4226 = vmax.f32 %v4098, %v4162
  %v4227 = vmax.f32 %v4099, %v4163
  %v4228 = vmax.f32 %v4100, %v4164
  %v4229 = vmax.f32 %v4101, %v4165
  %v4230 = vmax.f32 %v4102, %v4166
  %v4231 = vmax.f32 %v4103, %v4167
  %v4232 = vmax.f32 %v4104, %v4168
  %v4233 = vmax.f32 %v4105, %v4169
  %v4234 = vmax.f32 %v4106, %v4170
  %v4235 = vmax.f32 %v4107, %v4171
  %v4236 = vmax.f32 %v4108, %v4172
  %v4237 = vmax.f32 %v4109, %v4173
  %v4238 = vmax.f32 %v4110, %v4174
  %v4239 = vmax.f32 %v4111, %v4175
  %v4240 = vmax.f32 %v4112, %v4176
  %v4241 = vmax.f32 %v4113, %v4177
  %v4242 = vmax.f32 %v4114, %v4178
  %v4243 = vmax.f32 %v4115, %v4179
  %v4244 = vmax.f32 %v4116, %v4180
  %v4245 = vmax.f32 %v4117, %v4181
  %v4246 = vmax.f32 %v4118, %v4182
  %v4247 = vmax.f32 %v4119, %v4183
  %v4248 = vmax.f32 %v4120, %v4184
  %v4249 = vmax.f32 %v4121, %v4185
  %v4250 = vmax.f32 %v4122, %v4186
  %v4251 = vmax.f32 %v4123, %v4187
  %v4252 = vmax.f32 %v4124, %v4188
  %v4253 = vmax.f32 %v4125, %v4189
  %v4254 = vmax.f32 %v4126, %v4190
  %v4255 = vmax.f32 %v4127, %v4191
  %v4256 = vmax.f32 %v4128, %v4192
  %v4257 = vmax.f32 %v4129, %v4193
  %v4258 = vmax.f32 %v4130, %v4194
  %v4259 = vmax.f32 %v4131, %v4195
  %v4260 = vmax.f32 %v4132, %v4196
  %v4261 = vmax.f32 %v4133, %v4197
  %v4262 = vmax.f32 %v4134, %v4198
  %v4263 = vmax.f32 %v4135, %v4199
  %v4264 = vmax.f32 %v4136, %v4200
  %v4265 = vmax.f32 %v4137, %v4201
  %v4266 = vmax.f32 %v4138, %v4202
  %v4267 = vmax.f32 %v4139, %v4203
  %v4268 = vmax.f32 %v4140, %v4204
  %v4269 = vmax.f32 %v4141, %v4205
  %v4270 = vmax.f32 %v4142, %v4206
  %v4271 = vmax.f32 %v4143, %v4207
  %v4272 = vmax.f32 %v4144, %v4208
  %v4273 = vmax.f32 %v4145, %v4209
  %v4274 = vmax.f32 %v4146, %v4210
  %v4275 = vmax.f32 %v4147, %v4211
  %v4276 = vmax.f32 %v4148, %v4212
  %v4277 = vmax.f32 %v4149, %v4213
  %v4278 = vmax.f32 %v4150, %v4214
  %v4279 = vmax.f32 %v4151, %v4215
  %v4280 = vmax.f32 %v4152, %v4216
  %v4281 = vmax.f32 %v4153, %v4217
  %v4282 = vmax.f32 %v4154, %v4218
  %v4283 = vmax.f32 %v4155, %v4219
  %v4284 = vmax.f32 %v4156, %v4220
  %v4285 = vmax.f32 %v4157, %v4221
  %v4286 = vmul.f32 %v4222, 1.4142135
  %v4287 = vmul.f32 %v4223, 1.4142135
  %v4288 = vmul.f32 %v4224, 1.4142135
  %v4289 = vmul.f32 %v4225, 1.4142135
  %v4290 = vmul.f32 %v4226, 1.4142135
  %v4291 = vmul.f32 %v4227, 1.4142135
  %v4292 = vmul.f32 %v4228, 1.4142135
  %v4293 = vmul.f32 %v4229, 1.4142135
  %v4294 = vmul.f32 %v4230, 1.4142135
  %v4295 = vmul.f32 %v4231, 1.4142135
  %v4296 = vmul.f32 %v4232, 1.4142135
  %v4297 = vmul.f32 %v4233, 1.4142135
  %v4298 = vmul.f32 %v4234, 1.4142135
  %v4299 = vmul.f32 %v4235, 1.4142135
  %v4300 = vmul.f32 %v4236, 1.4142135
  %v4301 = vmul.f32 %v4237, 1.4142135
  %v4302 = vmul.f32 %v4238, 1.4142135
  %v4303 = vmul.f32 %v4239, 1.4142135
  %v4304 = vmul.f32 %v4240, 1.4142135
  %v4305 = vmul.f32 %v4241, 1.4142135
  %v4306 = vmul.f32 %v4242, 1.4142135
  %v4307 = vmul.f32 %v4243, 1.4142135
  %v4308 = vmul.f32 %v4244, 1.4142135
  %v4309 = vmul.f32 %v4245, 1.4142135
  %v4310 = vmul.f32 %v4246, 1.4142135
  %v4311 = vmul.f32 %v4247, 1.4142135
  %v4312 = vmul.f32 %v4248, 1.4142135
  %v4313 = vmul.f32 %v4249, 1.4142135
  %v4314 = vmul.f32 %v4250, 1.4142135
  %v4315 = vmul.f32 %v4251, 1.4142135
  %v4316 = vmul.f32 %v4252, 1.4142135
  %v4317 = vmul.f32 %v4253, 1.4142135
  %v4318 = vmul.f32 %v4254, 1.4142135
  %v4319 = vmul.f32 %v4255, 1.4142135
  %v4320 = vmul.f32 %v4256, 1.4142135
  %v4321 = vmul.f32 %v4257, 1.4142135
  %v4322 = vmul.f32 %v4258, 1.4142135
  %v4323 = vmul.f32 %v4259, 1.4142135
  %v4324 = vmul.f32 %v4260, 1.4142135
  %v4325 = vmul.f32 %v4261, 1.4142135
  %v4326 = vmul.f32 %v4262, 1.4142135
  %v4327 = vmul.f32 %v4263, 1.4142135
  %v4328 = vmul.f32 %v4264, 1.4142135
  %v4329 = vmul.f32 %v4265, 1.4142135
  %v4330 = vmul.f32 %v4266, 1.4142135
  %v4331 = vmul.f32 %v4267, 1.4142135
  %v4332 = vmul.f32 %v4268, 1.4142135
  %v4333 = vmul.f32 %v4269, 1.4142135
  %v4334 = vmul.f32 %v4270, 1.4142135
  %v4335 = vmul.f32 %v4271, 1.4142135
  %v4336 = vmul.f32 %v4272, 1.4142135
  %v4337 = vmul.f32 %v4273, 1.4142135
  %v4338 = vmul.f32 %v4274, 1.4142135
  %v4339 = vmul.f32 %v4275, 1.4142135
  %v4340 = vmul.f32 %v4276, 1.4142135
  %v4341 = vmul.f32 %v4277, 1.4142135
  %v4342 = vmul.f32 %v4278, 1.4142135
  %v4343 = vmul.f32 %v4279, 1.4142135
  %v4344 = vmul.f32 %v4280, 1.4142135
  %v4345 = vmul.f32 %v4281, 1.4142135
  %v4346 = vmul.f32 %v4282, 1.4142135
  %v4347 = vmul.f32 %v4283, 1.4142135
  %v4348 = vmul.f32 %v4284, 1.4142135
  %v4349 = vmul.f32 %v4285, 1.4142135
  %4350 = vst.msk [vmem:[%s5] sm:$0xff] %vm586, %v4286
  %4351 = vst.msk [vmem:[%s5 + $0x8] sm:$0xff] %vm586, %v4287
  %4352 = vst.msk [vmem:[%s5 + $0x10] sm:$0xff] %vm586, %v4288
  %4353 = vst.msk [vmem:[%s5 + $0x18] sm:$0xff] %vm586, %v4289
  %4354 = vst.msk [vmem:[%s5 + $0x20] sm:$0xff] %vm586, %v4290
  %4355 = vst.msk [vmem:[%s5 + $0x28] sm:$0xff] %vm586, %v4291
  %4356 = vst.msk [vmem:[%s5 + $0x30] sm:$0xff] %vm586, %v4292
  %4357 = vst.msk [vmem:[%s5 + $0x38] sm:$0xff] %vm586, %v4293
  %4358 = vst.msk [vmem:[%s5 + $0x40] sm:$0xff] %vm586, %v4294
  %4359 = vst.msk [vmem:[%s5 + $0x48] sm:$0xff] %vm586, %v4295
  %4360 = vst.msk [vmem:[%s5 + $0x50] sm:$0xff] %vm586, %v4296
  %4361 = vst.msk [vmem:[%s5 + $0x58] sm:$0xff] %vm586, %v4297
  %4362 = vst.msk [vmem:[%s5 + $0x60] sm:$0xff] %vm586, %v4298
  %4363 = vst.msk [vmem:[%s5 + $0x68] sm:$0xff] %vm586, %v4299
  %4364 = vst.msk [vmem:[%s5 + $0x70] sm:$0xff] %vm586, %v4300
  %4365 = vst.msk [vmem:[%s5 + $0x78] sm:$0xff] %vm586, %v4301
  %4366 = vst.msk [vmem:[%s5 + $0x80] sm:$0xff] %vm586, %v4302
  %4367 = vst.msk [vmem:[%s5 + $0x88] sm:$0xff] %vm586, %v4303
  %4368 = vst.msk [vmem:[%s5 + $0x90] sm:$0xff] %vm586, %v4304
  %4369 = vst.msk [vmem:[%s5 + $0x98] sm:$0xff] %vm586, %v4305
  %4370 = vst.msk [vmem:[%s5 + $0xa0] sm:$0xff] %vm586, %v4306
  %4371 = vst.msk [vmem:[%s5 + $0xa8] sm:$0xff] %vm586, %v4307
  %4372 = vst.msk [vmem:[%s5 + $0xb0] sm:$0xff] %vm586, %v4308
  %4373 = vst.msk [vmem:[%s5 + $0xb8] sm:$0xff] %vm586, %v4309
  %4374 = vst.msk [vmem:[%s5 + $0xc0] sm:$0xff] %vm586, %v4310
  %4375 = vst.msk [vmem:[%s5 + $0xc8] sm:$0xff] %vm586, %v4311
  %4376 = vst.msk [vmem:[%s5 + $0xd0] sm:$0xff] %vm586, %v4312
  %4377 = vst.msk [vmem:[%s5 + $0xd8] sm:$0xff] %vm586, %v4313
  %4378 = vst.msk [vmem:[%s5 + $0xe0] sm:$0xff] %vm586, %v4314
  %4379 = vst.msk [vmem:[%s5 + $0xe8] sm:$0xff] %vm586, %v4315
  %4380 = vst.msk [vmem:[%s5 + $0xf0] sm:$0xff] %vm586, %v4316
  %4381 = vst.msk [vmem:[%s5 + $0xf8] sm:$0xff] %vm586, %v4317
  %4382 = vst.msk [vmem:[%s5 + $0x100] sm:$0xff] %vm586, %v4318
  %4383 = vst.msk [vmem:[%s5 + $0x108] sm:$0xff] %vm586, %v4319
  %4384 = vst.msk [vmem:[%s5 + $0x110] sm:$0xff] %vm586, %v4320
  %4385 = vst.msk [vmem:[%s5 + $0x118] sm:$0xff] %vm586, %v4321
  %4386 = vst.msk [vmem:[%s5 + $0x120] sm:$0xff] %vm586, %v4322
  %4387 = vst.msk [vmem:[%s5 + $0x128] sm:$0xff] %vm586, %v4323
  %4388 = vst.msk [vmem:[%s5 + $0x130] sm:$0xff] %vm586, %v4324
  %4389 = vst.msk [vmem:[%s5 + $0x138] sm:$0xff] %vm586, %v4325
  %4390 = vst.msk [vmem:[%s5 + $0x140] sm:$0xff] %vm586, %v4326
  %4391 = vst.msk [vmem:[%s5 + $0x148] sm:$0xff] %vm586, %v4327
  %4392 = vst.msk [vmem:[%s5 + $0x150] sm:$0xff] %vm586, %v4328
  %4393 = vst.msk [vmem:[%s5 + $0x158] sm:$0xff] %vm586, %v4329
  %4394 = vst.msk [vmem:[%s5 + $0x160] sm:$0xff] %vm586, %v4330
  %4395 = vst.msk [vmem:[%s5 + $0x168] sm:$0xff] %vm586, %v4331
  %4396 = vst.msk [vmem:[%s5 + $0x170] sm:$0xff] %vm586, %v4332
  %4397 = vst.msk [vmem:[%s5 + $0x178] sm:$0xff] %vm586, %v4333
  %4398 = vst.msk [vmem:[%s5 + $0x180] sm:$0xff] %vm586, %v4334
  %4399 = vst.msk [vmem:[%s5 + $0x188] sm:$0xff] %vm586, %v4335
  %4400 = vst.msk [vmem:[%s5 + $0x190] sm:$0xff] %vm586, %v4336
  %4401 = vst.msk [vmem:[%s5 + $0x198] sm:$0xff] %vm586, %v4337
  %4402 = vst.msk [vmem:[%s5 + $0x1a0] sm:$0xff] %vm586, %v4338
  %4403 = vst.msk [vmem:[%s5 + $0x1a8] sm:$0xff] %vm586, %v4339
  %4404 = vst.msk [vmem:[%s5 + $0x1b0] sm:$0xff] %vm586, %v4340
  %4405 = vst.msk [vmem:[%s5 + $0x1b8] sm:$0xff] %vm586, %v4341
  %4406 = vst.msk [vmem:[%s5 + $0x1c0] sm:$0xff] %vm586, %v4342
  %4407 = vst.msk [vmem:[%s5 + $0x1c8] sm:$0xff] %vm586, %v4343
  %4408 = vst.msk [vmem:[%s5 + $0x1d0] sm:$0xff] %vm586, %v4344
  %4409 = vst.msk [vmem:[%s5 + $0x1d8] sm:$0xff] %vm586, %v4345
  %4410 = vst.msk [vmem:[%s5 + $0x1e0] sm:$0xff] %vm586, %v4346
  %4411 = vst.msk [vmem:[%s5 + $0x1e8] sm:$0xff] %vm586, %v4347
  %4412 = vst.msk [vmem:[%s5 + $0x1f0] sm:$0xff] %vm586, %v4348
  %4413 = vst.msk [vmem:[%s5 + $0x1f8] sm:$0xff] %vm586, %v4349
  // Predicated region
  $region22: #{styled_conv2d_forward_nhwc.1} parent=0 // pred_check
    _
  $region23: #{styled_conv2d_forward_nhwc.1} parent=0 // pred_check_branch
    %4415 = sbr.rel (0) target = $region25
  $region24: #{styled_conv2d_forward_nhwc.1} parent=0 // pred_region
    _
  $region25: #{styled_conv2d_forward_nhwc.1} parent=0 // pred_fallthru
    _
  // Predicated region
  $region26: #{styled_conv2d_forward_nhwc.1} parent=0 // pred_check
    _
  $region27: #{styled_conv2d_forward_nhwc.1} parent=0 // pred_check_branch
    %4417 = sbr.rel (0) target = $region29
  $region28: #{styled_conv2d_forward_nhwc.1} parent=0 // pred_region
    _
  $region29: #{styled_conv2d_forward_nhwc.1} parent=0 // pred_fallthru
    _

</llo_original>
